<compile_context>
chip_gen: v7x
topology: tpu7x:2x2x1
jax: 0.10.0
libtpu: 0.0.40
codegen_flags: <defaults>
</compile_context>

<pallas_src>
import functools

import jax
import jax.numpy as jnp
from jax import lax
from jax.experimental import pallas as pl
from jax.experimental.pallas import tpu as pltpu


# Inter-stage activation / MXU-operand dtype (f32 accumulation everywhere).
_ACT_DTYPE = jnp.bfloat16


def _vmem_limit_bytes():
    """~75% of physical VMEM: 48 MiB on v7x (64 MiB), 96 MiB on v5e/v6e."""
    try:
        cap = pltpu.get_tpu_info().vmem_capacity_bytes
    except Exception:  # fall back to the most constrained generation (v7x)
        cap = 64 * 1024 * 1024
    return int(cap * 3 // 4)


def _edge_masks(h, w, dtype):
    """(2, H*W) masks: row 0 zeroes column 0 (dx=-1 taps), row 1 zeroes W-1."""
    col = jnp.arange(h * w, dtype=jnp.int32) % w
    return jnp.stack([col != 0, col != (w - 1)]).astype(dtype)


def _to_taps(w, dtype):
    """(Cout, Cin, 3, 3) -> (9, Cout, Cin); tap index t = (dy+1)*3 + (dx+1)."""
    cout, cin = w.shape[0], w.shape[1]
    return jnp.transpose(w, (2, 3, 0, 1)).reshape(9, cout, cin).astype(dtype)


# ---------------------------------------------------------------------------
# In-kernel 3x3 conv (stride 1, pad 1, bias-free) on a flattened (Cin, HW) slab
# ---------------------------------------------------------------------------
def _conv3x3_taps(x2d, w_taps_ref, masks, img_w):
    """Returns the f32 (Cout, HW) conv of x2d; all shifts happen in VMEM.

    x2d        : (Cin, HW) activations (bf16), HW = H*W exactly.
    w_taps_ref : (9, Cout, Cin) weight ref in the activation dtype.
    masks      : (2, HW) values in x2d dtype (column-edge masks).
    """
    cin, hw = x2d.shape
    pad = jnp.zeros((cin, img_w + 1), x2d.dtype)
    xp = jnp.concatenate([pad, x2d, pad], axis=1)       # (Cin, HW + 2W + 2)
    acc = None
    for dy in (-1, 0, 1):
        for dx in (-1, 0, 1):
            start = (img_w + 1) + dy * img_w + dx
            xs = xp[:, start:start + hw]                # x shifted by dy*W + dx
            if dx == -1:
                xs = xs * masks[0:1, :]                 # source col would be -1
            elif dx == 1:
                xs = xs * masks[1:2, :]                 # source col would be W
            tap = (dy + 1) * 3 + (dx + 1)
            y = jnp.dot(w_taps_ref[tap], xs, preferred_element_type=jnp.float32)
            acc = y if acc is None else acc + y
    return acc


# ---------------------------------------------------------------------------
# Fused RGCA kernel: conv3x3 -> LReLU -> conv3x3 -> GCA -> conv1x1 -> +residual
# ---------------------------------------------------------------------------
def _rgca_kernel(x_ref, masks_ref, w1_ref, w2_ref, wm_ref, w1t_ref, w2g_ref,
                 w1x1_ref, o_ref, *, img_w):
    x = x_ref[0]                                        # (C, HW) bf16
    masks = masks_ref[...]                              # (2, HW) bf16

    # body: Conv3x3 -> LeakyReLU(0.2) -> Conv3x3   (bf16 MXU ops, f32 accum)
    h = _conv3x3_taps(x, w1_ref, masks, img_w)          # (C, HW) f32
    h = jnp.where(h > 0, h, 0.2 * h)
    r = _conv3x3_taps(h.astype(x.dtype), w2_ref, masks, img_w)   # (C, HW) f32

    # GCA: softmax-pooled context + 2-layer channel MLP (f32 VPU/XLU math;
    # exact softmax division -- no approx reciprocal).
    logits = jnp.sum(r * wm_ref[...], axis=0, keepdims=True)      # (1, HW)
    m = jnp.max(logits, axis=-1, keepdims=True)
    e = jnp.exp(logits - m)
    attn = e / jnp.sum(e, axis=-1, keepdims=True)
    context = jnp.sum(r * attn, axis=-1, keepdims=True)           # (C, 1)
    hid = jnp.sum(context * w1t_ref[...], axis=0, keepdims=True)  # (1, P)
    hid = jnp.where(hid > 0, hid, 0.2 * hid)
    add = jnp.sum(w2g_ref[...] * hid, axis=-1, keepdims=True)     # (C, 1)
    g = r + add                                                   # (C, HW) f32

    # Conv1x1 + residual; write back in the activation dtype.
    y = jnp.dot(w1x1_ref[...], g.astype(x.dtype),
                preferred_element_type=jnp.float32)
    o_ref[0] = (y + x.astype(jnp.float32)).astype(o_ref.dtype)


def _final_conv_kernel(res_ref, x0_ref, masks_ref, w_ref, o_ref, *, img_w):
    """Trailing RGCAB Conv3x3 fused with the outer residual (f32 output)."""
    y = _conv3x3_taps(res_ref[0], w_ref, masks_ref[...], img_w)   # (C, HW) f32
    o_ref[0] = (y + x0_ref[0]).astype(o_ref.dtype)


# ---------------------------------------------------------------------------
# pallas_call wrappers
# ---------------------------------------------------------------------------
def _rgca_block(act, p, masks, img_w):
    """One RGCA on (B, C, HW) bf16 activations; returns same shape/dtype."""
    B, C, HW = act.shape
    planes = p["gca_w1"].shape[0]
    w1_taps = _to_taps(p["body_w1"], act.dtype)
    w2_taps = _to_taps(p["body_w2"], act.dtype)
    wm = p["gca_wm"].reshape(C, 1).astype(jnp.float32)          # (C, 1)
    w1t = jnp.transpose(p["gca_w1"]).astype(jnp.float32)        # (C, P)
    w2g = p["gca_w2"].astype(jnp.float32)                       # (C, P)
    w1x1 = p["conv1x1_w"].astype(act.dtype)                     # (C, C)

    return pl.pallas_call(
        functools.partial(_rgca_kernel, img_w=img_w),
        out_shape=jax.ShapeDtypeStruct((B, C, HW), act.dtype),
        grid_spec=pltpu.PrefetchScalarGridSpec(
            num_scalar_prefetch=0,
            grid=(B,),
            in_specs=[
                pl.BlockSpec((1, C, HW), lambda b: (b, 0, 0)),
                pl.BlockSpec((2, HW), lambda b: (0, 0)),
                pl.BlockSpec((9, C, C), lambda b: (0, 0, 0)),
                pl.BlockSpec((9, C, C), lambda b: (0, 0, 0)),
                pl.BlockSpec((C, 1), lambda b: (0, 0)),
                pl.BlockSpec((C, planes), lambda b: (0, 0)),
                pl.BlockSpec((C, planes), lambda b: (0, 0)),
                pl.BlockSpec((C, C), lambda b: (0, 0)),
            ],
            out_specs=pl.BlockSpec((1, C, HW), lambda b: (b, 0, 0)),
        ),
        input_output_aliases={0: 0},      # output reuses the activation buffer
        compiler_params=pltpu.CompilerParams(
            dimension_semantics=("parallel",),
            vmem_limit_bytes=_vmem_limit_bytes()),
    )(act, masks, w1_taps, w2_taps, wm, w1t, w2g, w1x1)


def _final_conv(res, x0_flat, w, masks, img_w):
    """Final Conv3x3(res) + x0 residual; returns (B, C, HW) float32."""
    B, C, HW = res.shape
    w_taps = _to_taps(w, res.dtype)
    return pl.pallas_call(
        functools.partial(_final_conv_kernel, img_w=img_w),
        out_shape=jax.ShapeDtypeStruct((B, C, HW), jnp.float32),
        grid_spec=pltpu.PrefetchScalarGridSpec(
            num_scalar_prefetch=0,
            grid=(B,),
            in_specs=[
                pl.BlockSpec((1, C, HW), lambda b: (b, 0, 0)),
                pl.BlockSpec((1, C, HW), lambda b: (b, 0, 0)),
                pl.BlockSpec((2, HW), lambda b: (0, 0)),
                pl.BlockSpec((9, C, C), lambda b: (0, 0, 0)),
            ],
            out_specs=pl.BlockSpec((1, C, HW), lambda b: (b, 0, 0)),
        ),
        compiler_params=pltpu.CompilerParams(
            dimension_semantics=("parallel",),
            vmem_limit_bytes=_vmem_limit_bytes()),
    )(res, x0_flat, masks, w_taps)


def rgcab_forward(x, params):
    """RGCAB.forward.  x: (B, C, H, W) float32 -> (B, C, H, W) float32."""
    B, C, H, W = x.shape
    HW = H * W
    masks = _edge_masks(H, W, _ACT_DTYPE)
    x_flat = x.reshape(B, C, HW)
    res = x_flat.astype(_ACT_DTYPE)           # bf16 inter-stage activations
    for p in params["rgca"]:
        res = _rgca_block(res, p, masks, W)
    out = _final_conv(res, x_flat, params["final_w"], masks, W)
    return out.reshape(B, C, H, W)


# ---------------------------------------------------------------------------
# Parameters and a pure-JAX (f32) reference
# ---------------------------------------------------------------------------
def init_params(key, num_features, num_rcab):
    c = num_features
    params = {"rgca": []}
    for _ in range(num_rcab):
        key, k1, k2, k3, k4, k5, k6 = jax.random.split(key, 7)
        params["rgca"].append({
            "body_w1": 0.1 * jax.random.normal(k1, (c, c, 3, 3), jnp.float32),
            "body_w2": 0.1 * jax.random.normal(k2, (c, c, 3, 3), jnp.float32),
            "gca_wm": 0.1 * jax.random.normal(k3, (1, c), jnp.float32),
            "gca_w1": 0.1 * jax.random.normal(k4, (c, c), jnp.float32),  # planes == n_feat
            "gca_w2": 0.1 * jax.random.normal(k5, (c, c), jnp.float32),
            "conv1x1_w": 0.1 * jax.random.normal(k6, (c, c), jnp.float32),
        })
    key, kf = jax.random.split(key)
    params["final_w"] = 0.1 * jax.random.normal(kf, (c, c, 3, 3), jnp.float32)
    return params


def _rgcab_reference(x, params):
    hp = lax.Precision.HIGHEST

    def conv3(v, w):
        return lax.conv_general_dilated(
            v, w, (1, 1), ((1, 1), (1, 1)),
            dimension_numbers=("NCHW", "OIHW", "NCHW"), precision=hp)

    def conv1(v, w):
        return lax.conv_general_dilated(
            v, w[:, :, None, None], (1, 1), ((0, 0), (0, 0)),
            dimension_numbers=("NCHW", "OIHW", "NCHW"), precision=hp)

    def gca(v, wm, w1, w2):
        b, c, h, w = v.shape
        vf = v.reshape(b, c, h * w)
        logits = jnp.einsum("oc,bch->boh", wm, vf, precision=hp)
        attn = jax.nn.softmax(logits, axis=2)
        context = jnp.einsum("bch,boh->bc", vf, attn, precision=hp)
        hid = jnp.einsum("pc,bc->bp", w1, context, precision=hp)
        hid = jnp.where(hid > 0, hid, 0.2 * hid)
        add = jnp.einsum("cp,bp->bc", w2, hid, precision=hp)
        return v + add[:, :, None, None]

    res = x
    for p in params["rgca"]:
        r = conv3(res, p["body_w1"])
        r = jnp.where(r > 0, r, 0.2 * r)
        r = conv3(r, p["body_w2"])
        r = gca(r, p["gca_wm"], p["gca_w1"], p["gca_w2"])
        r = conv1(r, p["conv1x1_w"])
        res = r + res
    return x + conv3(res, params["final_w"])


if __name__ == "__main__":
    B, C, H, W = 2, 4, 16, 16
    num_rcab = 2   # `reduction` does not affect this module's forward (GCA planes == n_feat)

    key = jax.random.PRNGKey(0)
    kx, kp = jax.random.split(key)
    x = jax.random.normal(kx, (B, C, H, W), dtype=jnp.float32)
    params = init_params(kp, C, num_rcab)

    out = jax.block_until_ready(jax.jit(rgcab_forward)(x, params))
    assert out.shape == (B, C, H, W)
    assert out.dtype == jnp.float32

    ref = _rgcab_reference(x, params)
    max_err = float(jnp.max(jnp.abs(out - ref)))
    # The GCA softmax now uses an exact division; the only intentional gap vs.
    # the f32 reference is bf16 activation I/O / bf16 MXU operands (with f32
    # accumulation), whose rounding keeps the error well under this bound.
    assert max_err < 5e-2, f"mismatch vs reference: max abs err = {max_err}"
    print("KERNEL_OK")
</pallas_src>

<mosaic_0001>
module attributes {stable_mosaic.version = 11 : i64} {
  func.func @_final_conv_kernel(%arg0: i32, %arg1: memref<1x4x256xbf16, #tpu.memory_space<vmem>>, %arg2: memref<1x4x256xf32, #tpu.memory_space<vmem>>, %arg3: memref<2x256xbf16, #tpu.memory_space<vmem>>, %arg4: memref<9x4x4xbf16, #tpu.memory_space<vmem>>, %arg5: memref<1x4x256xf32, #tpu.memory_space<vmem>>) attributes {dimension_semantics = [#tpu.dimension_semantics<parallel>], iteration_bounds = array<i64: 2>, scalar_prefetch = 0 : i64, scratch_operands = 0 : i64, tpu.core_type = #tpu.core_type<tc>, window_params = [{transform_indices = @transform_0, window_bounds = array<i64: 1, 4, 256>}, {transform_indices = @transform_1, window_bounds = array<i64: 1, 4, 256>}, {pipeline_mode = #tpu.pipeline_mode<synchronous>, transform_indices = @transform_2, window_bounds = array<i64: 2, 256>}, {pipeline_mode = #tpu.pipeline_mode<synchronous>, transform_indices = @transform_3, window_bounds = array<i64: 9, 4, 4>}, {transform_indices = @transform_4, window_bounds = array<i64: 1, 4, 256>}]} {
    %c0 = arith.constant 0 : index
    %c0_0 = arith.constant 0 : index
    %c0_1 = arith.constant 0 : index
    %0 = vector.load %arg1[%c0, %c0_0, %c0_1] : memref<1x4x256xbf16, #tpu.memory_space<vmem>>, vector<1x4x256xbf16>
    %1 = vector.shape_cast %0 : vector<1x4x256xbf16> to vector<4x256xbf16>
    %c0_2 = arith.constant 0 : index
    %c0_3 = arith.constant 0 : index
    %2 = vector.load %arg3[%c0_2, %c0_3] : memref<2x256xbf16, #tpu.memory_space<vmem>>, vector<2x256xbf16>
    %cst = arith.constant 0.000000e+00 : bf16
    %3 = vector.broadcast %cst : bf16 to vector<4x17xbf16>
    %4 = tpu.concatenate %3, %1, %3 in 1 : vector<4x17xbf16>, vector<4x256xbf16>, vector<4x17xbf16> -> vector<4x290xbf16>
    %5 = vector.extract_strided_slice %4 {offsets = [0, 0], sizes = [4, 256], strides = [1, 1]} : vector<4x290xbf16> to vector<4x256xbf16>
    %6 = vector.extract_strided_slice %2 {offsets = [0, 0], sizes = [1, 256], strides = [1, 1]} : vector<2x256xbf16> to vector<1x256xbf16>
    %7 = vector.broadcast %6 : vector<1x256xbf16> to vector<4x256xbf16>
    %8 = arith.mulf %5, %7 : vector<4x256xbf16>
    %c0_4 = arith.constant 0 : index
    %c0_5 = arith.constant 0 : index
    %c0_6 = arith.constant 0 : index
    %9 = vector.load %arg4[%c0_4, %c0_5, %c0_6] : memref<9x4x4xbf16, #tpu.memory_space<vmem>>, vector<1x4x4xbf16>
    %10 = vector.shape_cast %9 : vector<1x4x4xbf16> to vector<4x4xbf16>
    %cst_7 = arith.constant dense<0.000000e+00> : vector<4x256xf32>
    %11 = tpu.matmul %10, %8, %cst_7 {dimension_numbers = #tpu.dot_dimension_numbers<[1], [0], [0], [1], [0, 0, 1, 1], [], []>} : vector<4x4xbf16>, vector<4x256xbf16>, vector<4x256xf32> -> vector<4x256xf32>
    %12 = vector.extract_strided_slice %4 {offsets = [0, 1], sizes = [4, 256], strides = [1, 1]} : vector<4x290xbf16> to vector<4x256xbf16>
    %c1 = arith.constant 1 : index
    %c0_8 = arith.constant 0 : index
    %c0_9 = arith.constant 0 : index
    %13 = vector.load %arg4[%c1, %c0_8, %c0_9] : memref<9x4x4xbf16, #tpu.memory_space<vmem>>, vector<1x4x4xbf16>
    %14 = vector.shape_cast %13 : vector<1x4x4xbf16> to vector<4x4xbf16>
    %cst_10 = arith.constant dense<0.000000e+00> : vector<4x256xf32>
    %15 = tpu.matmul %14, %12, %cst_10 {dimension_numbers = #tpu.dot_dimension_numbers<[1], [0], [0], [1], [0, 0, 1, 1], [], []>} : vector<4x4xbf16>, vector<4x256xbf16>, vector<4x256xf32> -> vector<4x256xf32>
    %16 = arith.addf %11, %15 : vector<4x256xf32>
    %17 = vector.extract_strided_slice %4 {offsets = [0, 2], sizes = [4, 256], strides = [1, 1]} : vector<4x290xbf16> to vector<4x256xbf16>
    %18 = vector.extract_strided_slice %2 {offsets = [1, 0], sizes = [1, 256], strides = [1, 1]} : vector<2x256xbf16> to vector<1x256xbf16>
    %19 = vector.broadcast %18 : vector<1x256xbf16> to vector<4x256xbf16>
    %20 = arith.mulf %17, %19 : vector<4x256xbf16>
    %c2 = arith.constant 2 : index
    %c0_11 = arith.constant 0 : index
    %c0_12 = arith.constant 0 : index
    %21 = vector.load %arg4[%c2, %c0_11, %c0_12] : memref<9x4x4xbf16, #tpu.memory_space<vmem>>, vector<1x4x4xbf16>
    %22 = vector.shape_cast %21 : vector<1x4x4xbf16> to vector<4x4xbf16>
    %cst_13 = arith.constant dense<0.000000e+00> : vector<4x256xf32>
    %23 = tpu.matmul %22, %20, %cst_13 {dimension_numbers = #tpu.dot_dimension_numbers<[1], [0], [0], [1], [0, 0, 1, 1], [], []>} : vector<4x4xbf16>, vector<4x256xbf16>, vector<4x256xf32> -> vector<4x256xf32>
    %24 = arith.addf %16, %23 : vector<4x256xf32>
    %25 = vector.extract_strided_slice %4 {offsets = [0, 16], sizes = [4, 256], strides = [1, 1]} : vector<4x290xbf16> to vector<4x256xbf16>
    %26 = vector.extract_strided_slice %2 {offsets = [0, 0], sizes = [1, 256], strides = [1, 1]} : vector<2x256xbf16> to vector<1x256xbf16>
    %27 = vector.broadcast %26 : vector<1x256xbf16> to vector<4x256xbf16>
    %28 = arith.mulf %25, %27 : vector<4x256xbf16>
    %c3 = arith.constant 3 : index
    %c0_14 = arith.constant 0 : index
    %c0_15 = arith.constant 0 : index
    %29 = vector.load %arg4[%c3, %c0_14, %c0_15] : memref<9x4x4xbf16, #tpu.memory_space<vmem>>, vector<1x4x4xbf16>
    %30 = vector.shape_cast %29 : vector<1x4x4xbf16> to vector<4x4xbf16>
    %cst_16 = arith.constant dense<0.000000e+00> : vector<4x256xf32>
    %31 = tpu.matmul %30, %28, %cst_16 {dimension_numbers = #tpu.dot_dimension_numbers<[1], [0], [0], [1], [0, 0, 1, 1], [], []>} : vector<4x4xbf16>, vector<4x256xbf16>, vector<4x256xf32> -> vector<4x256xf32>
    %32 = arith.addf %24, %31 : vector<4x256xf32>
    %33 = vector.extract_strided_slice %4 {offsets = [0, 17], sizes = [4, 256], strides = [1, 1]} : vector<4x290xbf16> to vector<4x256xbf16>
    %c4 = arith.constant 4 : index
    %c0_17 = arith.constant 0 : index
    %c0_18 = arith.constant 0 : index
    %34 = vector.load %arg4[%c4, %c0_17, %c0_18] : memref<9x4x4xbf16, #tpu.memory_space<vmem>>, vector<1x4x4xbf16>
    %35 = vector.shape_cast %34 : vector<1x4x4xbf16> to vector<4x4xbf16>
    %cst_19 = arith.constant dense<0.000000e+00> : vector<4x256xf32>
    %36 = tpu.matmul %35, %33, %cst_19 {dimension_numbers = #tpu.dot_dimension_numbers<[1], [0], [0], [1], [0, 0, 1, 1], [], []>} : vector<4x4xbf16>, vector<4x256xbf16>, vector<4x256xf32> -> vector<4x256xf32>
    %37 = arith.addf %32, %36 : vector<4x256xf32>
    %38 = vector.extract_strided_slice %4 {offsets = [0, 18], sizes = [4, 256], strides = [1, 1]} : vector<4x290xbf16> to vector<4x256xbf16>
    %39 = vector.extract_strided_slice %2 {offsets = [1, 0], sizes = [1, 256], strides = [1, 1]} : vector<2x256xbf16> to vector<1x256xbf16>
    %40 = vector.broadcast %39 : vector<1x256xbf16> to vector<4x256xbf16>
    %41 = arith.mulf %38, %40 : vector<4x256xbf16>
    %c5 = arith.constant 5 : index
    %c0_20 = arith.constant 0 : index
    %c0_21 = arith.constant 0 : index
    %42 = vector.load %arg4[%c5, %c0_20, %c0_21] : memref<9x4x4xbf16, #tpu.memory_space<vmem>>, vector<1x4x4xbf16>
    %43 = vector.shape_cast %42 : vector<1x4x4xbf16> to vector<4x4xbf16>
    %cst_22 = arith.constant dense<0.000000e+00> : vector<4x256xf32>
    %44 = tpu.matmul %43, %41, %cst_22 {dimension_numbers = #tpu.dot_dimension_numbers<[1], [0], [0], [1], [0, 0, 1, 1], [], []>} : vector<4x4xbf16>, vector<4x256xbf16>, vector<4x256xf32> -> vector<4x256xf32>
    %45 = arith.addf %37, %44 : vector<4x256xf32>
    %46 = vector.extract_strided_slice %4 {offsets = [0, 32], sizes = [4, 256], strides = [1, 1]} : vector<4x290xbf16> to vector<4x256xbf16>
    %47 = vector.extract_strided_slice %2 {offsets = [0, 0], sizes = [1, 256], strides = [1, 1]} : vector<2x256xbf16> to vector<1x256xbf16>
    %48 = vector.broadcast %47 : vector<1x256xbf16> to vector<4x256xbf16>
    %49 = arith.mulf %46, %48 : vector<4x256xbf16>
    %c6 = arith.constant 6 : index
    %c0_23 = arith.constant 0 : index
    %c0_24 = arith.constant 0 : index
    %50 = vector.load %arg4[%c6, %c0_23, %c0_24] : memref<9x4x4xbf16, #tpu.memory_space<vmem>>, vector<1x4x4xbf16>
    %51 = vector.shape_cast %50 : vector<1x4x4xbf16> to vector<4x4xbf16>
    %cst_25 = arith.constant dense<0.000000e+00> : vector<4x256xf32>
    %52 = tpu.matmul %51, %49, %cst_25 {dimension_numbers = #tpu.dot_dimension_numbers<[1], [0], [0], [1], [0, 0, 1, 1], [], []>} : vector<4x4xbf16>, vector<4x256xbf16>, vector<4x256xf32> -> vector<4x256xf32>
    %53 = arith.addf %45, %52 : vector<4x256xf32>
    %54 = vector.extract_strided_slice %4 {offsets = [0, 33], sizes = [4, 256], strides = [1, 1]} : vector<4x290xbf16> to vector<4x256xbf16>
    %c7 = arith.constant 7 : index
    %c0_26 = arith.constant 0 : index
    %c0_27 = arith.constant 0 : index
    %55 = vector.load %arg4[%c7, %c0_26, %c0_27] : memref<9x4x4xbf16, #tpu.memory_space<vmem>>, vector<1x4x4xbf16>
    %56 = vector.shape_cast %55 : vector<1x4x4xbf16> to vector<4x4xbf16>
    %cst_28 = arith.constant dense<0.000000e+00> : vector<4x256xf32>
    %57 = tpu.matmul %56, %54, %cst_28 {dimension_numbers = #tpu.dot_dimension_numbers<[1], [0], [0], [1], [0, 0, 1, 1], [], []>} : vector<4x4xbf16>, vector<4x256xbf16>, vector<4x256xf32> -> vector<4x256xf32>
    %58 = arith.addf %53, %57 : vector<4x256xf32>
    %59 = vector.extract_strided_slice %4 {offsets = [0, 34], sizes = [4, 256], strides = [1, 1]} : vector<4x290xbf16> to vector<4x256xbf16>
    %60 = vector.extract_strided_slice %2 {offsets = [1, 0], sizes = [1, 256], strides = [1, 1]} : vector<2x256xbf16> to vector<1x256xbf16>
    %61 = vector.broadcast %60 : vector<1x256xbf16> to vector<4x256xbf16>
    %62 = arith.mulf %59, %61 : vector<4x256xbf16>
    %c8 = arith.constant 8 : index
    %c0_29 = arith.constant 0 : index
    %c0_30 = arith.constant 0 : index
    %63 = vector.load %arg4[%c8, %c0_29, %c0_30] : memref<9x4x4xbf16, #tpu.memory_space<vmem>>, vector<1x4x4xbf16>
    %64 = vector.shape_cast %63 : vector<1x4x4xbf16> to vector<4x4xbf16>
    %cst_31 = arith.constant dense<0.000000e+00> : vector<4x256xf32>
    %65 = tpu.matmul %64, %62, %cst_31 {dimension_numbers = #tpu.dot_dimension_numbers<[1], [0], [0], [1], [0, 0, 1, 1], [], []>} : vector<4x4xbf16>, vector<4x256xbf16>, vector<4x256xf32> -> vector<4x256xf32>
    %66 = arith.addf %58, %65 : vector<4x256xf32>
    %c0_32 = arith.constant 0 : index
    %c0_33 = arith.constant 0 : index
    %c0_34 = arith.constant 0 : index
    %67 = vector.load %arg2[%c0_32, %c0_33, %c0_34] : memref<1x4x256xf32, #tpu.memory_space<vmem>>, vector<1x4x256xf32>
    %68 = vector.shape_cast %67 : vector<1x4x256xf32> to vector<4x256xf32>
    %69 = arith.addf %66, %68 : vector<4x256xf32>
    %c0_35 = arith.constant 0 : index
    %c0_36 = arith.constant 0 : index
    %c0_37 = arith.constant 0 : index
    %70 = vector.load %arg5[%c0_35, %c0_36, %c0_37] : memref<1x4x256xf32, #tpu.memory_space<vmem>>, vector<1x4x256xf32>
    %71 = vector.shape_cast %70 : vector<1x4x256xf32> to vector<4x256xf32>
    %72 = vector.shape_cast %69 : vector<4x256xf32> to vector<1x4x256xf32>
    tpu.vector_store %arg5[%c0_35, %c0_36, %c0_37], %72 {strides = array<i32>} : memref<1x4x256xf32, #tpu.memory_space<vmem>>, vector<1x4x256xf32>,
    return
  }
  func.func @transform_0(%arg0: i32) -> (i32, i32, i32) {
    %c0_i32 = arith.constant 0 : i32
    %c0_i32_0 = arith.constant 0 : i32
    %c0_i32_1 = arith.constant 0 : i32
    return %arg0, %c0_i32, %c0_i32_0 : i32, i32, i32
  }
  func.func @transform_1(%arg0: i32) -> (i32, i32, i32) {
    %c0_i32 = arith.constant 0 : i32
    %c0_i32_0 = arith.constant 0 : i32
    %c0_i32_1 = arith.constant 0 : i32
    return %arg0, %c0_i32, %c0_i32_0 : i32, i32, i32
  }
  func.func @transform_2(%arg0: i32) -> (i32, i32) {
    %c0_i32 = arith.constant 0 : i32
    %c0_i32_0 = arith.constant 0 : i32
    %c0_i32_1 = arith.constant 0 : i32
    return %c0_i32, %c0_i32_0 : i32, i32
  }
  func.func @transform_3(%arg0: i32) -> (i32, i32, i32) {
    %c0_i32 = arith.constant 0 : i32
    %c0_i32_0 = arith.constant 0 : i32
    %c0_i32_1 = arith.constant 0 : i32
    %c0_i32_2 = arith.constant 0 : i32
    return %c0_i32, %c0_i32_0, %c0_i32_1 : i32, i32, i32
  }
  func.func @transform_4(%arg0: i32) -> (i32, i32, i32) {
    %c0_i32 = arith.constant 0 : i32
    %c0_i32_0 = arith.constant 0 : i32
    %c0_i32_1 = arith.constant 0 : i32
    return %arg0, %c0_i32, %c0_i32_0 : i32, i32, i32
  }
}

module attributes {stable_mosaic.version = 11 : i64} {
  func.func @_rgca_kernel(%arg0: i32, %arg1: memref<1x4x256xbf16, #tpu.memory_space<vmem>>, %arg2: memref<2x256xbf16, #tpu.memory_space<vmem>>, %arg3: memref<9x4x4xbf16, #tpu.memory_space<vmem>>, %arg4: memref<9x4x4xbf16, #tpu.memory_space<vmem>>, %arg5: memref<4x1xf32, #tpu.memory_space<vmem>>, %arg6: memref<4x4xf32, #tpu.memory_space<vmem>>, %arg7: memref<4x4xf32, #tpu.memory_space<vmem>>, %arg8: memref<4x4xbf16, #tpu.memory_space<vmem>>, %arg9: memref<1x4x256xbf16, #tpu.memory_space<vmem>>) attributes {dimension_semantics = [#tpu.dimension_semantics<parallel>], iteration_bounds = array<i64: 2>, scalar_prefetch = 0 : i64, scratch_operands = 0 : i64, tpu.core_type = #tpu.core_type<tc>, window_params = [{transform_indices = @transform_0, window_bounds = array<i64: 1, 4, 256>}, {pipeline_mode = #tpu.pipeline_mode<synchronous>, transform_indices = @transform_1, window_bounds = array<i64: 2, 256>}, {pipeline_mode = #tpu.pipeline_mode<synchronous>, transform_indices = @transform_2, window_bounds = array<i64: 9, 4, 4>}, {pipeline_mode = #tpu.pipeline_mode<synchronous>, transform_indices = @transform_3, window_bounds = array<i64: 9, 4, 4>}, {pipeline_mode = #tpu.pipeline_mode<synchronous>, transform_indices = @transform_4, window_bounds = array<i64: 4, 1>}, {pipeline_mode = #tpu.pipeline_mode<synchronous>, transform_indices = @transform_5, window_bounds = array<i64: 4, 4>}, {pipeline_mode = #tpu.pipeline_mode<synchronous>, transform_indices = @transform_6, window_bounds = array<i64: 4, 4>}, {pipeline_mode = #tpu.pipeline_mode<synchronous>, transform_indices = @transform_7, window_bounds = array<i64: 4, 4>}, {transform_indices = @transform_8, window_bounds = array<i64: 1, 4, 256>}]} {
    %c0 = arith.constant 0 : index
    %c0_0 = arith.constant 0 : index
    %c0_1 = arith.constant 0 : index
    %0 = vector.load %arg1[%c0, %c0_0, %c0_1] : memref<1x4x256xbf16, #tpu.memory_space<vmem>>, vector<1x4x256xbf16>
    %1 = vector.shape_cast %0 : vector<1x4x256xbf16> to vector<4x256xbf16>
    %c0_2 = arith.constant 0 : index
    %c0_3 = arith.constant 0 : index
    %2 = vector.load %arg2[%c0_2, %c0_3] : memref<2x256xbf16, #tpu.memory_space<vmem>>, vector<2x256xbf16>
    %cst = arith.constant 0.000000e+00 : bf16
    %3 = vector.broadcast %cst : bf16 to vector<4x17xbf16>
    %4 = tpu.concatenate %3, %1, %3 in 1 : vector<4x17xbf16>, vector<4x256xbf16>, vector<4x17xbf16> -> vector<4x290xbf16>
    %5 = vector.extract_strided_slice %4 {offsets = [0, 0], sizes = [4, 256], strides = [1, 1]} : vector<4x290xbf16> to vector<4x256xbf16>
    %6 = vector.extract_strided_slice %2 {offsets = [0, 0], sizes = [1, 256], strides = [1, 1]} : vector<2x256xbf16> to vector<1x256xbf16>
    %7 = vector.broadcast %6 : vector<1x256xbf16> to vector<4x256xbf16>
    %8 = arith.mulf %5, %7 : vector<4x256xbf16>
    %c0_4 = arith.constant 0 : index
    %c0_5 = arith.constant 0 : index
    %c0_6 = arith.constant 0 : index
    %9 = vector.load %arg3[%c0_4, %c0_5, %c0_6] : memref<9x4x4xbf16, #tpu.memory_space<vmem>>, vector<1x4x4xbf16>
    %10 = vector.shape_cast %9 : vector<1x4x4xbf16> to vector<4x4xbf16>
    %cst_7 = arith.constant dense<0.000000e+00> : vector<4x256xf32>
    %11 = tpu.matmul %10, %8, %cst_7 {dimension_numbers = #tpu.dot_dimension_numbers<[1], [0], [0], [1], [0, 0, 1, 1], [], []>} : vector<4x4xbf16>, vector<4x256xbf16>, vector<4x256xf32> -> vector<4x256xf32>
    %12 = vector.extract_strided_slice %4 {offsets = [0, 1], sizes = [4, 256], strides = [1, 1]} : vector<4x290xbf16> to vector<4x256xbf16>
    %c1 = arith.constant 1 : index
    %c0_8 = arith.constant 0 : index
    %c0_9 = arith.constant 0 : index
    %13 = vector.load %arg3[%c1, %c0_8, %c0_9] : memref<9x4x4xbf16, #tpu.memory_space<vmem>>, vector<1x4x4xbf16>
    %14 = vector.shape_cast %13 : vector<1x4x4xbf16> to vector<4x4xbf16>
    %cst_10 = arith.constant dense<0.000000e+00> : vector<4x256xf32>
    %15 = tpu.matmul %14, %12, %cst_10 {dimension_numbers = #tpu.dot_dimension_numbers<[1], [0], [0], [1], [0, 0, 1, 1], [], []>} : vector<4x4xbf16>, vector<4x256xbf16>, vector<4x256xf32> -> vector<4x256xf32>
    %16 = arith.addf %11, %15 : vector<4x256xf32>
    %17 = vector.extract_strided_slice %4 {offsets = [0, 2], sizes = [4, 256], strides = [1, 1]} : vector<4x290xbf16> to vector<4x256xbf16>
    %18 = vector.extract_strided_slice %2 {offsets = [1, 0], sizes = [1, 256], strides = [1, 1]} : vector<2x256xbf16> to vector<1x256xbf16>
    %19 = vector.broadcast %18 : vector<1x256xbf16> to vector<4x256xbf16>
    %20 = arith.mulf %17, %19 : vector<4x256xbf16>
    %c2 = arith.constant 2 : index
    %c0_11 = arith.constant 0 : index
    %c0_12 = arith.constant 0 : index
    %21 = vector.load %arg3[%c2, %c0_11, %c0_12] : memref<9x4x4xbf16, #tpu.memory_space<vmem>>, vector<1x4x4xbf16>
    %22 = vector.shape_cast %21 : vector<1x4x4xbf16> to vector<4x4xbf16>
    %cst_13 = arith.constant dense<0.000000e+00> : vector<4x256xf32>
    %23 = tpu.matmul %22, %20, %cst_13 {dimension_numbers = #tpu.dot_dimension_numbers<[1], [0], [0], [1], [0, 0, 1, 1], [], []>} : vector<4x4xbf16>, vector<4x256xbf16>, vector<4x256xf32> -> vector<4x256xf32>
    %24 = arith.addf %16, %23 : vector<4x256xf32>
    %25 = vector.extract_strided_slice %4 {offsets = [0, 16], sizes = [4, 256], strides = [1, 1]} : vector<4x290xbf16> to vector<4x256xbf16>
    %26 = vector.extract_strided_slice %2 {offsets = [0, 0], sizes = [1, 256], strides = [1, 1]} : vector<2x256xbf16> to vector<1x256xbf16>
    %27 = vector.broadcast %26 : vector<1x256xbf16> to vector<4x256xbf16>
    %28 = arith.mulf %25, %27 : vector<4x256xbf16>
    %c3 = arith.constant 3 : index
    %c0_14 = arith.constant 0 : index
    %c0_15 = arith.constant 0 : index
    %29 = vector.load %arg3[%c3, %c0_14, %c0_15] : memref<9x4x4xbf16, #tpu.memory_space<vmem>>, vector<1x4x4xbf16>
    %30 = vector.shape_cast %29 : vector<1x4x4xbf16> to vector<4x4xbf16>
    %cst_16 = arith.constant dense<0.000000e+00> : vector<4x256xf32>
    %31 = tpu.matmul %30, %28, %cst_16 {dimension_numbers = #tpu.dot_dimension_numbers<[1], [0], [0], [1], [0, 0, 1, 1], [], []>} : vector<4x4xbf16>, vector<4x256xbf16>, vector<4x256xf32> -> vector<4x256xf32>
    %32 = arith.addf %24, %31 : vector<4x256xf32>
    %33 = vector.extract_strided_slice %4 {offsets = [0, 17], sizes = [4, 256], strides = [1, 1]} : vector<4x290xbf16> to vector<4x256xbf16>
    %c4 = arith.constant 4 : index
    %c0_17 = arith.constant 0 : index
    %c0_18 = arith.constant 0 : index
    %34 = vector.load %arg3[%c4, %c0_17, %c0_18] : memref<9x4x4xbf16, #tpu.memory_space<vmem>>, vector<1x4x4xbf16>
    %35 = vector.shape_cast %34 : vector<1x4x4xbf16> to vector<4x4xbf16>
    %cst_19 = arith.constant dense<0.000000e+00> : vector<4x256xf32>
    %36 = tpu.matmul %35, %33, %cst_19 {dimension_numbers = #tpu.dot_dimension_numbers<[1], [0], [0], [1], [0, 0, 1, 1], [], []>} : vector<4x4xbf16>, vector<4x256xbf16>, vector<4x256xf32> -> vector<4x256xf32>
    %37 = arith.addf %32, %36 : vector<4x256xf32>
    %38 = vector.extract_strided_slice %4 {offsets = [0, 18], sizes = [4, 256], strides = [1, 1]} : vector<4x290xbf16> to vector<4x256xbf16>
    %39 = vector.extract_strided_slice %2 {offsets = [1, 0], sizes = [1, 256], strides = [1, 1]} : vector<2x256xbf16> to vector<1x256xbf16>
    %40 = vector.broadcast %39 : vector<1x256xbf16> to vector<4x256xbf16>
    %41 = arith.mulf %38, %40 : vector<4x256xbf16>
    %c5 = arith.constant 5 : index
    %c0_20 = arith.constant 0 : index
    %c0_21 = arith.constant 0 : index
    %42 = vector.load %arg3[%c5, %c0_20, %c0_21] : memref<9x4x4xbf16, #tpu.memory_space<vmem>>, vector<1x4x4xbf16>
    %43 = vector.shape_cast %42 : vector<1x4x4xbf16> to vector<4x4xbf16>
    %cst_22 = arith.constant dense<0.000000e+00> : vector<4x256xf32>
    %44 = tpu.matmul %43, %41, %cst_22 {dimension_numbers = #tpu.dot_dimension_numbers<[1], [0], [0], [1], [0, 0, 1, 1], [], []>} : vector<4x4xbf16>, vector<4x256xbf16>, vector<4x256xf32> -> vector<4x256xf32>
    %45 = arith.addf %37, %44 : vector<4x256xf32>
    %46 = vector.extract_strided_slice %4 {offsets = [0, 32], sizes = [4, 256], strides = [1, 1]} : vector<4x290xbf16> to vector<4x256xbf16>
    %47 = vector.extract_strided_slice %2 {offsets = [0, 0], sizes = [1, 256], strides = [1, 1]} : vector<2x256xbf16> to vector<1x256xbf16>
    %48 = vector.broadcast %47 : vector<1x256xbf16> to vector<4x256xbf16>
    %49 = arith.mulf %46, %48 : vector<4x256xbf16>
    %c6 = arith.constant 6 : index
    %c0_23 = arith.constant 0 : index
    %c0_24 = arith.constant 0 : index
    %50 = vector.load %arg3[%c6, %c0_23, %c0_24] : memref<9x4x4xbf16, #tpu.memory_space<vmem>>, vector<1x4x4xbf16>
    %51 = vector.shape_cast %50 : vector<1x4x4xbf16> to vector<4x4xbf16>
    %cst_25 = arith.constant dense<0.000000e+00> : vector<4x256xf32>
    %52 = tpu.matmul %51, %49, %cst_25 {dimension_numbers = #tpu.dot_dimension_numbers<[1], [0], [0], [1], [0, 0, 1, 1], [], []>} : vector<4x4xbf16>, vector<4x256xbf16>, vector<4x256xf32> -> vector<4x256xf32>
    %53 = arith.addf %45, %52 : vector<4x256xf32>
    %54 = vector.extract_strided_slice %4 {offsets = [0, 33], sizes = [4, 256], strides = [1, 1]} : vector<4x290xbf16> to vector<4x256xbf16>
    %c7 = arith.constant 7 : index
    %c0_26 = arith.constant 0 : index
    %c0_27 = arith.constant 0 : index
    %55 = vector.load %arg3[%c7, %c0_26, %c0_27] : memref<9x4x4xbf16, #tpu.memory_space<vmem>>, vector<1x4x4xbf16>
    %56 = vector.shape_cast %55 : vector<1x4x4xbf16> to vector<4x4xbf16>
    %cst_28 = arith.constant dense<0.000000e+00> : vector<4x256xf32>
    %57 = tpu.matmul %56, %54, %cst_28 {dimension_numbers = #tpu.dot_dimension_numbers<[1], [0], [0], [1], [0, 0, 1, 1], [], []>} : vector<4x4xbf16>, vector<4x256xbf16>, vector<4x256xf32> -> vector<4x256xf32>
    %58 = arith.addf %53, %57 : vector<4x256xf32>
    %59 = vector.extract_strided_slice %4 {offsets = [0, 34], sizes = [4, 256], strides = [1, 1]} : vector<4x290xbf16> to vector<4x256xbf16>
    %60 = vector.extract_strided_slice %2 {offsets = [1, 0], sizes = [1, 256], strides = [1, 1]} : vector<2x256xbf16> to vector<1x256xbf16>
    %61 = vector.broadcast %60 : vector<1x256xbf16> to vector<4x256xbf16>
    %62 = arith.mulf %59, %61 : vector<4x256xbf16>
    %c8 = arith.constant 8 : index
    %c0_29 = arith.constant 0 : index
    %c0_30 = arith.constant 0 : index
    %63 = vector.load %arg3[%c8, %c0_29, %c0_30] : memref<9x4x4xbf16, #tpu.memory_space<vmem>>, vector<1x4x4xbf16>
    %64 = vector.shape_cast %63 : vector<1x4x4xbf16> to vector<4x4xbf16>
    %cst_31 = arith.constant dense<0.000000e+00> : vector<4x256xf32>
    %65 = tpu.matmul %64, %62, %cst_31 {dimension_numbers = #tpu.dot_dimension_numbers<[1], [0], [0], [1], [0, 0, 1, 1], [], []>} : vector<4x4xbf16>, vector<4x256xbf16>, vector<4x256xf32> -> vector<4x256xf32>
    %66 = arith.addf %58, %65 : vector<4x256xf32>
    %cst_32 = arith.constant 0.000000e+00 : f32
    %67 = vector.broadcast %cst_32 : f32 to vector<4x256xf32>
    %68 = arith.cmpf ogt, %66, %67 : vector<4x256xf32>
    %cst_33 = arith.constant 2.000000e-01 : f32
    %69 = vector.broadcast %cst_33 : f32 to vector<4x256xf32>
    %70 = arith.mulf %69, %66 : vector<4x256xf32>
    %71 = arith.select %68, %66, %70 : vector<4x256xi1>, vector<4x256xf32>
    %72 = arith.truncf %71 : vector<4x256xf32> to vector<4x256xbf16>
    %cst_34 = arith.constant 0.000000e+00 : bf16
    %73 = vector.broadcast %cst_34 : bf16 to vector<4x17xbf16>
    %74 = tpu.concatenate %73, %72, %73 in 1 : vector<4x17xbf16>, vector<4x256xbf16>, vector<4x17xbf16> -> vector<4x290xbf16>
    %75 = vector.extract_strided_slice %74 {offsets = [0, 0], sizes = [4, 256], strides = [1, 1]} : vector<4x290xbf16> to vector<4x256xbf16>
    %76 = vector.extract_strided_slice %2 {offsets = [0, 0], sizes = [1, 256], strides = [1, 1]} : vector<2x256xbf16> to vector<1x256xbf16>
    %77 = vector.broadcast %76 : vector<1x256xbf16> to vector<4x256xbf16>
    %78 = arith.mulf %75, %77 : vector<4x256xbf16>
    %c0_35 = arith.constant 0 : index
    %c0_36 = arith.constant 0 : index
    %c0_37 = arith.constant 0 : index
    %79 = vector.load %arg4[%c0_35, %c0_36, %c0_37] : memref<9x4x4xbf16, #tpu.memory_space<vmem>>, vector<1x4x4xbf16>
    %80 = vector.shape_cast %79 : vector<1x4x4xbf16> to vector<4x4xbf16>
    %cst_38 = arith.constant dense<0.000000e+00> : vector<4x256xf32>
    %81 = tpu.matmul %80, %78, %cst_38 {dimension_numbers = #tpu.dot_dimension_numbers<[1], [0], [0], [1], [0, 0, 1, 1], [], []>} : vector<4x4xbf16>, vector<4x256xbf16>, vector<4x256xf32> -> vector<4x256xf32>
    %82 = vector.extract_strided_slice %74 {offsets = [0, 1], sizes = [4, 256], strides = [1, 1]} : vector<4x290xbf16> to vector<4x256xbf16>
    %c1_39 = arith.constant 1 : index
    %c0_40 = arith.constant 0 : index
    %c0_41 = arith.constant 0 : index
    %83 = vector.load %arg4[%c1_39, %c0_40, %c0_41] : memref<9x4x4xbf16, #tpu.memory_space<vmem>>, vector<1x4x4xbf16>
    %84 = vector.shape_cast %83 : vector<1x4x4xbf16> to vector<4x4xbf16>
    %cst_42 = arith.constant dense<0.000000e+00> : vector<4x256xf32>
    %85 = tpu.matmul %84, %82, %cst_42 {dimension_numbers = #tpu.dot_dimension_numbers<[1], [0], [0], [1], [0, 0, 1, 1], [], []>} : vector<4x4xbf16>, vector<4x256xbf16>, vector<4x256xf32> -> vector<4x256xf32>
    %86 = arith.addf %81, %85 : vector<4x256xf32>
    %87 = vector.extract_strided_slice %74 {offsets = [0, 2], sizes = [4, 256], strides = [1, 1]} : vector<4x290xbf16> to vector<4x256xbf16>
    %88 = vector.extract_strided_slice %2 {offsets = [1, 0], sizes = [1, 256], strides = [1, 1]} : vector<2x256xbf16> to vector<1x256xbf16>
    %89 = vector.broadcast %88 : vector<1x256xbf16> to vector<4x256xbf16>
    %90 = arith.mulf %87, %89 : vector<4x256xbf16>
    %c2_43 = arith.constant 2 : index
    %c0_44 = arith.constant 0 : index
    %c0_45 = arith.constant 0 : index
    %91 = vector.load %arg4[%c2_43, %c0_44, %c0_45] : memref<9x4x4xbf16, #tpu.memory_space<vmem>>, vector<1x4x4xbf16>
    %92 = vector.shape_cast %91 : vector<1x4x4xbf16> to vector<4x4xbf16>
    %cst_46 = arith.constant dense<0.000000e+00> : vector<4x256xf32>
    %93 = tpu.matmul %92, %90, %cst_46 {dimension_numbers = #tpu.dot_dimension_numbers<[1], [0], [0], [1], [0, 0, 1, 1], [], []>} : vector<4x4xbf16>, vector<4x256xbf16>, vector<4x256xf32> -> vector<4x256xf32>
    %94 = arith.addf %86, %93 : vector<4x256xf32>
    %95 = vector.extract_strided_slice %74 {offsets = [0, 16], sizes = [4, 256], strides = [1, 1]} : vector<4x290xbf16> to vector<4x256xbf16>
    %96 = vector.extract_strided_slice %2 {offsets = [0, 0], sizes = [1, 256], strides = [1, 1]} : vector<2x256xbf16> to vector<1x256xbf16>
    %97 = vector.broadcast %96 : vector<1x256xbf16> to vector<4x256xbf16>
    %98 = arith.mulf %95, %97 : vector<4x256xbf16>
    %c3_47 = arith.constant 3 : index
    %c0_48 = arith.constant 0 : index
    %c0_49 = arith.constant 0 : index
    %99 = vector.load %arg4[%c3_47, %c0_48, %c0_49] : memref<9x4x4xbf16, #tpu.memory_space<vmem>>, vector<1x4x4xbf16>
    %100 = vector.shape_cast %99 : vector<1x4x4xbf16> to vector<4x4xbf16>
    %cst_50 = arith.constant dense<0.000000e+00> : vector<4x256xf32>
    %101 = tpu.matmul %100, %98, %cst_50 {dimension_numbers = #tpu.dot_dimension_numbers<[1], [0], [0], [1], [0, 0, 1, 1], [], []>} : vector<4x4xbf16>, vector<4x256xbf16>, vector<4x256xf32> -> vector<4x256xf32>
    %102 = arith.addf %94, %101 : vector<4x256xf32>
    %103 = vector.extract_strided_slice %74 {offsets = [0, 17], sizes = [4, 256], strides = [1, 1]} : vector<4x290xbf16> to vector<4x256xbf16>
    %c4_51 = arith.constant 4 : index
    %c0_52 = arith.constant 0 : index
    %c0_53 = arith.constant 0 : index
    %104 = vector.load %arg4[%c4_51, %c0_52, %c0_53] : memref<9x4x4xbf16, #tpu.memory_space<vmem>>, vector<1x4x4xbf16>
    %105 = vector.shape_cast %104 : vector<1x4x4xbf16> to vector<4x4xbf16>
    %cst_54 = arith.constant dense<0.000000e+00> : vector<4x256xf32>
    %106 = tpu.matmul %105, %103, %cst_54 {dimension_numbers = #tpu.dot_dimension_numbers<[1], [0], [0], [1], [0, 0, 1, 1], [], []>} : vector<4x4xbf16>, vector<4x256xbf16>, vector<4x256xf32> -> vector<4x256xf32>
    %107 = arith.addf %102, %106 : vector<4x256xf32>
    %108 = vector.extract_strided_slice %74 {offsets = [0, 18], sizes = [4, 256], strides = [1, 1]} : vector<4x290xbf16> to vector<4x256xbf16>
    %109 = vector.extract_strided_slice %2 {offsets = [1, 0], sizes = [1, 256], strides = [1, 1]} : vector<2x256xbf16> to vector<1x256xbf16>
    %110 = vector.broadcast %109 : vector<1x256xbf16> to vector<4x256xbf16>
    %111 = arith.mulf %108, %110 : vector<4x256xbf16>
    %c5_55 = arith.constant 5 : index
    %c0_56 = arith.constant 0 : index
    %c0_57 = arith.constant 0 : index
    %112 = vector.load %arg4[%c5_55, %c0_56, %c0_57] : memref<9x4x4xbf16, #tpu.memory_space<vmem>>, vector<1x4x4xbf16>
    %113 = vector.shape_cast %112 : vector<1x4x4xbf16> to vector<4x4xbf16>
    %cst_58 = arith.constant dense<0.000000e+00> : vector<4x256xf32>
    %114 = tpu.matmul %113, %111, %cst_58 {dimension_numbers = #tpu.dot_dimension_numbers<[1], [0], [0], [1], [0, 0, 1, 1], [], []>} : vector<4x4xbf16>, vector<4x256xbf16>, vector<4x256xf32> -> vector<4x256xf32>
    %115 = arith.addf %107, %114 : vector<4x256xf32>
    %116 = vector.extract_strided_slice %74 {offsets = [0, 32], sizes = [4, 256], strides = [1, 1]} : vector<4x290xbf16> to vector<4x256xbf16>
    %117 = vector.extract_strided_slice %2 {offsets = [0, 0], sizes = [1, 256], strides = [1, 1]} : vector<2x256xbf16> to vector<1x256xbf16>
    %118 = vector.broadcast %117 : vector<1x256xbf16> to vector<4x256xbf16>
    %119 = arith.mulf %116, %118 : vector<4x256xbf16>
    %c6_59 = arith.constant 6 : index
    %c0_60 = arith.constant 0 : index
    %c0_61 = arith.constant 0 : index
    %120 = vector.load %arg4[%c6_59, %c0_60, %c0_61] : memref<9x4x4xbf16, #tpu.memory_space<vmem>>, vector<1x4x4xbf16>
    %121 = vector.shape_cast %120 : vector<1x4x4xbf16> to vector<4x4xbf16>
    %cst_62 = arith.constant dense<0.000000e+00> : vector<4x256xf32>
    %122 = tpu.matmul %121, %119, %cst_62 {dimension_numbers = #tpu.dot_dimension_numbers<[1], [0], [0], [1], [0, 0, 1, 1], [], []>} : vector<4x4xbf16>, vector<4x256xbf16>, vector<4x256xf32> -> vector<4x256xf32>
    %123 = arith.addf %115, %122 : vector<4x256xf32>
    %124 = vector.extract_strided_slice %74 {offsets = [0, 33], sizes = [4, 256], strides = [1, 1]} : vector<4x290xbf16> to vector<4x256xbf16>
    %c7_63 = arith.constant 7 : index
    %c0_64 = arith.constant 0 : index
    %c0_65 = arith.constant 0 : index
    %125 = vector.load %arg4[%c7_63, %c0_64, %c0_65] : memref<9x4x4xbf16, #tpu.memory_space<vmem>>, vector<1x4x4xbf16>
    %126 = vector.shape_cast %125 : vector<1x4x4xbf16> to vector<4x4xbf16>
    %cst_66 = arith.constant dense<0.000000e+00> : vector<4x256xf32>
    %127 = tpu.matmul %126, %124, %cst_66 {dimension_numbers = #tpu.dot_dimension_numbers<[1], [0], [0], [1], [0, 0, 1, 1], [], []>} : vector<4x4xbf16>, vector<4x256xbf16>, vector<4x256xf32> -> vector<4x256xf32>
    %128 = arith.addf %123, %127 : vector<4x256xf32>
    %129 = vector.extract_strided_slice %74 {offsets = [0, 34], sizes = [4, 256], strides = [1, 1]} : vector<4x290xbf16> to vector<4x256xbf16>
    %130 = vector.extract_strided_slice %2 {offsets = [1, 0], sizes = [1, 256], strides = [1, 1]} : vector<2x256xbf16> to vector<1x256xbf16>
    %131 = vector.broadcast %130 : vector<1x256xbf16> to vector<4x256xbf16>
    %132 = arith.mulf %129, %131 : vector<4x256xbf16>
    %c8_67 = arith.constant 8 : index
    %c0_68 = arith.constant 0 : index
    %c0_69 = arith.constant 0 : index
    %133 = vector.load %arg4[%c8_67, %c0_68, %c0_69] : memref<9x4x4xbf16, #tpu.memory_space<vmem>>, vector<1x4x4xbf16>
    %134 = vector.shape_cast %133 : vector<1x4x4xbf16> to vector<4x4xbf16>
    %cst_70 = arith.constant dense<0.000000e+00> : vector<4x256xf32>
    %135 = tpu.matmul %134, %132, %cst_70 {dimension_numbers = #tpu.dot_dimension_numbers<[1], [0], [0], [1], [0, 0, 1, 1], [], []>} : vector<4x4xbf16>, vector<4x256xbf16>, vector<4x256xf32> -> vector<4x256xf32>
    %136 = arith.addf %128, %135 : vector<4x256xf32>
    %c0_71 = arith.constant 0 : index
    %c0_72 = arith.constant 0 : index
    %137 = vector.load %arg5[%c0_71, %c0_72] : memref<4x1xf32, #tpu.memory_space<vmem>>, vector<4x1xf32>
    %138 = vector.broadcast %137 : vector<4x1xf32> to vector<4x256xf32>
    %139 = arith.mulf %136, %138 : vector<4x256xf32>
    %cst_73 = arith.constant dense<0.000000e+00> : vector<256xf32>
    %140 = vector.multi_reduction <add>, %139, %cst_73 [0] : vector<4x256xf32> to vector<256xf32>
    %141 = vector.shape_cast %140 : vector<256xf32> to vector<1x256xf32>
    %cst_74 = arith.constant dense<0xFF800000> : vector<1xf32>
    %142 = vector.multi_reduction <maximumf>, %141, %cst_74 [1] : vector<1x256xf32> to vector<1xf32>
    %143 = vector.shape_cast %142 : vector<1xf32> to vector<1x1xf32>
    %144 = vector.broadcast %143 : vector<1x1xf32> to vector<1x256xf32>
    %145 = arith.subf %141, %144 : vector<1x256xf32>
    %146 = math.exp %145 : vector<1x256xf32>
    %cst_75 = arith.constant dense<0.000000e+00> : vector<1xf32>
    %147 = vector.multi_reduction <add>, %146, %cst_75 [1] : vector<1x256xf32> to vector<1xf32>
    %148 = vector.shape_cast %147 : vector<1xf32> to vector<1x1xf32>
    %149 = vector.broadcast %148 : vector<1x1xf32> to vector<1x256xf32>
    %150 = arith.divf %146, %149 : vector<1x256xf32>
    %151 = vector.broadcast %150 : vector<1x256xf32> to vector<4x256xf32>
    %152 = arith.mulf %136, %151 : vector<4x256xf32>
    %cst_76 = arith.constant dense<0.000000e+00> : vector<4xf32>
    %153 = vector.multi_reduction <add>, %152, %cst_76 [1] : vector<4x256xf32> to vector<4xf32>
    %154 = vector.shape_cast %153 : vector<4xf32> to vector<4x1xf32>
    %c0_77 = arith.constant 0 : index
    %c0_78 = arith.constant 0 : index
    %155 = vector.load %arg6[%c0_77, %c0_78] : memref<4x4xf32, #tpu.memory_space<vmem>>, vector<4x4xf32>
    %156 = vector.broadcast %154 : vector<4x1xf32> to vector<4x4xf32>
    %157 = arith.mulf %156, %155 : vector<4x4xf32>
    %cst_79 = arith.constant dense<0.000000e+00> : vector<4xf32>
    %158 = vector.multi_reduction <add>, %157, %cst_79 [0] : vector<4x4xf32> to vector<4xf32>
    %159 = vector.shape_cast %158 : vector<4xf32> to vector<1x4xf32>
    %cst_80 = arith.constant 0.000000e+00 : f32
    %160 = vector.broadcast %cst_80 : f32 to vector<1x4xf32>
    %161 = arith.cmpf ogt, %159, %160 : vector<1x4xf32>
    %cst_81 = arith.constant 2.000000e-01 : f32
    %162 = vector.broadcast %cst_81 : f32 to vector<1x4xf32>
    %163 = arith.mulf %162, %159 : vector<1x4xf32>
    %164 = arith.select %161, %159, %163 : vector<1x4xi1>, vector<1x4xf32>
    %c0_82 = arith.constant 0 : index
    %c0_83 = arith.constant 0 : index
    %165 = vector.load %arg7[%c0_82, %c0_83] : memref<4x4xf32, #tpu.memory_space<vmem>>, vector<4x4xf32>
    %166 = vector.broadcast %164 : vector<1x4xf32> to vector<4x4xf32>
    %167 = arith.mulf %165, %166 : vector<4x4xf32>
    %cst_84 = arith.constant dense<0.000000e+00> : vector<4xf32>
    %168 = vector.multi_reduction <add>, %167, %cst_84 [1] : vector<4x4xf32> to vector<4xf32>
    %169 = vector.shape_cast %168 : vector<4xf32> to vector<4x1xf32>
    %170 = vector.broadcast %169 : vector<4x1xf32> to vector<4x256xf32>
    %171 = arith.addf %136, %170 : vector<4x256xf32>
    %c0_85 = arith.constant 0 : index
    %c0_86 = arith.constant 0 : index
    %172 = vector.load %arg8[%c0_85, %c0_86] : memref<4x4xbf16, #tpu.memory_space<vmem>>, vector<4x4xbf16>
    %173 = arith.truncf %171 : vector<4x256xf32> to vector<4x256xbf16>
    %cst_87 = arith.constant dense<0.000000e+00> : vector<4x256xf32>
    %174 = tpu.matmul %172, %173, %cst_87 {dimension_numbers = #tpu.dot_dimension_numbers<[1], [0], [0], [1], [0, 0, 1, 1], [], []>} : vector<4x4xbf16>, vector<4x256xbf16>, vector<4x256xf32> -> vector<4x256xf32>
    %175 = arith.extf %1 : vector<4x256xbf16> to vector<4x256xf32>
    %176 = arith.addf %174, %175 : vector<4x256xf32>
    %177 = arith.truncf %176 : vector<4x256xf32> to vector<4x256xbf16>
    %c0_88 = arith.constant 0 : index
    %c0_89 = arith.constant 0 : index
    %c0_90 = arith.constant 0 : index
    %178 = vector.load %arg9[%c0_88, %c0_89, %c0_90] : memref<1x4x256xbf16, #tpu.memory_space<vmem>>, vector<1x4x256xbf16>
    %179 = vector.shape_cast %178 : vector<1x4x256xbf16> to vector<4x256xbf16>
    %180 = vector.shape_cast %177 : vector<4x256xbf16> to vector<1x4x256xbf16>
    tpu.vector_store %arg9[%c0_88, %c0_89, %c0_90], %180 {strides = array<i32>} : memref<1x4x256xbf16, #tpu.memory_space<vmem>>, vector<1x4x256xbf16>,
    return
  }
  func.func @transform_0(%arg0: i32) -> (i32, i32, i32) {
    %c0_i32 = arith.constant 0 : i32
    %c0_i32_0 = arith.constant 0 : i32
    %c0_i32_1 = arith.constant 0 : i32
    return %arg0, %c0_i32, %c0_i32_0 : i32, i32, i32
  }
  func.func @transform_1(%arg0: i32) -> (i32, i32) {
    %c0_i32 = arith.constant 0 : i32
    %c0_i32_0 = arith.constant 0 : i32
    %c0_i32_1 = arith.constant 0 : i32
    return %c0_i32, %c0_i32_0 : i32, i32
  }
  func.func @transform_2(%arg0: i32) -> (i32, i32, i32) {
    %c0_i32 = arith.constant 0 : i32
    %c0_i32_0 = arith.constant 0 : i32
    %c0_i32_1 = arith.constant 0 : i32
    %c0_i32_2 = arith.constant 0 : i32
    return %c0_i32, %c0_i32_0, %c0_i32_1 : i32, i32, i32
  }
  func.func @transform_3(%arg0: i32) -> (i32, i32, i32) {
    %c0_i32 = arith.constant 0 : i32
    %c0_i32_0 = arith.constant 0 : i32
    %c0_i32_1 = arith.constant 0 : i32
    %c0_i32_2 = arith.constant 0 : i32
    return %c0_i32, %c0_i32_0, %c0_i32_1 : i32, i32, i32
  }
  func.func @transform_4(%arg0: i32) -> (i32, i32) {
    %c0_i32 = arith.constant 0 : i32
    %c0_i32_0 = arith.constant 0 : i32
    %c0_i32_1 = arith.constant 0 : i32
    return %c0_i32, %c0_i32_0 : i32, i32
  }
  func.func @transform_5(%arg0: i32) -> (i32, i32) {
    %c0_i32 = arith.constant 0 : i32
    %c0_i32_0 = arith.constant 0 : i32
    %c0_i32_1 = arith.constant 0 : i32
    return %c0_i32, %c0_i32_0 : i32, i32
  }
  func.func @transform_6(%arg0: i32) -> (i32, i32) {
    %c0_i32 = arith.constant 0 : i32
    %c0_i32_0 = arith.constant 0 : i32
    %c0_i32_1 = arith.constant 0 : i32
    return %c0_i32, %c0_i32_0 : i32, i32
  }
  func.func @transform_7(%arg0: i32) -> (i32, i32) {
    %c0_i32 = arith.constant 0 : i32
    %c0_i32_0 = arith.constant 0 : i32
    %c0_i32_1 = arith.constant 0 : i32
    return %c0_i32, %c0_i32_0 : i32, i32
  }
  func.func @transform_8(%arg0: i32) -> (i32, i32, i32) {
    %c0_i32 = arith.constant 0 : i32
    %c0_i32_0 = arith.constant 0 : i32
    %c0_i32_1 = arith.constant 0 : i32
    return %arg0, %c0_i32, %c0_i32_0 : i32, i32, i32
  }
}

</mosaic_0001>

<llo_original>
// kernel: rgcab_forward.5
$region0: #{rgcab_forward.5}
  #allocation0 [shape = 'u32[]', space=smem, size = 0x4, offset = 0x4, fixed_abs, tag = 'smem constant byte address 0x4 - core index']
  #allocation1 [shape = 'u32[144,128]{1,0:T(1,128)}', space=vmem, size = 0x12000, scoped, tag = 'internal scratch']
  %s0 = inlined_call_operand.vmem [shape: bf16[2,4,256], index: 0, kind: input, shape index: {}]
  %s1 = inlined_call_operand.vmem [shape: f32[2,4,256], index: 1, kind: input, shape index: {}]
  %s2 = inlined_call_operand.vmem [shape: bf16[2,256], index: 2, kind: input, shape index: {}]
  %s3 = inlined_call_operand.vmem [shape: bf16[9,4,4], index: 3, kind: input, shape index: {}]
  %s4 = inlined_call_operand.vmem [shape: f32[2,4,256], index: 4, kind: output, shape index: {}]
  %s5 = sld [smem:[#allocation0]]
  $region49: #{rgcab_forward.5} parent=0
    _
  %s7 = ssub.s32 1, %s5
  %s8 = scalar_select 0, %s7, %s5
  loop: start=0, step=1, limit=4
  $region2: #{rgcab_forward.5} parent=0 // loop_pre_header
    _
  $region3: #{rgcab_forward.5} parent=0 // loop_header
    %s10 = sphi 0, %s14
    %p11 = scmp.ge.s32.totalorder %s10, 4
    %s20 = sphi 0, %s22
    %s23 = sphi 0, %s20
    %s24 = sphi 0, %s23
    %s40 = sphi 0, %s24
    %s46 = sphi 0, %s48
    %s49 = sphi 0, %s46
    %s50 = sphi 0, %s49
    %s66 = sphi 0, %s50
    %s70 = sphi 0, %s70
    %s72 = sphi 0, %s70
    %s73 = sphi 0, %s72
    %s87 = sphi 0, %s73
    %s91 = sphi 0, %s91
    %s93 = sphi 0, %s91
    %s94 = sphi 0, %s93
    %s108 = sphi 0, %s94
    %s114 = sphi 0, %s116
    %s117 = sphi 0, %s114
    %s118 = sphi 0, %s117
    %s134 = sphi 0, %s118
  $region4: #{rgcab_forward.5} parent=0 // loop_header_branch
    %13 = sbr.rel (%p11) target = $region8
  $region5: #{rgcab_forward.5} parent=0 // loop_body
    %s15 = ssub.s32 %s10, 1
    %s16 = ssub.s32 %s10, 2
    %s17 = sadd.s32 %s10, 1
    %s18 = ssub.s32 %s10, %s17
    %p19 = scmp.eq.s32.totalorder %s18, 0
    %s21 = sadd.s32 %s20, 1
    %s22 = scalar_select %p19, %s20, %s21
    %p25 = pneg %p19
    %p26 = scmp.eq.s32.totalorder %s10, 1
    %p27 = por %p25, %p26
    %p28 = scmp.ne.s32.totalorder %s20, %s23
    %p29 = scmp.eq.s32.totalorder %s10, 0
    %p30 = por %p28, %p29
    %p31 = scmp.ne.s32.totalorder %s20, %s23
    %p32 = scmp.eq.s32.totalorder %s15, 1
    %p33 = por %p31, %p32
    %p34 = scmp.ne.s32.totalorder %s23, %s24
    %p35 = scmp.eq.s32.totalorder %s15, 0
    %p36 = por %p34, %p35
    %p37 = scmp.ne.s32.totalorder %s23, %s24
    %p38 = scmp.eq.s32.totalorder %s16, 1
    %p39 = por %p37, %p38
    %p41 = scmp.ne.s32.totalorder %s24, %s40
    %p42 = scmp.eq.s32.totalorder %s16, 0
    %p43 = por %p41, %p42
    %s44 = ssub.s32 %s10, %s17
    %p45 = scmp.eq.s32.totalorder %s44, 0
    %s47 = sadd.s32 %s46, 1
    %s48 = scalar_select %p45, %s46, %s47
    %p51 = pneg %p45
    %p52 = scmp.eq.s32.totalorder %s10, 1
    %p53 = por %p51, %p52
    %p54 = scmp.ne.s32.totalorder %s46, %s49
    %p55 = scmp.eq.s32.totalorder %s10, 0
    %p56 = por %p54, %p55
    %p57 = scmp.ne.s32.totalorder %s46, %s49
    %p58 = scmp.eq.s32.totalorder %s15, 1
    %p59 = por %p57, %p58
    %p60 = scmp.ne.s32.totalorder %s49, %s50
    %p61 = scmp.eq.s32.totalorder %s15, 0
    %p62 = por %p60, %p61
    %p63 = scmp.ne.s32.totalorder %s49, %s50
    %p64 = scmp.eq.s32.totalorder %s16, 1
    %p65 = por %p63, %p64
    %p67 = scmp.ne.s32.totalorder %s50, %s66
    %p68 = scmp.eq.s32.totalorder %s16, 0
    %p69 = por %p67, %p68
    %s71 = sadd.s32 %s70, 1
    %p74 = scmp.eq.s32.totalorder %s10, 1
    %p75 = scmp.ne.s32.totalorder %s70, %s72
    %p76 = scmp.eq.s32.totalorder %s10, 0
    %p77 = por %p75, %p76
    %p78 = scmp.ne.s32.totalorder %s70, %s72
    %p79 = scmp.eq.s32.totalorder %s15, 1
    %p80 = por %p78, %p79
    %p81 = scmp.ne.s32.totalorder %s72, %s73
    %p82 = scmp.eq.s32.totalorder %s15, 0
    %p83 = por %p81, %p82
    %p84 = scmp.ne.s32.totalorder %s72, %s73
    %p85 = scmp.eq.s32.totalorder %s16, 1
    %p86 = por %p84, %p85
    %p88 = scmp.ne.s32.totalorder %s73, %s87
    %p89 = scmp.eq.s32.totalorder %s16, 0
    %p90 = por %p88, %p89
    %s92 = sadd.s32 %s91, 1
    %p95 = scmp.eq.s32.totalorder %s10, 1
    %p96 = scmp.ne.s32.totalorder %s91, %s93
    %p97 = scmp.eq.s32.totalorder %s10, 0
    %p98 = por %p96, %p97
    %p99 = scmp.ne.s32.totalorder %s91, %s93
    %p100 = scmp.eq.s32.totalorder %s15, 1
    %p101 = por %p99, %p100
    %p102 = scmp.ne.s32.totalorder %s93, %s94
    %p103 = scmp.eq.s32.totalorder %s15, 0
    %p104 = por %p102, %p103
    %p105 = scmp.ne.s32.totalorder %s93, %s94
    %p106 = scmp.eq.s32.totalorder %s16, 1
    %p107 = por %p105, %p106
    %p109 = scmp.ne.s32.totalorder %s94, %s108
    %p110 = scmp.eq.s32.totalorder %s16, 0
    %p111 = por %p109, %p110
    %s112 = ssub.s32 %s10, %s17
    %p113 = scmp.eq.s32.totalorder %s112, 0
    %s115 = sadd.s32 %s114, 1
    %s116 = scalar_select %p113, %s114, %s115
    %p119 = pneg %p113
    %p120 = scmp.eq.s32.totalorder %s10, 1
    %p121 = por %p119, %p120
    %p122 = scmp.ne.s32.totalorder %s114, %s117
    %p123 = scmp.eq.s32.totalorder %s10, 0
    %p124 = por %p122, %p123
    %p125 = scmp.ne.s32.totalorder %s114, %s117
    %p126 = scmp.eq.s32.totalorder %s15, 1
    %p127 = por %p125, %p126
    %p128 = scmp.ne.s32.totalorder %s117, %s118
    %p129 = scmp.eq.s32.totalorder %s15, 0
    %p130 = por %p128, %p129
    %p131 = scmp.ne.s32.totalorder %s117, %s118
    %p132 = scmp.eq.s32.totalorder %s16, 1
    %p133 = por %p131, %p132
    %p135 = scmp.ne.s32.totalorder %s118, %s134
    %p136 = scmp.eq.s32.totalorder %s16, 0
    %p137 = por %p135, %p136
    %p138 = scmp.le.s32.totalorder 1, %s10
    %p139 = scmp.lt.s32.totalorder %s10, 3
    %p140 = pnand %p138, %p139
    %p141 = pneg %p140
    // Predicated region
    $region9: #{rgcab_forward.5} parent=5 // pred_check
      _
    $region10: #{rgcab_forward.5} parent=5 // pred_check_branch
      %143 = sbr.rel (%p140) target = $region12
    $region11: #{rgcab_forward.5} parent=5 // pred_region
      %s144 = ssub.s32 %s10, 1
      // Predicated region
      $region13: #{rgcab_forward.5} parent=11 // pred_check
        %p145 = pneg %p83
      $region14: #{rgcab_forward.5} parent=11 // pred_check_branch
        %147 = sbr.rel (%p145) target = $region16
      $region15: #{rgcab_forward.5} parent=11 // pred_region
        _
      $region16: #{rgcab_forward.5} parent=11 // pred_fallthru
        _
      // Predicated region
      $region17: #{rgcab_forward.5} parent=11 // pred_check
        %p148 = pneg %p104
      $region18: #{rgcab_forward.5} parent=11 // pred_check_branch
        %150 = sbr.rel (%p148) target = $region20
      $region19: #{rgcab_forward.5} parent=11 // pred_region
        _
      $region20: #{rgcab_forward.5} parent=11 // pred_fallthru
        _
    $region12: #{rgcab_forward.5} parent=5 // pred_fallthru
      _
    %p151 = scmp.lt.s32.totalorder %s10, 2
    // Predicated region
    $region21: #{rgcab_forward.5} parent=5 // pred_check
      %p152 = pneg %p151
    $region22: #{rgcab_forward.5} parent=5 // pred_check_branch
      %154 = sbr.rel (%p152) target = $region24
    $region23: #{rgcab_forward.5} parent=5 // pred_region
      // Predicated region
      $region25: #{rgcab_forward.5} parent=23 // pred_check
        %p155 = pneg %p30
      $region26: #{rgcab_forward.5} parent=23 // pred_check_branch
        %157 = sbr.rel (%p155) target = $region28
      $region27: #{rgcab_forward.5} parent=23 // pred_region
        %p158 = scmp.lt.s32.totalorder %s10, 1
        %s159 = scalar_select %p158, %s10, 1
        %s160 = smul.addr %s159, 2
        %s161 = smul.addr %s160, 2
        %s162 = scalar_lea.vmem %s0, %s161
      $region28: #{rgcab_forward.5} parent=23 // pred_fallthru
        _
      // Predicated region
      $region29: #{rgcab_forward.5} parent=23 // pred_check
        %p163 = pneg %p56
      $region30: #{rgcab_forward.5} parent=23 // pred_check_branch
        %165 = sbr.rel (%p163) target = $region32
      $region31: #{rgcab_forward.5} parent=23 // pred_region
        %p166 = scmp.lt.s32.totalorder %s10, 1
        %s167 = scalar_select %p166, %s10, 1
        %s168 = smul.addr %s167, 2
        %s169 = smul.addr %s168, 4
        %s170 = scalar_lea.vmem %s1, %s169
      $region32: #{rgcab_forward.5} parent=23 // pred_fallthru
        _
    $region24: #{rgcab_forward.5} parent=5 // pred_fallthru
      _
    %p171 = scmp.le.s32.totalorder 1, %s10
    %p172 = scmp.lt.s32.totalorder %s10, 3
    %p173 = pnand %p171, %p172
    %p174 = pneg %p173
    // Predicated region
    $region33: #{rgcab_forward.5} parent=5 // pred_check
      _
    $region34: #{rgcab_forward.5} parent=5 // pred_check_branch
      %176 = sbr.rel (%p173) target = $region36
    $region35: #{rgcab_forward.5} parent=5 // pred_region
      %s177 = ssub.s32 %s10, 1
      %p178 = scmp.lt.s32.totalorder %s15, 1
      %s179 = scalar_select %p178, %s15, 1
      %s180 = smul.addr %s179, 2
      %s181 = smul.addr %s180, 2
      %s182 = scalar_lea.vmem %s0, %s181
      %p183 = pneg %p36
      %p184 = pneg %p33
      %p185 = scmp.lt.s32.totalorder %s15, 1
      %s186 = scalar_select %p185, %s15, 1
      %s187 = smul.addr %s186, 2
      %s188 = smul.addr %s187, 4
      %s189 = scalar_lea.vmem %s1, %s188
      %p190 = pneg %p62
      %p191 = pneg %p59
      %p192 = pneg %p83
      %p193 = pneg %p80
      %p194 = pneg %p104
      %p195 = pneg %p101
      %p196 = pneg %p130
      %p197 = pneg %p127
      %p198 = scmp.lt.s32.totalorder %s15, 1
      %s199 = scalar_select %p198, %s15, 1
      %s200 = smul.addr %s199, 2
      %s201 = smul.addr %s200, 4
      %s202 = scalar_lea.vmem %s4, %s201
      %p203 = scmp.lt.s32.totalorder %s15, 1
      %s204 = scalar_select %p203, %s15, 1
      %s205 = smul.addr %s204, 2
      %s206 = smul.addr %s205, 2
      %s207 = scalar_lea.vmem %s0, %s206
      %p208 = scmp.lt.s32.totalorder %s15, 1
      %s209 = scalar_select %p208, %s15, 1
      %s210 = smul.addr %s209, 2
      %s211 = smul.addr %s210, 4
      %s212 = scalar_lea.vmem %s1, %s211
      %p213 = scmp.lt.s32.totalorder %s15, 1
      %s214 = scalar_select %p213, %s15, 1
      %s215 = smul.addr %s214, 2
      %s216 = smul.addr %s215, 4
      %s217 = scalar_lea.vmem %s4, %s216
      %v219 = vld [vmem:[%s207] sm:$0xf]
      %v220 = vld [vmem:[%s2] sm:$0x3]
      %v223 = vunpack.c.l.s4 1983009808
      %v224 = vunpack.c.0.s8 %v223
      %v225 = vlaneseq
      %v226 = vshrl.u32 %v225, 7
      %v227 = vsub.s32 %v224, %v226
      %v228 = vrot.slane %v219, %v227
      %v229 = vcombine.high %v228, %v228
      %230 = vrot.lane.b32.xlu0 %v228, 17
      %v231 = vpop.permute.xlu0 %230
      %232 = vrot.lane.b32.xlu0 %v229, 17
      %v233 = vpop.permute.xlu0 %232
      %vm234 = vcmask 138240
      %v235 = vsel %vm234, %v231, %v233
      %vm237 = vcmask 138240
      %v240 = vsel %vm237, 0, %v231
      %v243 = vsel %vm237, %v233, 0
      %v247 = vunpack.c.l.s4 1966171168
      %v248 = vunpack.c.0.s8 %v247
      %v249 = vlaneseq
      %v250 = vshrl.u32 %v249, 7
      %v251 = vsub.s32 %v248, %v250
      %v252 = vrot.slane %v220, %v251
      %v253 = vcombine.high %v252, %v252
      %v255 = vunpack.c.l.s4 1966171168
      %v256 = vunpack.c.0.s8 %v255
      %v257 = vlaneseq
      %v258 = vshrl.u32 %v257, 7
      %v259 = vsub.s32 %v256, %v258
      %v260 = vrot.slane %v252, %v259
      %v262 = vunpack.c.l.s4 1966171168
      %v263 = vunpack.c.0.s8 %v262
      %v264 = vlaneseq
      %v265 = vshrl.u32 %v264, 7
      %v266 = vsub.s32 %v263, %v265
      %v267 = vrot.slane %v253, %v266
      %v269 = vpack.i.b16 %v260, %v260
      %v271 = vlaneseq
      %v272 = vshrl.u32 %v271, 7
      %v273 = vsub.s32 0, %v272
      %v274 = vrot.slane %v269, %v273
      %v276 = vpack.i.b16 %v267, %v267
      %v278 = vlaneseq
      %v279 = vshrl.u32 %v278, 7
      %v280 = vsub.s32 0, %v279
      %v281 = vrot.slane %v276, %v280
      %v282 = vmul.bf16 %v240, %v274
      %v283 = vmul.bf16 %v235, %v281
      %v284 = vld [vmem:[%s3] sm:$0x3]
      %s285 = scalar_lea.vmem %s3, 2
      %v286 = vld [vmem:[%s285] sm:$0x3]
      %289 = vrot.lane.b32.xlu0 %v240, 127
      %v290 = vpop.permute.xlu0 %289
      %291 = vrot.lane.b32.xlu0 %v235, 127
      %v292 = vpop.permute.xlu0 %291
      %293 = vrot.lane.b32.xlu0 %v243, 127
      %v294 = vpop.permute.xlu0 %293
      %vm295 = vcmask 1039360
      %v296 = vsel %vm295, %v290, %v292
      %v297 = vsel %vm295, %v292, %v294
      %vm298 = vcmask 31744
      %v300 = vsel %vm298, %v286, 0
      %vm302 = vcmask 1041408
      %v304 = vsel %vm302, %v296, 0
      %v307 = vsel %vm302, %v297, 0
      %309 = vmatprep.subr.bf16.mxu0 %v307
      %310 = vmatpush1.bf16.msra.mxu0 %v304
      %311 = vmatprep.subr.bf16.mxu0 0
      %312 = vmatpush1.bf16.msra.mxu0 0
      %313 = vmatprep.subr.bf16.mxu0 0
      %314 = vmatpush1.bf16.msra.mxu0 0
      %315 = vmatprep.subr.bf16.mxu0 0
      %316 = vmatpush1.bf16.msra.mxu0 0
      %317 = vmatprep.subr.bf16.mxu0 0
      %318 = vmatpush1.bf16.msra.mxu0 0
      %319 = vmatprep.subr.bf16.mxu0 0
      %320 = vmatpush1.bf16.msra.mxu0 0
      %321 = vmatprep.subr.bf16.mxu0 0
      %322 = vmatpush1.bf16.msra.mxu0 0
      %323 = vmatprep.subr.bf16.mxu0 0
      %324 = vmatpush1.bf16.msra.mxu0 0
      %325 = vmatprep.subr.bf16.mxu0 0
      %326 = vmatpush1.bf16.msra.mxu0 0
      %327 = vmatprep.subr.bf16.mxu0 0
      %328 = vmatpush1.bf16.msra.mxu0 0
      %329 = vmatprep.subr.bf16.mxu0 0
      %330 = vmatpush1.bf16.msra.mxu0 0
      %331 = vmatprep.subr.bf16.mxu0 0
      %332 = vmatpush1.bf16.msra.mxu0 0
      %333 = vmatprep.subr.bf16.mxu0 0
      %334 = vmatpush1.bf16.msra.mxu0 0
      %335 = vmatprep.subr.bf16.mxu0 0
      %336 = vmatpush1.bf16.msra.mxu0 0
      %337 = vmatprep.subr.bf16.mxu0 0
      %338 = vmatpush1.bf16.msra.mxu0 0
      %339 = vmatprep.subr.bf16.mxu0 0
      %340 = vmatpush1.bf16.msra.mxu0 0
      %341 = vmatprep.mubr.bf16.mxu0 0
      %342 = vmatmul.mubr.bf16.gmra.mrb[0].mxu0 %v300
      %v343 = vpop.f32.mrb[0].mxu0
      %v344 = vadd.f32 0.0, %v343
      %v345 = vpop.f32.mrb[0].mxu0
      %v346 = vadd.f32 0.0, %v345
      %v347 = vpop.f32.mrb[0].mxu0
      %v348 = vpop.f32.mrb[0].mxu0
      %349 = vdwg.mxu0
      %v351 = vsel %vm298, %v284, 0
      %v354 = vsel %vm302, %v282, 0
      %v357 = vsel %vm302, %v283, 0
      %359 = vmatprep.subr.bf16.mxu0 %v357
      %360 = vmatpush1.bf16.msra.mxu0 %v354
      %361 = vmatprep.subr.bf16.mxu0 0
      %362 = vmatpush1.bf16.msra.mxu0 0
      %363 = vmatprep.subr.bf16.mxu0 0
      %364 = vmatpush1.bf16.msra.mxu0 0
      %365 = vmatprep.subr.bf16.mxu0 0
      %366 = vmatpush1.bf16.msra.mxu0 0
      %367 = vmatprep.subr.bf16.mxu0 0
      %368 = vmatpush1.bf16.msra.mxu0 0
      %369 = vmatprep.subr.bf16.mxu0 0
      %370 = vmatpush1.bf16.msra.mxu0 0
      %371 = vmatprep.subr.bf16.mxu0 0
      %372 = vmatpush1.bf16.msra.mxu0 0
      %373 = vmatprep.subr.bf16.mxu0 0
      %374 = vmatpush1.bf16.msra.mxu0 0
      %375 = vmatprep.subr.bf16.mxu0 0
      %376 = vmatpush1.bf16.msra.mxu0 0
      %377 = vmatprep.subr.bf16.mxu0 0
      %378 = vmatpush1.bf16.msra.mxu0 0
      %379 = vmatprep.subr.bf16.mxu0 0
      %380 = vmatpush1.bf16.msra.mxu0 0
      %381 = vmatprep.subr.bf16.mxu0 0
      %382 = vmatpush1.bf16.msra.mxu0 0
      %383 = vmatprep.subr.bf16.mxu0 0
      %384 = vmatpush1.bf16.msra.mxu0 0
      %385 = vmatprep.subr.bf16.mxu0 0
      %386 = vmatpush1.bf16.msra.mxu0 0
      %387 = vmatprep.subr.bf16.mxu0 0
      %388 = vmatpush1.bf16.msra.mxu0 0
      %389 = vmatprep.subr.bf16.mxu0 0
      %390 = vmatpush1.bf16.msra.mxu0 0
      %391 = vmatprep.mubr.bf16.mxu0 0
      %392 = vmatmul.mubr.bf16.gmra.mrb[0].mxu0 %v351
      %v393 = vpop.f32.mrb[0].mxu0
      %v394 = vadd.f32 %v344, %v393
      %v395 = vpop.f32.mrb[0].mxu0
      %v396 = vadd.f32 %v346, %v395
      %v397 = vpop.f32.mrb[0].mxu0
      %v398 = vpop.f32.mrb[0].mxu0
      %399 = vdwg.mxu0
      %v400 = vshrl.u32 %v260, 16
      %v401 = vpack.i.b16 %v400, %v400
      %v403 = vlaneseq
      %v404 = vshrl.u32 %v403, 7
      %v405 = vsub.s32 0, %v404
      %v406 = vrot.slane %v401, %v405
      %v407 = vshrl.u32 %v267, 16
      %v408 = vpack.i.b16 %v407, %v407
      %v410 = vlaneseq
      %v411 = vshrl.u32 %v410, 7
      %v412 = vsub.s32 0, %v411
      %v413 = vrot.slane %v408, %v412
      %416 = vrot.lane.b32.xlu0 %v406, 2
      %v417 = vpop.permute.xlu0 %416
      %418 = vrot.lane.b32.xlu0 %v413, 2
      %v419 = vpop.permute.xlu0 %418
      %vm420 = vcmask 15360
      %v421 = vsel %vm420, %v417, %v419
      %v425 = vmul.bf16 %v240, %v417
      %v426 = vmul.bf16 %v235, %v421
      %v427 = vmul.bf16 %v243, %v419
      %s428 = scalar_lea.vmem %s3, 4
      %v429 = vld [vmem:[%s428] sm:$0x3]
      %433 = vrot.lane.b32.xlu0 %v425, 126
      %v434 = vpop.permute.xlu0 %433
      %435 = vrot.lane.b32.xlu0 %v426, 126
      %v436 = vpop.permute.xlu0 %435
      %437 = vrot.lane.b32.xlu0 %v427, 126
      %v438 = vpop.permute.xlu0 %437
      %vm439 = vcmask 1031168
      %v440 = vsel %vm439, %v434, %v436
      %v441 = vsel %vm439, %v436, %v438
      %v443 = vsel %vm298, %v429, 0
      %v446 = vsel %vm302, %v440, 0
      %v449 = vsel %vm302, %v441, 0
      %451 = vmatprep.subr.bf16.mxu0 %v449
      %452 = vmatpush1.bf16.msra.mxu0 %v446
      %453 = vmatprep.subr.bf16.mxu0 0
      %454 = vmatpush1.bf16.msra.mxu0 0
      %455 = vmatprep.subr.bf16.mxu0 0
      %456 = vmatpush1.bf16.msra.mxu0 0
      %457 = vmatprep.subr.bf16.mxu0 0
      %458 = vmatpush1.bf16.msra.mxu0 0
      %459 = vmatprep.subr.bf16.mxu0 0
      %460 = vmatpush1.bf16.msra.mxu0 0
      %461 = vmatprep.subr.bf16.mxu0 0
      %462 = vmatpush1.bf16.msra.mxu0 0
      %463 = vmatprep.subr.bf16.mxu0 0
      %464 = vmatpush1.bf16.msra.mxu0 0
      %465 = vmatprep.subr.bf16.mxu0 0
      %466 = vmatpush1.bf16.msra.mxu0 0
      %467 = vmatprep.subr.bf16.mxu0 0
      %468 = vmatpush1.bf16.msra.mxu0 0
      %469 = vmatprep.subr.bf16.mxu0 0
      %470 = vmatpush1.bf16.msra.mxu0 0
      %471 = vmatprep.subr.bf16.mxu0 0
      %472 = vmatpush1.bf16.msra.mxu0 0
      %473 = vmatprep.subr.bf16.mxu0 0
      %474 = vmatpush1.bf16.msra.mxu0 0
      %475 = vmatprep.subr.bf16.mxu0 0
      %476 = vmatpush1.bf16.msra.mxu0 0
      %477 = vmatprep.subr.bf16.mxu0 0
      %478 = vmatpush1.bf16.msra.mxu0 0
      %479 = vmatprep.subr.bf16.mxu0 0
      %480 = vmatpush1.bf16.msra.mxu0 0
      %481 = vmatprep.subr.bf16.mxu0 0
      %482 = vmatpush1.bf16.msra.mxu0 0
      %483 = vmatprep.mubr.bf16.mxu0 0
      %484 = vmatmul.mubr.bf16.gmra.mrb[0].mxu0 %v443
      %v485 = vpop.f32.mrb[0].mxu0
      %v486 = vadd.f32 0.0, %v485
      %v487 = vpop.f32.mrb[0].mxu0
      %v488 = vadd.f32 0.0, %v487
      %v489 = vpop.f32.mrb[0].mxu0
      %v490 = vpop.f32.mrb[0].mxu0
      %491 = vdwg.mxu0
      %v492 = vadd.f32 %v394, %v486
      %v493 = vadd.f32 %v396, %v488
      %496 = vrot.lane.b32.xlu0 %v274, 16
      %v497 = vpop.permute.xlu0 %496
      %498 = vrot.lane.b32.xlu0 %v281, 16
      %v499 = vpop.permute.xlu0 %498
      %vm500 = vcmask 130048
      %v501 = vsel %vm500, %v497, %v499
      %v505 = vmul.bf16 %v240, %v497
      %v506 = vmul.bf16 %v235, %v501
      %v507 = vmul.bf16 %v243, %v499
      %s508 = scalar_lea.vmem %s3, 6
      %v509 = vld [vmem:[%s508] sm:$0x3]
      %513 = vrot.lane.b32.xlu0 %v505, 112
      %v514 = vpop.permute.xlu0 %513
      %515 = vrot.lane.b32.xlu0 %v506, 112
      %v516 = vpop.permute.xlu0 %515
      %517 = vrot.lane.b32.xlu0 %v507, 112
      %v518 = vpop.permute.xlu0 %517
      %vm519 = vcmask 916480
      %v520 = vsel %vm519, %v514, %v516
      %v521 = vsel %vm519, %v516, %v518
      %v523 = vsel %vm298, %v509, 0
      %v526 = vsel %vm302, %v520, 0
      %v529 = vsel %vm302, %v521, 0
      %531 = vmatprep.subr.bf16.mxu0 %v529
      %532 = vmatpush1.bf16.msra.mxu0 %v526
      %533 = vmatprep.subr.bf16.mxu0 0
      %534 = vmatpush1.bf16.msra.mxu0 0
      %535 = vmatprep.subr.bf16.mxu0 0
      %536 = vmatpush1.bf16.msra.mxu0 0
      %537 = vmatprep.subr.bf16.mxu0 0
      %538 = vmatpush1.bf16.msra.mxu0 0
      %539 = vmatprep.subr.bf16.mxu0 0
      %540 = vmatpush1.bf16.msra.mxu0 0
      %541 = vmatprep.subr.bf16.mxu0 0
      %542 = vmatpush1.bf16.msra.mxu0 0
      %543 = vmatprep.subr.bf16.mxu0 0
      %544 = vmatpush1.bf16.msra.mxu0 0
      %545 = vmatprep.subr.bf16.mxu0 0
      %546 = vmatpush1.bf16.msra.mxu0 0
      %547 = vmatprep.subr.bf16.mxu0 0
      %548 = vmatpush1.bf16.msra.mxu0 0
      %549 = vmatprep.subr.bf16.mxu0 0
      %550 = vmatpush1.bf16.msra.mxu0 0
      %551 = vmatprep.subr.bf16.mxu0 0
      %552 = vmatpush1.bf16.msra.mxu0 0
      %553 = vmatprep.subr.bf16.mxu0 0
      %554 = vmatpush1.bf16.msra.mxu0 0
      %555 = vmatprep.subr.bf16.mxu0 0
      %556 = vmatpush1.bf16.msra.mxu0 0
      %557 = vmatprep.subr.bf16.mxu0 0
      %558 = vmatpush1.bf16.msra.mxu0 0
      %559 = vmatprep.subr.bf16.mxu0 0
      %560 = vmatpush1.bf16.msra.mxu0 0
      %561 = vmatprep.subr.bf16.mxu0 0
      %562 = vmatpush1.bf16.msra.mxu0 0
      %563 = vmatprep.mubr.bf16.mxu0 0
      %564 = vmatmul.mubr.bf16.gmra.mrb[0].mxu0 %v523
      %v565 = vpop.f32.mrb[0].mxu0
      %v566 = vadd.f32 0.0, %v565
      %v567 = vpop.f32.mrb[0].mxu0
      %v568 = vadd.f32 0.0, %v567
      %v569 = vpop.f32.mrb[0].mxu0
      %v570 = vpop.f32.mrb[0].mxu0
      %571 = vdwg.mxu0
      %v572 = vadd.f32 %v492, %v566
      %v573 = vadd.f32 %v493, %v568
      %s574 = scalar_lea.vmem %s3, 8
      %v575 = vld [vmem:[%s574] sm:$0x3]
      %576 = vrot.lane.b32.xlu0 %v240, 111
      %v577 = vpop.permute.xlu0 %576
      %578 = vrot.lane.b32.xlu0 %v235, 111
      %v579 = vpop.permute.xlu0 %578
      %580 = vrot.lane.b32.xlu0 %v243, 111
      %v581 = vpop.permute.xlu0 %580
      %vm582 = vcmask 908288
      %v583 = vsel %vm582, %v577, %v579
      %v584 = vsel %vm582, %v579, %v581
      %v586 = vsel %vm298, %v575, 0
      %v589 = vsel %vm302, %v583, 0
      %v592 = vsel %vm302, %v584, 0
      %594 = vmatprep.subr.bf16.mxu0 %v592
      %595 = vmatpush1.bf16.msra.mxu0 %v589
      %596 = vmatprep.subr.bf16.mxu0 0
      %597 = vmatpush1.bf16.msra.mxu0 0
      %598 = vmatprep.subr.bf16.mxu0 0
      %599 = vmatpush1.bf16.msra.mxu0 0
      %600 = vmatprep.subr.bf16.mxu0 0
      %601 = vmatpush1.bf16.msra.mxu0 0
      %602 = vmatprep.subr.bf16.mxu0 0
      %603 = vmatpush1.bf16.msra.mxu0 0
      %604 = vmatprep.subr.bf16.mxu0 0
      %605 = vmatpush1.bf16.msra.mxu0 0
      %606 = vmatprep.subr.bf16.mxu0 0
      %607 = vmatpush1.bf16.msra.mxu0 0
      %608 = vmatprep.subr.bf16.mxu0 0
      %609 = vmatpush1.bf16.msra.mxu0 0
      %610 = vmatprep.subr.bf16.mxu0 0
      %611 = vmatpush1.bf16.msra.mxu0 0
      %612 = vmatprep.subr.bf16.mxu0 0
      %613 = vmatpush1.bf16.msra.mxu0 0
      %614 = vmatprep.subr.bf16.mxu0 0
      %615 = vmatpush1.bf16.msra.mxu0 0
      %616 = vmatprep.subr.bf16.mxu0 0
      %617 = vmatpush1.bf16.msra.mxu0 0
      %618 = vmatprep.subr.bf16.mxu0 0
      %619 = vmatpush1.bf16.msra.mxu0 0
      %620 = vmatprep.subr.bf16.mxu0 0
      %621 = vmatpush1.bf16.msra.mxu0 0
      %622 = vmatprep.subr.bf16.mxu0 0
      %623 = vmatpush1.bf16.msra.mxu0 0
      %624 = vmatprep.subr.bf16.mxu0 0
      %625 = vmatpush1.bf16.msra.mxu0 0
      %626 = vmatprep.mubr.bf16.mxu0 0
      %627 = vmatmul.mubr.bf16.gmra.mrb[0].mxu0 %v586
      %v628 = vpop.f32.mrb[0].mxu0
      %v629 = vadd.f32 0.0, %v628
      %v630 = vpop.f32.mrb[0].mxu0
      %v631 = vadd.f32 0.0, %v630
      %v632 = vpop.f32.mrb[0].mxu0
      %v633 = vpop.f32.mrb[0].mxu0
      %634 = vdwg.mxu0
      %v635 = vadd.f32 %v572, %v629
      %v636 = vadd.f32 %v573, %v631
      %637 = vrot.lane.b32.xlu0 %v406, 18
      %v638 = vpop.permute.xlu0 %637
      %639 = vrot.lane.b32.xlu0 %v413, 18
      %v640 = vpop.permute.xlu0 %639
      %vm641 = vcmask 146432
      %v642 = vsel %vm641, %v638, %v640
      %v646 = vmul.bf16 %v240, %v638
      %v647 = vmul.bf16 %v235, %v642
      %v648 = vmul.bf16 %v243, %v640
      %s649 = scalar_lea.vmem %s3, 10
      %v650 = vld [vmem:[%s649] sm:$0x3]
      %654 = vrot.lane.b32.xlu0 %v646, 110
      %v655 = vpop.permute.xlu0 %654
      %656 = vrot.lane.b32.xlu0 %v647, 110
      %v657 = vpop.permute.xlu0 %656
      %658 = vrot.lane.b32.xlu0 %v648, 110
      %v659 = vpop.permute.xlu0 %658
      %vm660 = vcmask 900096
      %v661 = vsel %vm660, %v655, %v657
      %v662 = vsel %vm660, %v657, %v659
      %v664 = vsel %vm298, %v650, 0
      %v667 = vsel %vm302, %v661, 0
      %v670 = vsel %vm302, %v662, 0
      %672 = vmatprep.subr.bf16.mxu0 %v670
      %673 = vmatpush1.bf16.msra.mxu0 %v667
      %674 = vmatprep.subr.bf16.mxu0 0
      %675 = vmatpush1.bf16.msra.mxu0 0
      %676 = vmatprep.subr.bf16.mxu0 0
      %677 = vmatpush1.bf16.msra.mxu0 0
      %678 = vmatprep.subr.bf16.mxu0 0
      %679 = vmatpush1.bf16.msra.mxu0 0
      %680 = vmatprep.subr.bf16.mxu0 0
      %681 = vmatpush1.bf16.msra.mxu0 0
      %682 = vmatprep.subr.bf16.mxu0 0
      %683 = vmatpush1.bf16.msra.mxu0 0
      %684 = vmatprep.subr.bf16.mxu0 0
      %685 = vmatpush1.bf16.msra.mxu0 0
      %686 = vmatprep.subr.bf16.mxu0 0
      %687 = vmatpush1.bf16.msra.mxu0 0
      %688 = vmatprep.subr.bf16.mxu0 0
      %689 = vmatpush1.bf16.msra.mxu0 0
      %690 = vmatprep.subr.bf16.mxu0 0
      %691 = vmatpush1.bf16.msra.mxu0 0
      %692 = vmatprep.subr.bf16.mxu0 0
      %693 = vmatpush1.bf16.msra.mxu0 0
      %694 = vmatprep.subr.bf16.mxu0 0
      %695 = vmatpush1.bf16.msra.mxu0 0
      %696 = vmatprep.subr.bf16.mxu0 0
      %697 = vmatpush1.bf16.msra.mxu0 0
      %698 = vmatprep.subr.bf16.mxu0 0
      %699 = vmatpush1.bf16.msra.mxu0 0
      %700 = vmatprep.subr.bf16.mxu0 0
      %701 = vmatpush1.bf16.msra.mxu0 0
      %702 = vmatprep.subr.bf16.mxu0 0
      %703 = vmatpush1.bf16.msra.mxu0 0
      %704 = vmatprep.mubr.bf16.mxu0 0
      %705 = vmatmul.mubr.bf16.gmra.mrb[0].mxu0 %v664
      %v706 = vpop.f32.mrb[0].mxu0
      %v707 = vadd.f32 0.0, %v706
      %v708 = vpop.f32.mrb[0].mxu0
      %v709 = vadd.f32 0.0, %v708
      %v710 = vpop.f32.mrb[0].mxu0
      %v711 = vpop.f32.mrb[0].mxu0
      %712 = vdwg.mxu0
      %v713 = vadd.f32 %v635, %v707
      %v714 = vadd.f32 %v636, %v709
      %715 = vrot.lane.b32.xlu0 %v274, 32
      %v716 = vpop.permute.xlu0 %715
      %717 = vrot.lane.b32.xlu0 %v281, 32
      %v718 = vpop.permute.xlu0 %717
      %vm719 = vcmask 261120
      %v720 = vsel %vm719, %v716, %v718
      %v724 = vmul.bf16 %v240, %v716
      %v725 = vmul.bf16 %v235, %v720
      %v726 = vmul.bf16 %v243, %v718
      %s727 = scalar_lea.vmem %s3, 12
      %v728 = vld [vmem:[%s727] sm:$0x3]
      %732 = vrot.lane.b32.xlu0 %v724, 96
      %v733 = vpop.permute.xlu0 %732
      %734 = vrot.lane.b32.xlu0 %v725, 96
      %v735 = vpop.permute.xlu0 %734
      %736 = vrot.lane.b32.xlu0 %v726, 96
      %v737 = vpop.permute.xlu0 %736
      %vm738 = vcmask 785408
      %v739 = vsel %vm738, %v733, %v735
      %v740 = vsel %vm738, %v735, %v737
      %v742 = vsel %vm298, %v728, 0
      %v745 = vsel %vm302, %v739, 0
      %v748 = vsel %vm302, %v740, 0
      %750 = vmatprep.subr.bf16.mxu0 %v748
      %751 = vmatpush1.bf16.msra.mxu0 %v745
      %752 = vmatprep.subr.bf16.mxu0 0
      %753 = vmatpush1.bf16.msra.mxu0 0
      %754 = vmatprep.subr.bf16.mxu0 0
      %755 = vmatpush1.bf16.msra.mxu0 0
      %756 = vmatprep.subr.bf16.mxu0 0
      %757 = vmatpush1.bf16.msra.mxu0 0
      %758 = vmatprep.subr.bf16.mxu0 0
      %759 = vmatpush1.bf16.msra.mxu0 0
      %760 = vmatprep.subr.bf16.mxu0 0
      %761 = vmatpush1.bf16.msra.mxu0 0
      %762 = vmatprep.subr.bf16.mxu0 0
      %763 = vmatpush1.bf16.msra.mxu0 0
      %764 = vmatprep.subr.bf16.mxu0 0
      %765 = vmatpush1.bf16.msra.mxu0 0
      %766 = vmatprep.subr.bf16.mxu0 0
      %767 = vmatpush1.bf16.msra.mxu0 0
      %768 = vmatprep.subr.bf16.mxu0 0
      %769 = vmatpush1.bf16.msra.mxu0 0
      %770 = vmatprep.subr.bf16.mxu0 0
      %771 = vmatpush1.bf16.msra.mxu0 0
      %772 = vmatprep.subr.bf16.mxu0 0
      %773 = vmatpush1.bf16.msra.mxu0 0
      %774 = vmatprep.subr.bf16.mxu0 0
      %775 = vmatpush1.bf16.msra.mxu0 0
      %776 = vmatprep.subr.bf16.mxu0 0
      %777 = vmatpush1.bf16.msra.mxu0 0
      %778 = vmatprep.subr.bf16.mxu0 0
      %779 = vmatpush1.bf16.msra.mxu0 0
      %780 = vmatprep.subr.bf16.mxu0 0
      %781 = vmatpush1.bf16.msra.mxu0 0
      %782 = vmatprep.mubr.bf16.mxu0 0
      %783 = vmatmul.mubr.bf16.gmra.mrb[0].mxu0 %v742
      %v784 = vpop.f32.mrb[0].mxu0
      %v785 = vadd.f32 0.0, %v784
      %v786 = vpop.f32.mrb[0].mxu0
      %v787 = vadd.f32 0.0, %v786
      %v788 = vpop.f32.mrb[0].mxu0
      %v789 = vpop.f32.mrb[0].mxu0
      %790 = vdwg.mxu0
      %v791 = vadd.f32 %v713, %v785
      %v792 = vadd.f32 %v714, %v787
      %s793 = scalar_lea.vmem %s3, 14
      %v794 = vld [vmem:[%s793] sm:$0x3]
      %795 = vrot.lane.b32.xlu0 %v240, 95
      %v796 = vpop.permute.xlu0 %795
      %797 = vrot.lane.b32.xlu0 %v235, 95
      %v798 = vpop.permute.xlu0 %797
      %799 = vrot.lane.b32.xlu0 %v243, 95
      %v800 = vpop.permute.xlu0 %799
      %vm801 = vcmask 777216
      %v802 = vsel %vm801, %v796, %v798
      %v803 = vsel %vm801, %v798, %v800
      %v805 = vsel %vm298, %v794, 0
      %v808 = vsel %vm302, %v802, 0
      %v811 = vsel %vm302, %v803, 0
      %813 = vmatprep.subr.bf16.mxu0 %v811
      %814 = vmatpush1.bf16.msra.mxu0 %v808
      %815 = vmatprep.subr.bf16.mxu0 0
      %816 = vmatpush1.bf16.msra.mxu0 0
      %817 = vmatprep.subr.bf16.mxu0 0
      %818 = vmatpush1.bf16.msra.mxu0 0
      %819 = vmatprep.subr.bf16.mxu0 0
      %820 = vmatpush1.bf16.msra.mxu0 0
      %821 = vmatprep.subr.bf16.mxu0 0
      %822 = vmatpush1.bf16.msra.mxu0 0
      %823 = vmatprep.subr.bf16.mxu0 0
      %824 = vmatpush1.bf16.msra.mxu0 0
      %825 = vmatprep.subr.bf16.mxu0 0
      %826 = vmatpush1.bf16.msra.mxu0 0
      %827 = vmatprep.subr.bf16.mxu0 0
      %828 = vmatpush1.bf16.msra.mxu0 0
      %829 = vmatprep.subr.bf16.mxu0 0
      %830 = vmatpush1.bf16.msra.mxu0 0
      %831 = vmatprep.subr.bf16.mxu0 0
      %832 = vmatpush1.bf16.msra.mxu0 0
      %833 = vmatprep.subr.bf16.mxu0 0
      %834 = vmatpush1.bf16.msra.mxu0 0
      %835 = vmatprep.subr.bf16.mxu0 0
      %836 = vmatpush1.bf16.msra.mxu0 0
      %837 = vmatprep.subr.bf16.mxu0 0
      %838 = vmatpush1.bf16.msra.mxu0 0
      %839 = vmatprep.subr.bf16.mxu0 0
      %840 = vmatpush1.bf16.msra.mxu0 0
      %841 = vmatprep.subr.bf16.mxu0 0
      %842 = vmatpush1.bf16.msra.mxu0 0
      %843 = vmatprep.subr.bf16.mxu0 0
      %844 = vmatpush1.bf16.msra.mxu0 0
      %845 = vmatprep.mubr.bf16.mxu0 0
      %846 = vmatmul.mubr.bf16.gmra.mrb[0].mxu0 %v805
      %v847 = vpop.f32.mrb[0].mxu0
      %v848 = vadd.f32 0.0, %v847
      %v849 = vpop.f32.mrb[0].mxu0
      %v850 = vadd.f32 0.0, %v849
      %v851 = vpop.f32.mrb[0].mxu0
      %v852 = vpop.f32.mrb[0].mxu0
      %853 = vdwg.mxu0
      %v854 = vadd.f32 %v791, %v848
      %v855 = vadd.f32 %v792, %v850
      %856 = vrot.lane.b32.xlu0 %v406, 34
      %v857 = vpop.permute.xlu0 %856
      %858 = vrot.lane.b32.xlu0 %v413, 34
      %v859 = vpop.permute.xlu0 %858
      %vm860 = vcmask 277504
      %v861 = vsel %vm860, %v857, %v859
      %v865 = vmul.bf16 %v240, %v857
      %v866 = vmul.bf16 %v235, %v861
      %v867 = vmul.bf16 %v243, %v859
      %s868 = scalar_lea.vmem %s3, 16
      %v869 = vld [vmem:[%s868] sm:$0x3]
      %873 = vrot.lane.b32.xlu0 %v865, 94
      %v874 = vpop.permute.xlu0 %873
      %875 = vrot.lane.b32.xlu0 %v866, 94
      %v876 = vpop.permute.xlu0 %875
      %877 = vrot.lane.b32.xlu0 %v867, 94
      %v878 = vpop.permute.xlu0 %877
      %vm879 = vcmask 769024
      %v880 = vsel %vm879, %v874, %v876
      %v881 = vsel %vm879, %v876, %v878
      %v883 = vsel %vm298, %v869, 0
      %v886 = vsel %vm302, %v880, 0
      %v889 = vsel %vm302, %v881, 0
      %891 = vmatprep.subr.bf16.mxu0 %v889
      %892 = vmatpush1.bf16.msra.mxu0 %v886
      %893 = vmatprep.subr.bf16.mxu0 0
      %894 = vmatpush1.bf16.msra.mxu0 0
      %895 = vmatprep.subr.bf16.mxu0 0
      %896 = vmatpush1.bf16.msra.mxu0 0
      %897 = vmatprep.subr.bf16.mxu0 0
      %898 = vmatpush1.bf16.msra.mxu0 0
      %899 = vmatprep.subr.bf16.mxu0 0
      %900 = vmatpush1.bf16.msra.mxu0 0
      %901 = vmatprep.subr.bf16.mxu0 0
      %902 = vmatpush1.bf16.msra.mxu0 0
      %903 = vmatprep.subr.bf16.mxu0 0
      %904 = vmatpush1.bf16.msra.mxu0 0
      %905 = vmatprep.subr.bf16.mxu0 0
      %906 = vmatpush1.bf16.msra.mxu0 0
      %907 = vmatprep.subr.bf16.mxu0 0
      %908 = vmatpush1.bf16.msra.mxu0 0
      %909 = vmatprep.subr.bf16.mxu0 0
      %910 = vmatpush1.bf16.msra.mxu0 0
      %911 = vmatprep.subr.bf16.mxu0 0
      %912 = vmatpush1.bf16.msra.mxu0 0
      %913 = vmatprep.subr.bf16.mxu0 0
      %914 = vmatpush1.bf16.msra.mxu0 0
      %915 = vmatprep.subr.bf16.mxu0 0
      %916 = vmatpush1.bf16.msra.mxu0 0
      %917 = vmatprep.subr.bf16.mxu0 0
      %918 = vmatpush1.bf16.msra.mxu0 0
      %919 = vmatprep.subr.bf16.mxu0 0
      %920 = vmatpush1.bf16.msra.mxu0 0
      %921 = vmatprep.subr.bf16.mxu0 0
      %922 = vmatpush1.bf16.msra.mxu0 0
      %923 = vmatprep.mubr.bf16.mxu0 0
      %924 = vmatmul.mubr.bf16.gmra.mrb[0].mxu0 %v883
      %v925 = vpop.f32.mrb[0].mxu0
      %v926 = vadd.f32 0.0, %v925
      %v927 = vpop.f32.mrb[0].mxu0
      %v928 = vadd.f32 0.0, %v927
      %v929 = vpop.f32.mrb[0].mxu0
      %v930 = vpop.f32.mrb[0].mxu0
      %931 = vdwg.mxu0
      %v932 = vadd.f32 %v854, %v926
      %v933 = vadd.f32 %v855, %v928
      %v934 = vld [vmem:[%s212] sm:$0xff]
      %v936 = vcombine.high %v934, %v934
      %v938 = vadd.f32 %v932, %v934
      %v939 = vadd.f32 %v933, %v936
      %v942 = vcombine.low %v938, %v939
      %944 = vst [vmem:[%s217] sm:$0xff] %v942
      %p945 = scmp.lt.s32.totalorder %s15, 1
      %s946 = scalar_select %p945, %s15, 1
      %s947 = smul.addr %s946, 2
      %s948 = smul.addr %s947, 4
      %s949 = scalar_lea.vmem %s4, %s948
      // Predicated region
      $region37: #{rgcab_forward.5} parent=35 // pred_check
        %p950 = pneg %p127
      $region38: #{rgcab_forward.5} parent=35 // pred_check_branch
        %952 = sbr.rel (%p950) target = $region40
      $region39: #{rgcab_forward.5} parent=35 // pred_region
        _
      $region40: #{rgcab_forward.5} parent=35 // pred_fallthru
        _
    $region36: #{rgcab_forward.5} parent=5 // pred_fallthru
      _
    %p953 = scmp.le.s32.totalorder 2, %s10
    // Predicated region
    $region41: #{rgcab_forward.5} parent=5 // pred_check
      %p954 = pneg %p953
    $region42: #{rgcab_forward.5} parent=5 // pred_check_branch
      %956 = sbr.rel (%p954) target = $region44
    $region43: #{rgcab_forward.5} parent=5 // pred_region
      %s957 = ssub.s32 %s10, 2
      // Predicated region
      $region45: #{rgcab_forward.5} parent=43 // pred_check
        %p958 = pneg %p133
      $region46: #{rgcab_forward.5} parent=43 // pred_check_branch
        %960 = sbr.rel (%p958) target = $region48
      $region47: #{rgcab_forward.5} parent=43 // pred_region
        %p961 = scmp.lt.s32.totalorder %s16, 1
        %s962 = scalar_select %p961, %s16, 1
        %s963 = smul.addr %s962, 2
        %s964 = smul.addr %s963, 4
        %s965 = scalar_lea.vmem %s4, %s964
      $region48: #{rgcab_forward.5} parent=43 // pred_fallthru
        _
    $region44: #{rgcab_forward.5} parent=5 // pred_fallthru
      _
  $region6: #{rgcab_forward.5} parent=0 // loop_footer
    %s14 = sadd.s32 1, %s10
  $region7: #{rgcab_forward.5} parent=0 // loop_footer_branch
    %9 = sbr.rel target = $region3
  $region8: #{rgcab_forward.5} parent=0 // loop_exit
    _

// kernel: rgcab_forward.3
$region0: #{rgcab_forward.3}
  #allocation0 [shape = 'u32[]', space=smem, size = 0x4, offset = 0x4, fixed_abs, tag = 'smem constant byte address 0x4 - core index']
  #allocation1 [shape = 'u32[144,128]{1,0:T(1,128)}', space=vmem, size = 0x12000, scoped, tag = 'internal scratch']
  %s0 = inlined_call_operand.vmem [shape: bf16[2,4,256], index: 0, kind: input, shape index: {}, may-alias: {0,8}]
  %s1 = inlined_call_operand.vmem [shape: bf16[2,256], index: 1, kind: input, shape index: {}]
  %s2 = inlined_call_operand.vmem [shape: bf16[9,4,4], index: 2, kind: input, shape index: {}]
  %s3 = inlined_call_operand.vmem [shape: bf16[9,4,4], index: 3, kind: input, shape index: {}]
  %s4 = inlined_call_operand.vmem [shape: f32[4,1], index: 4, kind: input, shape index: {}]
  %s5 = inlined_call_operand.vmem [shape: f32[4,4], index: 5, kind: input, shape index: {}]
  %s6 = inlined_call_operand.vmem [shape: f32[4,4], index: 6, kind: input, shape index: {}]
  %s7 = inlined_call_operand.vmem [shape: bf16[4,4], index: 7, kind: input, shape index: {}]
  %s8 = inlined_call_operand.vmem [shape: bf16[2,4,256], index: 8, kind: output, shape index: {}, may-alias: {0,8}]
  %s9 = sld [smem:[#allocation0]]
  $region65: #{rgcab_forward.3} parent=0
    _
  %s11 = ssub.s32 1, %s9
  %s12 = scalar_select 0, %s11, %s9
  loop: start=0, step=1, limit=4
  $region2: #{rgcab_forward.3} parent=0 // loop_pre_header
    _
  $region3: #{rgcab_forward.3} parent=0 // loop_header
    %s14 = sphi 0, %s18
    %p15 = scmp.ge.s32.totalorder %s14, 4
    %s24 = sphi 0, %s26
    %s27 = sphi 0, %s24
    %s28 = sphi 0, %s27
    %s44 = sphi 0, %s28
    %s48 = sphi 0, %s48
    %s50 = sphi 0, %s48
    %s51 = sphi 0, %s50
    %s65 = sphi 0, %s51
    %s69 = sphi 0, %s69
    %s71 = sphi 0, %s69
    %s72 = sphi 0, %s71
    %s86 = sphi 0, %s72
    %s90 = sphi 0, %s90
    %s92 = sphi 0, %s90
    %s93 = sphi 0, %s92
    %s107 = sphi 0, %s93
    %s111 = sphi 0, %s111
    %s113 = sphi 0, %s111
    %s114 = sphi 0, %s113
    %s128 = sphi 0, %s114
    %s132 = sphi 0, %s132
    %s134 = sphi 0, %s132
    %s135 = sphi 0, %s134
    %s149 = sphi 0, %s135
    %s153 = sphi 0, %s153
    %s155 = sphi 0, %s153
    %s156 = sphi 0, %s155
    %s170 = sphi 0, %s156
    %s174 = sphi 0, %s174
    %s176 = sphi 0, %s174
    %s177 = sphi 0, %s176
    %s191 = sphi 0, %s177
    %s197 = sphi 0, %s199
    %s200 = sphi 0, %s197
    %s201 = sphi 0, %s200
    %s217 = sphi 0, %s201
  $region4: #{rgcab_forward.3} parent=0 // loop_header_branch
    %17 = sbr.rel (%p15) target = $region8
  $region5: #{rgcab_forward.3} parent=0 // loop_body
    %s19 = ssub.s32 %s14, 1
    %s20 = ssub.s32 %s14, 2
    %s21 = sadd.s32 %s14, 1
    %s22 = ssub.s32 %s14, %s21
    %p23 = scmp.eq.s32.totalorder %s22, 0
    %s25 = sadd.s32 %s24, 1
    %s26 = scalar_select %p23, %s24, %s25
    %p29 = pneg %p23
    %p30 = scmp.eq.s32.totalorder %s14, 1
    %p31 = por %p29, %p30
    %p32 = scmp.ne.s32.totalorder %s24, %s27
    %p33 = scmp.eq.s32.totalorder %s14, 0
    %p34 = por %p32, %p33
    %p35 = scmp.ne.s32.totalorder %s24, %s27
    %p36 = scmp.eq.s32.totalorder %s19, 1
    %p37 = por %p35, %p36
    %p38 = scmp.ne.s32.totalorder %s27, %s28
    %p39 = scmp.eq.s32.totalorder %s19, 0
    %p40 = por %p38, %p39
    %p41 = scmp.ne.s32.totalorder %s27, %s28
    %p42 = scmp.eq.s32.totalorder %s20, 1
    %p43 = por %p41, %p42
    %p45 = scmp.ne.s32.totalorder %s28, %s44
    %p46 = scmp.eq.s32.totalorder %s20, 0
    %p47 = por %p45, %p46
    %s49 = sadd.s32 %s48, 1
    %p52 = scmp.eq.s32.totalorder %s14, 1
    %p53 = scmp.ne.s32.totalorder %s48, %s50
    %p54 = scmp.eq.s32.totalorder %s14, 0
    %p55 = por %p53, %p54
    %p56 = scmp.ne.s32.totalorder %s48, %s50
    %p57 = scmp.eq.s32.totalorder %s19, 1
    %p58 = por %p56, %p57
    %p59 = scmp.ne.s32.totalorder %s50, %s51
    %p60 = scmp.eq.s32.totalorder %s19, 0
    %p61 = por %p59, %p60
    %p62 = scmp.ne.s32.totalorder %s50, %s51
    %p63 = scmp.eq.s32.totalorder %s20, 1
    %p64 = por %p62, %p63
    %p66 = scmp.ne.s32.totalorder %s51, %s65
    %p67 = scmp.eq.s32.totalorder %s20, 0
    %p68 = por %p66, %p67
    %s70 = sadd.s32 %s69, 1
    %p73 = scmp.eq.s32.totalorder %s14, 1
    %p74 = scmp.ne.s32.totalorder %s69, %s71
    %p75 = scmp.eq.s32.totalorder %s14, 0
    %p76 = por %p74, %p75
    %p77 = scmp.ne.s32.totalorder %s69, %s71
    %p78 = scmp.eq.s32.totalorder %s19, 1
    %p79 = por %p77, %p78
    %p80 = scmp.ne.s32.totalorder %s71, %s72
    %p81 = scmp.eq.s32.totalorder %s19, 0
    %p82 = por %p80, %p81
    %p83 = scmp.ne.s32.totalorder %s71, %s72
    %p84 = scmp.eq.s32.totalorder %s20, 1
    %p85 = por %p83, %p84
    %p87 = scmp.ne.s32.totalorder %s72, %s86
    %p88 = scmp.eq.s32.totalorder %s20, 0
    %p89 = por %p87, %p88
    %s91 = sadd.s32 %s90, 1
    %p94 = scmp.eq.s32.totalorder %s14, 1
    %p95 = scmp.ne.s32.totalorder %s90, %s92
    %p96 = scmp.eq.s32.totalorder %s14, 0
    %p97 = por %p95, %p96
    %p98 = scmp.ne.s32.totalorder %s90, %s92
    %p99 = scmp.eq.s32.totalorder %s19, 1
    %p100 = por %p98, %p99
    %p101 = scmp.ne.s32.totalorder %s92, %s93
    %p102 = scmp.eq.s32.totalorder %s19, 0
    %p103 = por %p101, %p102
    %p104 = scmp.ne.s32.totalorder %s92, %s93
    %p105 = scmp.eq.s32.totalorder %s20, 1
    %p106 = por %p104, %p105
    %p108 = scmp.ne.s32.totalorder %s93, %s107
    %p109 = scmp.eq.s32.totalorder %s20, 0
    %p110 = por %p108, %p109
    %s112 = sadd.s32 %s111, 1
    %p115 = scmp.eq.s32.totalorder %s14, 1
    %p116 = scmp.ne.s32.totalorder %s111, %s113
    %p117 = scmp.eq.s32.totalorder %s14, 0
    %p118 = por %p116, %p117
    %p119 = scmp.ne.s32.totalorder %s111, %s113
    %p120 = scmp.eq.s32.totalorder %s19, 1
    %p121 = por %p119, %p120
    %p122 = scmp.ne.s32.totalorder %s113, %s114
    %p123 = scmp.eq.s32.totalorder %s19, 0
    %p124 = por %p122, %p123
    %p125 = scmp.ne.s32.totalorder %s113, %s114
    %p126 = scmp.eq.s32.totalorder %s20, 1
    %p127 = por %p125, %p126
    %p129 = scmp.ne.s32.totalorder %s114, %s128
    %p130 = scmp.eq.s32.totalorder %s20, 0
    %p131 = por %p129, %p130
    %s133 = sadd.s32 %s132, 1
    %p136 = scmp.eq.s32.totalorder %s14, 1
    %p137 = scmp.ne.s32.totalorder %s132, %s134
    %p138 = scmp.eq.s32.totalorder %s14, 0
    %p139 = por %p137, %p138
    %p140 = scmp.ne.s32.totalorder %s132, %s134
    %p141 = scmp.eq.s32.totalorder %s19, 1
    %p142 = por %p140, %p141
    %p143 = scmp.ne.s32.totalorder %s134, %s135
    %p144 = scmp.eq.s32.totalorder %s19, 0
    %p145 = por %p143, %p144
    %p146 = scmp.ne.s32.totalorder %s134, %s135
    %p147 = scmp.eq.s32.totalorder %s20, 1
    %p148 = por %p146, %p147
    %p150 = scmp.ne.s32.totalorder %s135, %s149
    %p151 = scmp.eq.s32.totalorder %s20, 0
    %p152 = por %p150, %p151
    %s154 = sadd.s32 %s153, 1
    %p157 = scmp.eq.s32.totalorder %s14, 1
    %p158 = scmp.ne.s32.totalorder %s153, %s155
    %p159 = scmp.eq.s32.totalorder %s14, 0
    %p160 = por %p158, %p159
    %p161 = scmp.ne.s32.totalorder %s153, %s155
    %p162 = scmp.eq.s32.totalorder %s19, 1
    %p163 = por %p161, %p162
    %p164 = scmp.ne.s32.totalorder %s155, %s156
    %p165 = scmp.eq.s32.totalorder %s19, 0
    %p166 = por %p164, %p165
    %p167 = scmp.ne.s32.totalorder %s155, %s156
    %p168 = scmp.eq.s32.totalorder %s20, 1
    %p169 = por %p167, %p168
    %p171 = scmp.ne.s32.totalorder %s156, %s170
    %p172 = scmp.eq.s32.totalorder %s20, 0
    %p173 = por %p171, %p172
    %s175 = sadd.s32 %s174, 1
    %p178 = scmp.eq.s32.totalorder %s14, 1
    %p179 = scmp.ne.s32.totalorder %s174, %s176
    %p180 = scmp.eq.s32.totalorder %s14, 0
    %p181 = por %p179, %p180
    %p182 = scmp.ne.s32.totalorder %s174, %s176
    %p183 = scmp.eq.s32.totalorder %s19, 1
    %p184 = por %p182, %p183
    %p185 = scmp.ne.s32.totalorder %s176, %s177
    %p186 = scmp.eq.s32.totalorder %s19, 0
    %p187 = por %p185, %p186
    %p188 = scmp.ne.s32.totalorder %s176, %s177
    %p189 = scmp.eq.s32.totalorder %s20, 1
    %p190 = por %p188, %p189
    %p192 = scmp.ne.s32.totalorder %s177, %s191
    %p193 = scmp.eq.s32.totalorder %s20, 0
    %p194 = por %p192, %p193
    %s195 = ssub.s32 %s14, %s21
    %p196 = scmp.eq.s32.totalorder %s195, 0
    %s198 = sadd.s32 %s197, 1
    %s199 = scalar_select %p196, %s197, %s198
    %p202 = pneg %p196
    %p203 = scmp.eq.s32.totalorder %s14, 1
    %p204 = por %p202, %p203
    %p205 = scmp.ne.s32.totalorder %s197, %s200
    %p206 = scmp.eq.s32.totalorder %s14, 0
    %p207 = por %p205, %p206
    %p208 = scmp.ne.s32.totalorder %s197, %s200
    %p209 = scmp.eq.s32.totalorder %s19, 1
    %p210 = por %p208, %p209
    %p211 = scmp.ne.s32.totalorder %s200, %s201
    %p212 = scmp.eq.s32.totalorder %s19, 0
    %p213 = por %p211, %p212
    %p214 = scmp.ne.s32.totalorder %s200, %s201
    %p215 = scmp.eq.s32.totalorder %s20, 1
    %p216 = por %p214, %p215
    %p218 = scmp.ne.s32.totalorder %s201, %s217
    %p219 = scmp.eq.s32.totalorder %s20, 0
    %p220 = por %p218, %p219
    %p221 = scmp.le.s32.totalorder 1, %s14
    %p222 = scmp.lt.s32.totalorder %s14, 3
    %p223 = pnand %p221, %p222
    %p224 = pneg %p223
    // Predicated region
    $region9: #{rgcab_forward.3} parent=5 // pred_check
      _
    $region10: #{rgcab_forward.3} parent=5 // pred_check_branch
      %226 = sbr.rel (%p223) target = $region12
    $region11: #{rgcab_forward.3} parent=5 // pred_region
      %s227 = ssub.s32 %s14, 1
      // Predicated region
      $region13: #{rgcab_forward.3} parent=11 // pred_check
        %p228 = pneg %p61
      $region14: #{rgcab_forward.3} parent=11 // pred_check_branch
        %230 = sbr.rel (%p228) target = $region16
      $region15: #{rgcab_forward.3} parent=11 // pred_region
        _
      $region16: #{rgcab_forward.3} parent=11 // pred_fallthru
        _
      // Predicated region
      $region17: #{rgcab_forward.3} parent=11 // pred_check
        %p231 = pneg %p82
      $region18: #{rgcab_forward.3} parent=11 // pred_check_branch
        %233 = sbr.rel (%p231) target = $region20
      $region19: #{rgcab_forward.3} parent=11 // pred_region
        _
      $region20: #{rgcab_forward.3} parent=11 // pred_fallthru
        _
      // Predicated region
      $region21: #{rgcab_forward.3} parent=11 // pred_check
        %p234 = pneg %p103
      $region22: #{rgcab_forward.3} parent=11 // pred_check_branch
        %236 = sbr.rel (%p234) target = $region24
      $region23: #{rgcab_forward.3} parent=11 // pred_region
        _
      $region24: #{rgcab_forward.3} parent=11 // pred_fallthru
        _
      // Predicated region
      $region25: #{rgcab_forward.3} parent=11 // pred_check
        %p237 = pneg %p124
      $region26: #{rgcab_forward.3} parent=11 // pred_check_branch
        %239 = sbr.rel (%p237) target = $region28
      $region27: #{rgcab_forward.3} parent=11 // pred_region
        _
      $region28: #{rgcab_forward.3} parent=11 // pred_fallthru
        _
      // Predicated region
      $region29: #{rgcab_forward.3} parent=11 // pred_check
        %p240 = pneg %p145
      $region30: #{rgcab_forward.3} parent=11 // pred_check_branch
        %242 = sbr.rel (%p240) target = $region32
      $region31: #{rgcab_forward.3} parent=11 // pred_region
        _
      $region32: #{rgcab_forward.3} parent=11 // pred_fallthru
        _
      // Predicated region
      $region33: #{rgcab_forward.3} parent=11 // pred_check
        %p243 = pneg %p166
      $region34: #{rgcab_forward.3} parent=11 // pred_check_branch
        %245 = sbr.rel (%p243) target = $region36
      $region35: #{rgcab_forward.3} parent=11 // pred_region
        _
      $region36: #{rgcab_forward.3} parent=11 // pred_fallthru
        _
      // Predicated region
      $region37: #{rgcab_forward.3} parent=11 // pred_check
        %p246 = pneg %p187
      $region38: #{rgcab_forward.3} parent=11 // pred_check_branch
        %248 = sbr.rel (%p246) target = $region40
      $region39: #{rgcab_forward.3} parent=11 // pred_region
        _
      $region40: #{rgcab_forward.3} parent=11 // pred_fallthru
        _
    $region12: #{rgcab_forward.3} parent=5 // pred_fallthru
      _
    %p249 = scmp.lt.s32.totalorder %s14, 2
    // Predicated region
    $region41: #{rgcab_forward.3} parent=5 // pred_check
      %p250 = pneg %p249
    $region42: #{rgcab_forward.3} parent=5 // pred_check_branch
      %252 = sbr.rel (%p250) target = $region44
    $region43: #{rgcab_forward.3} parent=5 // pred_region
      // Predicated region
      $region45: #{rgcab_forward.3} parent=43 // pred_check
        %p253 = pneg %p34
      $region46: #{rgcab_forward.3} parent=43 // pred_check_branch
        %255 = sbr.rel (%p253) target = $region48
      $region47: #{rgcab_forward.3} parent=43 // pred_region
        %p256 = scmp.lt.s32.totalorder %s14, 1
        %s257 = scalar_select %p256, %s14, 1
        %s258 = smul.addr %s257, 2
        %s259 = smul.addr %s258, 2
        %s260 = scalar_lea.vmem %s0, %s259
      $region48: #{rgcab_forward.3} parent=43 // pred_fallthru
        _
    $region44: #{rgcab_forward.3} parent=5 // pred_fallthru
      _
    %p261 = scmp.le.s32.totalorder 1, %s14
    %p262 = scmp.lt.s32.totalorder %s14, 3
    %p263 = pnand %p261, %p262
    %p264 = pneg %p263
    // Predicated region
    $region49: #{rgcab_forward.3} parent=5 // pred_check
      _
    $region50: #{rgcab_forward.3} parent=5 // pred_check_branch
      %266 = sbr.rel (%p263) target = $region52
    $region51: #{rgcab_forward.3} parent=5 // pred_region
      %s267 = ssub.s32 %s14, 1
      %p268 = scmp.lt.s32.totalorder %s19, 1
      %s269 = scalar_select %p268, %s19, 1
      %s270 = smul.addr %s269, 2
      %s271 = smul.addr %s270, 2
      %s272 = scalar_lea.vmem %s0, %s271
      %p273 = pneg %p40
      %p274 = pneg %p37
      %p275 = pneg %p61
      %p276 = pneg %p58
      %p277 = pneg %p82
      %p278 = pneg %p79
      %p279 = pneg %p103
      %p280 = pneg %p100
      %p281 = pneg %p124
      %p282 = pneg %p121
      %p283 = pneg %p145
      %p284 = pneg %p142
      %p285 = pneg %p166
      %p286 = pneg %p163
      %p287 = pneg %p187
      %p288 = pneg %p184
      %p289 = pneg %p213
      %p290 = pneg %p210
      %p291 = scmp.lt.s32.totalorder %s19, 1
      %s292 = scalar_select %p291, %s19, 1
      %s293 = smul.addr %s292, 2
      %s294 = smul.addr %s293, 2
      %s295 = scalar_lea.vmem %s8, %s294
      %p296 = scmp.lt.s32.totalorder %s19, 1
      %s297 = scalar_select %p296, %s19, 1
      %s298 = smul.addr %s297, 2
      %s299 = smul.addr %s298, 2
      %s300 = scalar_lea.vmem %s0, %s299
      %p301 = scmp.lt.s32.totalorder %s19, 1
      %s302 = scalar_select %p301, %s19, 1
      %s303 = smul.addr %s302, 2
      %s304 = smul.addr %s303, 2
      %s305 = scalar_lea.vmem %s8, %s304
      %v307 = vld [vmem:[%s300] sm:$0xf]
      %v308 = vld [vmem:[%s1] sm:$0x3]
      %v311 = vunpack.c.l.s4 1983009808
      %v312 = vunpack.c.0.s8 %v311
      %v313 = vlaneseq
      %v314 = vshrl.u32 %v313, 7
      %v315 = vsub.s32 %v312, %v314
      %v316 = vrot.slane %v307, %v315
      %v317 = vcombine.high %v316, %v316
      %318 = vrot.lane.b32.xlu0 %v316, 17
      %v319 = vpop.permute.xlu0 %318
      %320 = vrot.lane.b32.xlu0 %v317, 17
      %v321 = vpop.permute.xlu0 %320
      %vm322 = vcmask 138240
      %v323 = vsel %vm322, %v319, %v321
      %vm325 = vcmask 138240
      %v328 = vsel %vm325, 0, %v319
      %v331 = vsel %vm325, %v321, 0
      %v335 = vunpack.c.l.s4 1966171168
      %v336 = vunpack.c.0.s8 %v335
      %v337 = vlaneseq
      %v338 = vshrl.u32 %v337, 7
      %v339 = vsub.s32 %v336, %v338
      %v340 = vrot.slane %v308, %v339
      %v341 = vcombine.high %v340, %v340
      %v343 = vunpack.c.l.s4 1966171168
      %v344 = vunpack.c.0.s8 %v343
      %v345 = vlaneseq
      %v346 = vshrl.u32 %v345, 7
      %v347 = vsub.s32 %v344, %v346
      %v348 = vrot.slane %v340, %v347
      %v350 = vunpack.c.l.s4 1966171168
      %v351 = vunpack.c.0.s8 %v350
      %v352 = vlaneseq
      %v353 = vshrl.u32 %v352, 7
      %v354 = vsub.s32 %v351, %v353
      %v355 = vrot.slane %v341, %v354
      %v357 = vpack.i.b16 %v348, %v348
      %v359 = vlaneseq
      %v360 = vshrl.u32 %v359, 7
      %v361 = vsub.s32 0, %v360
      %v362 = vrot.slane %v357, %v361
      %v364 = vpack.i.b16 %v355, %v355
      %v366 = vlaneseq
      %v367 = vshrl.u32 %v366, 7
      %v368 = vsub.s32 0, %v367
      %v369 = vrot.slane %v364, %v368
      %v370 = vmul.bf16 %v328, %v362
      %v371 = vmul.bf16 %v323, %v369
      %v372 = vld [vmem:[%s2] sm:$0x3]
      %s373 = scalar_lea.vmem %s2, 2
      %v374 = vld [vmem:[%s373] sm:$0x3]
      %377 = vrot.lane.b32.xlu0 %v328, 127
      %v378 = vpop.permute.xlu0 %377
      %379 = vrot.lane.b32.xlu0 %v323, 127
      %v380 = vpop.permute.xlu0 %379
      %381 = vrot.lane.b32.xlu0 %v331, 127
      %v382 = vpop.permute.xlu0 %381
      %vm383 = vcmask 1039360
      %v384 = vsel %vm383, %v378, %v380
      %v385 = vsel %vm383, %v380, %v382
      %vm386 = vcmask 31744
      %v388 = vsel %vm386, %v374, 0
      %vm390 = vcmask 1041408
      %v392 = vsel %vm390, %v384, 0
      %v395 = vsel %vm390, %v385, 0
      %397 = vmatprep.subr.bf16.mxu0 %v395
      %398 = vmatpush1.bf16.msra.mxu0 %v392
      %399 = vmatprep.subr.bf16.mxu0 0
      %400 = vmatpush1.bf16.msra.mxu0 0
      %401 = vmatprep.subr.bf16.mxu0 0
      %402 = vmatpush1.bf16.msra.mxu0 0
      %403 = vmatprep.subr.bf16.mxu0 0
      %404 = vmatpush1.bf16.msra.mxu0 0
      %405 = vmatprep.subr.bf16.mxu0 0
      %406 = vmatpush1.bf16.msra.mxu0 0
      %407 = vmatprep.subr.bf16.mxu0 0
      %408 = vmatpush1.bf16.msra.mxu0 0
      %409 = vmatprep.subr.bf16.mxu0 0
      %410 = vmatpush1.bf16.msra.mxu0 0
      %411 = vmatprep.subr.bf16.mxu0 0
      %412 = vmatpush1.bf16.msra.mxu0 0
      %413 = vmatprep.subr.bf16.mxu0 0
      %414 = vmatpush1.bf16.msra.mxu0 0
      %415 = vmatprep.subr.bf16.mxu0 0
      %416 = vmatpush1.bf16.msra.mxu0 0
      %417 = vmatprep.subr.bf16.mxu0 0
      %418 = vmatpush1.bf16.msra.mxu0 0
      %419 = vmatprep.subr.bf16.mxu0 0
      %420 = vmatpush1.bf16.msra.mxu0 0
      %421 = vmatprep.subr.bf16.mxu0 0
      %422 = vmatpush1.bf16.msra.mxu0 0
      %423 = vmatprep.subr.bf16.mxu0 0
      %424 = vmatpush1.bf16.msra.mxu0 0
      %425 = vmatprep.subr.bf16.mxu0 0
      %426 = vmatpush1.bf16.msra.mxu0 0
      %427 = vmatprep.subr.bf16.mxu0 0
      %428 = vmatpush1.bf16.msra.mxu0 0
      %429 = vmatprep.mubr.bf16.mxu0 0
      %430 = vmatmul.mubr.bf16.gmra.mrb[0].mxu0 %v388
      %v431 = vpop.f32.mrb[0].mxu0
      %v432 = vadd.f32 0.0, %v431
      %v433 = vpop.f32.mrb[0].mxu0
      %v434 = vadd.f32 0.0, %v433
      %v435 = vpop.f32.mrb[0].mxu0
      %v436 = vpop.f32.mrb[0].mxu0
      %437 = vdwg.mxu0
      %v439 = vsel %vm386, %v372, 0
      %v442 = vsel %vm390, %v370, 0
      %v445 = vsel %vm390, %v371, 0
      %447 = vmatprep.subr.bf16.mxu0 %v445
      %448 = vmatpush1.bf16.msra.mxu0 %v442
      %449 = vmatprep.subr.bf16.mxu0 0
      %450 = vmatpush1.bf16.msra.mxu0 0
      %451 = vmatprep.subr.bf16.mxu0 0
      %452 = vmatpush1.bf16.msra.mxu0 0
      %453 = vmatprep.subr.bf16.mxu0 0
      %454 = vmatpush1.bf16.msra.mxu0 0
      %455 = vmatprep.subr.bf16.mxu0 0
      %456 = vmatpush1.bf16.msra.mxu0 0
      %457 = vmatprep.subr.bf16.mxu0 0
      %458 = vmatpush1.bf16.msra.mxu0 0
      %459 = vmatprep.subr.bf16.mxu0 0
      %460 = vmatpush1.bf16.msra.mxu0 0
      %461 = vmatprep.subr.bf16.mxu0 0
      %462 = vmatpush1.bf16.msra.mxu0 0
      %463 = vmatprep.subr.bf16.mxu0 0
      %464 = vmatpush1.bf16.msra.mxu0 0
      %465 = vmatprep.subr.bf16.mxu0 0
      %466 = vmatpush1.bf16.msra.mxu0 0
      %467 = vmatprep.subr.bf16.mxu0 0
      %468 = vmatpush1.bf16.msra.mxu0 0
      %469 = vmatprep.subr.bf16.mxu0 0
      %470 = vmatpush1.bf16.msra.mxu0 0
      %471 = vmatprep.subr.bf16.mxu0 0
      %472 = vmatpush1.bf16.msra.mxu0 0
      %473 = vmatprep.subr.bf16.mxu0 0
      %474 = vmatpush1.bf16.msra.mxu0 0
      %475 = vmatprep.subr.bf16.mxu0 0
      %476 = vmatpush1.bf16.msra.mxu0 0
      %477 = vmatprep.subr.bf16.mxu0 0
      %478 = vmatpush1.bf16.msra.mxu0 0
      %479 = vmatprep.mubr.bf16.mxu0 0
      %480 = vmatmul.mubr.bf16.gmra.mrb[0].mxu0 %v439
      %v481 = vpop.f32.mrb[0].mxu0
      %v482 = vadd.f32 %v432, %v481
      %v483 = vpop.f32.mrb[0].mxu0
      %v484 = vadd.f32 %v434, %v483
      %v485 = vpop.f32.mrb[0].mxu0
      %v486 = vpop.f32.mrb[0].mxu0
      %487 = vdwg.mxu0
      %v488 = vshrl.u32 %v348, 16
      %v489 = vpack.i.b16 %v488, %v488
      %v491 = vlaneseq
      %v492 = vshrl.u32 %v491, 7
      %v493 = vsub.s32 0, %v492
      %v494 = vrot.slane %v489, %v493
      %v495 = vshrl.u32 %v355, 16
      %v496 = vpack.i.b16 %v495, %v495
      %v498 = vlaneseq
      %v499 = vshrl.u32 %v498, 7
      %v500 = vsub.s32 0, %v499
      %v501 = vrot.slane %v496, %v500
      %504 = vrot.lane.b32.xlu0 %v494, 2
      %v505 = vpop.permute.xlu0 %504
      %506 = vrot.lane.b32.xlu0 %v501, 2
      %v507 = vpop.permute.xlu0 %506
      %vm508 = vcmask 15360
      %v509 = vsel %vm508, %v505, %v507
      %v513 = vmul.bf16 %v328, %v505
      %v514 = vmul.bf16 %v323, %v509
      %v515 = vmul.bf16 %v331, %v507
      %s516 = scalar_lea.vmem %s2, 4
      %v517 = vld [vmem:[%s516] sm:$0x3]
      %521 = vrot.lane.b32.xlu0 %v513, 126
      %v522 = vpop.permute.xlu0 %521
      %523 = vrot.lane.b32.xlu0 %v514, 126
      %v524 = vpop.permute.xlu0 %523
      %525 = vrot.lane.b32.xlu0 %v515, 126
      %v526 = vpop.permute.xlu0 %525
      %vm527 = vcmask 1031168
      %v528 = vsel %vm527, %v522, %v524
      %v529 = vsel %vm527, %v524, %v526
      %v531 = vsel %vm386, %v517, 0
      %v534 = vsel %vm390, %v528, 0
      %v537 = vsel %vm390, %v529, 0
      %539 = vmatprep.subr.bf16.mxu0 %v537
      %540 = vmatpush1.bf16.msra.mxu0 %v534
      %541 = vmatprep.subr.bf16.mxu0 0
      %542 = vmatpush1.bf16.msra.mxu0 0
      %543 = vmatprep.subr.bf16.mxu0 0
      %544 = vmatpush1.bf16.msra.mxu0 0
      %545 = vmatprep.subr.bf16.mxu0 0
      %546 = vmatpush1.bf16.msra.mxu0 0
      %547 = vmatprep.subr.bf16.mxu0 0
      %548 = vmatpush1.bf16.msra.mxu0 0
      %549 = vmatprep.subr.bf16.mxu0 0
      %550 = vmatpush1.bf16.msra.mxu0 0
      %551 = vmatprep.subr.bf16.mxu0 0
      %552 = vmatpush1.bf16.msra.mxu0 0
      %553 = vmatprep.subr.bf16.mxu0 0
      %554 = vmatpush1.bf16.msra.mxu0 0
      %555 = vmatprep.subr.bf16.mxu0 0
      %556 = vmatpush1.bf16.msra.mxu0 0
      %557 = vmatprep.subr.bf16.mxu0 0
      %558 = vmatpush1.bf16.msra.mxu0 0
      %559 = vmatprep.subr.bf16.mxu0 0
      %560 = vmatpush1.bf16.msra.mxu0 0
      %561 = vmatprep.subr.bf16.mxu0 0
      %562 = vmatpush1.bf16.msra.mxu0 0
      %563 = vmatprep.subr.bf16.mxu0 0
      %564 = vmatpush1.bf16.msra.mxu0 0
      %565 = vmatprep.subr.bf16.mxu0 0
      %566 = vmatpush1.bf16.msra.mxu0 0
      %567 = vmatprep.subr.bf16.mxu0 0
      %568 = vmatpush1.bf16.msra.mxu0 0
      %569 = vmatprep.subr.bf16.mxu0 0
      %570 = vmatpush1.bf16.msra.mxu0 0
      %571 = vmatprep.mubr.bf16.mxu0 0
      %572 = vmatmul.mubr.bf16.gmra.mrb[0].mxu0 %v531
      %v573 = vpop.f32.mrb[0].mxu0
      %v574 = vadd.f32 0.0, %v573
      %v575 = vpop.f32.mrb[0].mxu0
      %v576 = vadd.f32 0.0, %v575
      %v577 = vpop.f32.mrb[0].mxu0
      %v578 = vpop.f32.mrb[0].mxu0
      %579 = vdwg.mxu0
      %v580 = vadd.f32 %v482, %v574
      %v581 = vadd.f32 %v484, %v576
      %584 = vrot.lane.b32.xlu0 %v362, 16
      %v585 = vpop.permute.xlu0 %584
      %586 = vrot.lane.b32.xlu0 %v369, 16
      %v587 = vpop.permute.xlu0 %586
      %vm588 = vcmask 130048
      %v589 = vsel %vm588, %v585, %v587
      %v593 = vmul.bf16 %v328, %v585
      %v594 = vmul.bf16 %v323, %v589
      %v595 = vmul.bf16 %v331, %v587
      %s596 = scalar_lea.vmem %s2, 6
      %v597 = vld [vmem:[%s596] sm:$0x3]
      %601 = vrot.lane.b32.xlu0 %v593, 112
      %v602 = vpop.permute.xlu0 %601
      %603 = vrot.lane.b32.xlu0 %v594, 112
      %v604 = vpop.permute.xlu0 %603
      %605 = vrot.lane.b32.xlu0 %v595, 112
      %v606 = vpop.permute.xlu0 %605
      %vm607 = vcmask 916480
      %v608 = vsel %vm607, %v602, %v604
      %v609 = vsel %vm607, %v604, %v606
      %v611 = vsel %vm386, %v597, 0
      %v614 = vsel %vm390, %v608, 0
      %v617 = vsel %vm390, %v609, 0
      %619 = vmatprep.subr.bf16.mxu0 %v617
      %620 = vmatpush1.bf16.msra.mxu0 %v614
      %621 = vmatprep.subr.bf16.mxu0 0
      %622 = vmatpush1.bf16.msra.mxu0 0
      %623 = vmatprep.subr.bf16.mxu0 0
      %624 = vmatpush1.bf16.msra.mxu0 0
      %625 = vmatprep.subr.bf16.mxu0 0
      %626 = vmatpush1.bf16.msra.mxu0 0
      %627 = vmatprep.subr.bf16.mxu0 0
      %628 = vmatpush1.bf16.msra.mxu0 0
      %629 = vmatprep.subr.bf16.mxu0 0
      %630 = vmatpush1.bf16.msra.mxu0 0
      %631 = vmatprep.subr.bf16.mxu0 0
      %632 = vmatpush1.bf16.msra.mxu0 0
      %633 = vmatprep.subr.bf16.mxu0 0
      %634 = vmatpush1.bf16.msra.mxu0 0
      %635 = vmatprep.subr.bf16.mxu0 0
      %636 = vmatpush1.bf16.msra.mxu0 0
      %637 = vmatprep.subr.bf16.mxu0 0
      %638 = vmatpush1.bf16.msra.mxu0 0
      %639 = vmatprep.subr.bf16.mxu0 0
      %640 = vmatpush1.bf16.msra.mxu0 0
      %641 = vmatprep.subr.bf16.mxu0 0
      %642 = vmatpush1.bf16.msra.mxu0 0
      %643 = vmatprep.subr.bf16.mxu0 0
      %644 = vmatpush1.bf16.msra.mxu0 0
      %645 = vmatprep.subr.bf16.mxu0 0
      %646 = vmatpush1.bf16.msra.mxu0 0
      %647 = vmatprep.subr.bf16.mxu0 0
      %648 = vmatpush1.bf16.msra.mxu0 0
      %649 = vmatprep.subr.bf16.mxu0 0
      %650 = vmatpush1.bf16.msra.mxu0 0
      %651 = vmatprep.mubr.bf16.mxu0 0
      %652 = vmatmul.mubr.bf16.gmra.mrb[0].mxu0 %v611
      %v653 = vpop.f32.mrb[0].mxu0
      %v654 = vadd.f32 0.0, %v653
      %v655 = vpop.f32.mrb[0].mxu0
      %v656 = vadd.f32 0.0, %v655
      %v657 = vpop.f32.mrb[0].mxu0
      %v658 = vpop.f32.mrb[0].mxu0
      %659 = vdwg.mxu0
      %v660 = vadd.f32 %v580, %v654
      %v661 = vadd.f32 %v581, %v656
      %s662 = scalar_lea.vmem %s2, 8
      %v663 = vld [vmem:[%s662] sm:$0x3]
      %664 = vrot.lane.b32.xlu0 %v328, 111
      %v665 = vpop.permute.xlu0 %664
      %666 = vrot.lane.b32.xlu0 %v323, 111
      %v667 = vpop.permute.xlu0 %666
      %668 = vrot.lane.b32.xlu0 %v331, 111
      %v669 = vpop.permute.xlu0 %668
      %vm670 = vcmask 908288
      %v671 = vsel %vm670, %v665, %v667
      %v672 = vsel %vm670, %v667, %v669
      %v674 = vsel %vm386, %v663, 0
      %v677 = vsel %vm390, %v671, 0
      %v680 = vsel %vm390, %v672, 0
      %682 = vmatprep.subr.bf16.mxu0 %v680
      %683 = vmatpush1.bf16.msra.mxu0 %v677
      %684 = vmatprep.subr.bf16.mxu0 0
      %685 = vmatpush1.bf16.msra.mxu0 0
      %686 = vmatprep.subr.bf16.mxu0 0
      %687 = vmatpush1.bf16.msra.mxu0 0
      %688 = vmatprep.subr.bf16.mxu0 0
      %689 = vmatpush1.bf16.msra.mxu0 0
      %690 = vmatprep.subr.bf16.mxu0 0
      %691 = vmatpush1.bf16.msra.mxu0 0
      %692 = vmatprep.subr.bf16.mxu0 0
      %693 = vmatpush1.bf16.msra.mxu0 0
      %694 = vmatprep.subr.bf16.mxu0 0
      %695 = vmatpush1.bf16.msra.mxu0 0
      %696 = vmatprep.subr.bf16.mxu0 0
      %697 = vmatpush1.bf16.msra.mxu0 0
      %698 = vmatprep.subr.bf16.mxu0 0
      %699 = vmatpush1.bf16.msra.mxu0 0
      %700 = vmatprep.subr.bf16.mxu0 0
      %701 = vmatpush1.bf16.msra.mxu0 0
      %702 = vmatprep.subr.bf16.mxu0 0
      %703 = vmatpush1.bf16.msra.mxu0 0
      %704 = vmatprep.subr.bf16.mxu0 0
      %705 = vmatpush1.bf16.msra.mxu0 0
      %706 = vmatprep.subr.bf16.mxu0 0
      %707 = vmatpush1.bf16.msra.mxu0 0
      %708 = vmatprep.subr.bf16.mxu0 0
      %709 = vmatpush1.bf16.msra.mxu0 0
      %710 = vmatprep.subr.bf16.mxu0 0
      %711 = vmatpush1.bf16.msra.mxu0 0
      %712 = vmatprep.subr.bf16.mxu0 0
      %713 = vmatpush1.bf16.msra.mxu0 0
      %714 = vmatprep.mubr.bf16.mxu0 0
      %715 = vmatmul.mubr.bf16.gmra.mrb[0].mxu0 %v674
      %v716 = vpop.f32.mrb[0].mxu0
      %v717 = vadd.f32 0.0, %v716
      %v718 = vpop.f32.mrb[0].mxu0
      %v719 = vadd.f32 0.0, %v718
      %v720 = vpop.f32.mrb[0].mxu0
      %v721 = vpop.f32.mrb[0].mxu0
      %722 = vdwg.mxu0
      %v723 = vadd.f32 %v660, %v717
      %v724 = vadd.f32 %v661, %v719
      %725 = vrot.lane.b32.xlu0 %v494, 18
      %v726 = vpop.permute.xlu0 %725
      %727 = vrot.lane.b32.xlu0 %v501, 18
      %v728 = vpop.permute.xlu0 %727
      %vm729 = vcmask 146432
      %v730 = vsel %vm729, %v726, %v728
      %v734 = vmul.bf16 %v328, %v726
      %v735 = vmul.bf16 %v323, %v730
      %v736 = vmul.bf16 %v331, %v728
      %s737 = scalar_lea.vmem %s2, 10
      %v738 = vld [vmem:[%s737] sm:$0x3]
      %742 = vrot.lane.b32.xlu0 %v734, 110
      %v743 = vpop.permute.xlu0 %742
      %744 = vrot.lane.b32.xlu0 %v735, 110
      %v745 = vpop.permute.xlu0 %744
      %746 = vrot.lane.b32.xlu0 %v736, 110
      %v747 = vpop.permute.xlu0 %746
      %vm748 = vcmask 900096
      %v749 = vsel %vm748, %v743, %v745
      %v750 = vsel %vm748, %v745, %v747
      %v752 = vsel %vm386, %v738, 0
      %v755 = vsel %vm390, %v749, 0
      %v758 = vsel %vm390, %v750, 0
      %760 = vmatprep.subr.bf16.mxu0 %v758
      %761 = vmatpush1.bf16.msra.mxu0 %v755
      %762 = vmatprep.subr.bf16.mxu0 0
      %763 = vmatpush1.bf16.msra.mxu0 0
      %764 = vmatprep.subr.bf16.mxu0 0
      %765 = vmatpush1.bf16.msra.mxu0 0
      %766 = vmatprep.subr.bf16.mxu0 0
      %767 = vmatpush1.bf16.msra.mxu0 0
      %768 = vmatprep.subr.bf16.mxu0 0
      %769 = vmatpush1.bf16.msra.mxu0 0
      %770 = vmatprep.subr.bf16.mxu0 0
      %771 = vmatpush1.bf16.msra.mxu0 0
      %772 = vmatprep.subr.bf16.mxu0 0
      %773 = vmatpush1.bf16.msra.mxu0 0
      %774 = vmatprep.subr.bf16.mxu0 0
      %775 = vmatpush1.bf16.msra.mxu0 0
      %776 = vmatprep.subr.bf16.mxu0 0
      %777 = vmatpush1.bf16.msra.mxu0 0
      %778 = vmatprep.subr.bf16.mxu0 0
      %779 = vmatpush1.bf16.msra.mxu0 0
      %780 = vmatprep.subr.bf16.mxu0 0
      %781 = vmatpush1.bf16.msra.mxu0 0
      %782 = vmatprep.subr.bf16.mxu0 0
      %783 = vmatpush1.bf16.msra.mxu0 0
      %784 = vmatprep.subr.bf16.mxu0 0
      %785 = vmatpush1.bf16.msra.mxu0 0
      %786 = vmatprep.subr.bf16.mxu0 0
      %787 = vmatpush1.bf16.msra.mxu0 0
      %788 = vmatprep.subr.bf16.mxu0 0
      %789 = vmatpush1.bf16.msra.mxu0 0
      %790 = vmatprep.subr.bf16.mxu0 0
      %791 = vmatpush1.bf16.msra.mxu0 0
      %792 = vmatprep.mubr.bf16.mxu0 0
      %793 = vmatmul.mubr.bf16.gmra.mrb[0].mxu0 %v752
      %v794 = vpop.f32.mrb[0].mxu0
      %v795 = vadd.f32 0.0, %v794
      %v796 = vpop.f32.mrb[0].mxu0
      %v797 = vadd.f32 0.0, %v796
      %v798 = vpop.f32.mrb[0].mxu0
      %v799 = vpop.f32.mrb[0].mxu0
      %800 = vdwg.mxu0
      %v801 = vadd.f32 %v723, %v795
      %v802 = vadd.f32 %v724, %v797
      %803 = vrot.lane.b32.xlu0 %v362, 32
      %v804 = vpop.permute.xlu0 %803
      %805 = vrot.lane.b32.xlu0 %v369, 32
      %v806 = vpop.permute.xlu0 %805
      %vm807 = vcmask 261120
      %v808 = vsel %vm807, %v804, %v806
      %v812 = vmul.bf16 %v328, %v804
      %v813 = vmul.bf16 %v323, %v808
      %v814 = vmul.bf16 %v331, %v806
      %s815 = scalar_lea.vmem %s2, 12
      %v816 = vld [vmem:[%s815] sm:$0x3]
      %820 = vrot.lane.b32.xlu0 %v812, 96
      %v821 = vpop.permute.xlu0 %820
      %822 = vrot.lane.b32.xlu0 %v813, 96
      %v823 = vpop.permute.xlu0 %822
      %824 = vrot.lane.b32.xlu0 %v814, 96
      %v825 = vpop.permute.xlu0 %824
      %vm826 = vcmask 785408
      %v827 = vsel %vm826, %v821, %v823
      %v828 = vsel %vm826, %v823, %v825
      %v830 = vsel %vm386, %v816, 0
      %v833 = vsel %vm390, %v827, 0
      %v836 = vsel %vm390, %v828, 0
      %838 = vmatprep.subr.bf16.mxu0 %v836
      %839 = vmatpush1.bf16.msra.mxu0 %v833
      %840 = vmatprep.subr.bf16.mxu0 0
      %841 = vmatpush1.bf16.msra.mxu0 0
      %842 = vmatprep.subr.bf16.mxu0 0
      %843 = vmatpush1.bf16.msra.mxu0 0
      %844 = vmatprep.subr.bf16.mxu0 0
      %845 = vmatpush1.bf16.msra.mxu0 0
      %846 = vmatprep.subr.bf16.mxu0 0
      %847 = vmatpush1.bf16.msra.mxu0 0
      %848 = vmatprep.subr.bf16.mxu0 0
      %849 = vmatpush1.bf16.msra.mxu0 0
      %850 = vmatprep.subr.bf16.mxu0 0
      %851 = vmatpush1.bf16.msra.mxu0 0
      %852 = vmatprep.subr.bf16.mxu0 0
      %853 = vmatpush1.bf16.msra.mxu0 0
      %854 = vmatprep.subr.bf16.mxu0 0
      %855 = vmatpush1.bf16.msra.mxu0 0
      %856 = vmatprep.subr.bf16.mxu0 0
      %857 = vmatpush1.bf16.msra.mxu0 0
      %858 = vmatprep.subr.bf16.mxu0 0
      %859 = vmatpush1.bf16.msra.mxu0 0
      %860 = vmatprep.subr.bf16.mxu0 0
      %861 = vmatpush1.bf16.msra.mxu0 0
      %862 = vmatprep.subr.bf16.mxu0 0
      %863 = vmatpush1.bf16.msra.mxu0 0
      %864 = vmatprep.subr.bf16.mxu0 0
      %865 = vmatpush1.bf16.msra.mxu0 0
      %866 = vmatprep.subr.bf16.mxu0 0
      %867 = vmatpush1.bf16.msra.mxu0 0
      %868 = vmatprep.subr.bf16.mxu0 0
      %869 = vmatpush1.bf16.msra.mxu0 0
      %870 = vmatprep.mubr.bf16.mxu0 0
      %871 = vmatmul.mubr.bf16.gmra.mrb[0].mxu0 %v830
      %v872 = vpop.f32.mrb[0].mxu0
      %v873 = vadd.f32 0.0, %v872
      %v874 = vpop.f32.mrb[0].mxu0
      %v875 = vadd.f32 0.0, %v874
      %v876 = vpop.f32.mrb[0].mxu0
      %v877 = vpop.f32.mrb[0].mxu0
      %878 = vdwg.mxu0
      %v879 = vadd.f32 %v801, %v873
      %v880 = vadd.f32 %v802, %v875
      %s881 = scalar_lea.vmem %s2, 14
      %v882 = vld [vmem:[%s881] sm:$0x3]
      %883 = vrot.lane.b32.xlu0 %v328, 95
      %v884 = vpop.permute.xlu0 %883
      %885 = vrot.lane.b32.xlu0 %v323, 95
      %v886 = vpop.permute.xlu0 %885
      %887 = vrot.lane.b32.xlu0 %v331, 95
      %v888 = vpop.permute.xlu0 %887
      %vm889 = vcmask 777216
      %v890 = vsel %vm889, %v884, %v886
      %v891 = vsel %vm889, %v886, %v888
      %v893 = vsel %vm386, %v882, 0
      %v896 = vsel %vm390, %v890, 0
      %v899 = vsel %vm390, %v891, 0
      %901 = vmatprep.subr.bf16.mxu0 %v899
      %902 = vmatpush1.bf16.msra.mxu0 %v896
      %903 = vmatprep.subr.bf16.mxu0 0
      %904 = vmatpush1.bf16.msra.mxu0 0
      %905 = vmatprep.subr.bf16.mxu0 0
      %906 = vmatpush1.bf16.msra.mxu0 0
      %907 = vmatprep.subr.bf16.mxu0 0
      %908 = vmatpush1.bf16.msra.mxu0 0
      %909 = vmatprep.subr.bf16.mxu0 0
      %910 = vmatpush1.bf16.msra.mxu0 0
      %911 = vmatprep.subr.bf16.mxu0 0
      %912 = vmatpush1.bf16.msra.mxu0 0
      %913 = vmatprep.subr.bf16.mxu0 0
      %914 = vmatpush1.bf16.msra.mxu0 0
      %915 = vmatprep.subr.bf16.mxu0 0
      %916 = vmatpush1.bf16.msra.mxu0 0
      %917 = vmatprep.subr.bf16.mxu0 0
      %918 = vmatpush1.bf16.msra.mxu0 0
      %919 = vmatprep.subr.bf16.mxu0 0
      %920 = vmatpush1.bf16.msra.mxu0 0
      %921 = vmatprep.subr.bf16.mxu0 0
      %922 = vmatpush1.bf16.msra.mxu0 0
      %923 = vmatprep.subr.bf16.mxu0 0
      %924 = vmatpush1.bf16.msra.mxu0 0
      %925 = vmatprep.subr.bf16.mxu0 0
      %926 = vmatpush1.bf16.msra.mxu0 0
      %927 = vmatprep.subr.bf16.mxu0 0
      %928 = vmatpush1.bf16.msra.mxu0 0
      %929 = vmatprep.subr.bf16.mxu0 0
      %930 = vmatpush1.bf16.msra.mxu0 0
      %931 = vmatprep.subr.bf16.mxu0 0
      %932 = vmatpush1.bf16.msra.mxu0 0
      %933 = vmatprep.mubr.bf16.mxu0 0
      %934 = vmatmul.mubr.bf16.gmra.mrb[0].mxu0 %v893
      %v935 = vpop.f32.mrb[0].mxu0
      %v936 = vadd.f32 0.0, %v935
      %v937 = vpop.f32.mrb[0].mxu0
      %v938 = vadd.f32 0.0, %v937
      %v939 = vpop.f32.mrb[0].mxu0
      %v940 = vpop.f32.mrb[0].mxu0
      %941 = vdwg.mxu0
      %v942 = vadd.f32 %v879, %v936
      %v943 = vadd.f32 %v880, %v938
      %944 = vrot.lane.b32.xlu0 %v494, 34
      %v945 = vpop.permute.xlu0 %944
      %946 = vrot.lane.b32.xlu0 %v501, 34
      %v947 = vpop.permute.xlu0 %946
      %vm948 = vcmask 277504
      %v949 = vsel %vm948, %v945, %v947
      %v953 = vmul.bf16 %v328, %v945
      %v954 = vmul.bf16 %v323, %v949
      %v955 = vmul.bf16 %v331, %v947
      %s956 = scalar_lea.vmem %s2, 16
      %v957 = vld [vmem:[%s956] sm:$0x3]
      %961 = vrot.lane.b32.xlu0 %v953, 94
      %v962 = vpop.permute.xlu0 %961
      %963 = vrot.lane.b32.xlu0 %v954, 94
      %v964 = vpop.permute.xlu0 %963
      %965 = vrot.lane.b32.xlu0 %v955, 94
      %v966 = vpop.permute.xlu0 %965
      %vm967 = vcmask 769024
      %v968 = vsel %vm967, %v962, %v964
      %v969 = vsel %vm967, %v964, %v966
      %v971 = vsel %vm386, %v957, 0
      %v974 = vsel %vm390, %v968, 0
      %v977 = vsel %vm390, %v969, 0
      %979 = vmatprep.subr.bf16.mxu0 %v977
      %980 = vmatpush1.bf16.msra.mxu0 %v974
      %981 = vmatprep.subr.bf16.mxu0 0
      %982 = vmatpush1.bf16.msra.mxu0 0
      %983 = vmatprep.subr.bf16.mxu0 0
      %984 = vmatpush1.bf16.msra.mxu0 0
      %985 = vmatprep.subr.bf16.mxu0 0
      %986 = vmatpush1.bf16.msra.mxu0 0
      %987 = vmatprep.subr.bf16.mxu0 0
      %988 = vmatpush1.bf16.msra.mxu0 0
      %989 = vmatprep.subr.bf16.mxu0 0
      %990 = vmatpush1.bf16.msra.mxu0 0
      %991 = vmatprep.subr.bf16.mxu0 0
      %992 = vmatpush1.bf16.msra.mxu0 0
      %993 = vmatprep.subr.bf16.mxu0 0
      %994 = vmatpush1.bf16.msra.mxu0 0
      %995 = vmatprep.subr.bf16.mxu0 0
      %996 = vmatpush1.bf16.msra.mxu0 0
      %997 = vmatprep.subr.bf16.mxu0 0
      %998 = vmatpush1.bf16.msra.mxu0 0
      %999 = vmatprep.subr.bf16.mxu0 0
      %1000 = vmatpush1.bf16.msra.mxu0 0
      %1001 = vmatprep.subr.bf16.mxu0 0
      %1002 = vmatpush1.bf16.msra.mxu0 0
      %1003 = vmatprep.subr.bf16.mxu0 0
      %1004 = vmatpush1.bf16.msra.mxu0 0
      %1005 = vmatprep.subr.bf16.mxu0 0
      %1006 = vmatpush1.bf16.msra.mxu0 0
      %1007 = vmatprep.subr.bf16.mxu0 0
      %1008 = vmatpush1.bf16.msra.mxu0 0
      %1009 = vmatprep.subr.bf16.mxu0 0
      %1010 = vmatpush1.bf16.msra.mxu0 0
      %1011 = vmatprep.mubr.bf16.mxu0 0
      %1012 = vmatmul.mubr.bf16.gmra.mrb[0].mxu0 %v971
      %v1013 = vpop.f32.mrb[0].mxu0
      %v1014 = vadd.f32 0.0, %v1013
      %v1015 = vpop.f32.mrb[0].mxu0
      %v1016 = vadd.f32 0.0, %v1015
      %v1017 = vpop.f32.mrb[0].mxu0
      %v1018 = vpop.f32.mrb[0].mxu0
      %1019 = vdwg.mxu0
      %v1020 = vadd.f32 %v942, %v1014
      %v1021 = vadd.f32 %v943, %v1016
      %vm1022 = vcmp.gt.f32.partialorder %v1020, 0.0
      %vm1023 = vcmp.gt.f32.partialorder %v1021, 0.0
      %v1024 = vmul.f32 %v1020, 0.2
      %v1025 = vmul.f32 %v1021, 0.2
      %v1026 = vsel %vm1022, %v1020, %v1024
      %v1027 = vsel %vm1023, %v1021, %v1025
      %v1028 = vpack.c.bf16 %v1026, %v1026
      %v1029 = vpack.c.bf16 %v1027, %v1027
      %1032 = vrot.lane.b32.xlu0 %v1028, 17
      %v1033 = vpop.permute.xlu0 %1032
      %1034 = vrot.lane.b32.xlu0 %v1029, 17
      %v1035 = vpop.permute.xlu0 %1034
      %v1036 = vsel %vm322, %v1033, %v1035
      %v1039 = vsel %vm325, 0, %v1033
      %v1042 = vsel %vm325, %v1035, 0
      %v1044 = vmul.bf16 %v1039, %v362
      %v1045 = vmul.bf16 %v1036, %v369
      %v1046 = vld [vmem:[%s3] sm:$0x3]
      %s1047 = scalar_lea.vmem %s3, 2
      %v1048 = vld [vmem:[%s1047] sm:$0x3]
      %1051 = vrot.lane.b32.xlu0 %v1039, 127
      %v1052 = vpop.permute.xlu0 %1051
      %1053 = vrot.lane.b32.xlu0 %v1036, 127
      %v1054 = vpop.permute.xlu0 %1053
      %1055 = vrot.lane.b32.xlu0 %v1042, 127
      %v1056 = vpop.permute.xlu0 %1055
      %v1057 = vsel %vm383, %v1052, %v1054
      %v1058 = vsel %vm383, %v1054, %v1056
      %v1060 = vsel %vm386, %v1048, 0
      %v1063 = vsel %vm390, %v1057, 0
      %v1066 = vsel %vm390, %v1058, 0
      %1068 = vmatprep.subr.bf16.mxu0 %v1066
      %1069 = vmatpush1.bf16.msra.mxu0 %v1063
      %1070 = vmatprep.subr.bf16.mxu0 0
      %1071 = vmatpush1.bf16.msra.mxu0 0
      %1072 = vmatprep.subr.bf16.mxu0 0
      %1073 = vmatpush1.bf16.msra.mxu0 0
      %1074 = vmatprep.subr.bf16.mxu0 0
      %1075 = vmatpush1.bf16.msra.mxu0 0
      %1076 = vmatprep.subr.bf16.mxu0 0
      %1077 = vmatpush1.bf16.msra.mxu0 0
      %1078 = vmatprep.subr.bf16.mxu0 0
      %1079 = vmatpush1.bf16.msra.mxu0 0
      %1080 = vmatprep.subr.bf16.mxu0 0
      %1081 = vmatpush1.bf16.msra.mxu0 0
      %1082 = vmatprep.subr.bf16.mxu0 0
      %1083 = vmatpush1.bf16.msra.mxu0 0
      %1084 = vmatprep.subr.bf16.mxu0 0
      %1085 = vmatpush1.bf16.msra.mxu0 0
      %1086 = vmatprep.subr.bf16.mxu0 0
      %1087 = vmatpush1.bf16.msra.mxu0 0
      %1088 = vmatprep.subr.bf16.mxu0 0
      %1089 = vmatpush1.bf16.msra.mxu0 0
      %1090 = vmatprep.subr.bf16.mxu0 0
      %1091 = vmatpush1.bf16.msra.mxu0 0
      %1092 = vmatprep.subr.bf16.mxu0 0
      %1093 = vmatpush1.bf16.msra.mxu0 0
      %1094 = vmatprep.subr.bf16.mxu0 0
      %1095 = vmatpush1.bf16.msra.mxu0 0
      %1096 = vmatprep.subr.bf16.mxu0 0
      %1097 = vmatpush1.bf16.msra.mxu0 0
      %1098 = vmatprep.subr.bf16.mxu0 0
      %1099 = vmatpush1.bf16.msra.mxu0 0
      %1100 = vmatprep.mubr.bf16.mxu0 0
      %1101 = vmatmul.mubr.bf16.gmra.mrb[0].mxu0 %v1060
      %v1102 = vpop.f32.mrb[0].mxu0
      %v1103 = vadd.f32 0.0, %v1102
      %v1104 = vpop.f32.mrb[0].mxu0
      %v1105 = vadd.f32 0.0, %v1104
      %v1106 = vpop.f32.mrb[0].mxu0
      %v1107 = vpop.f32.mrb[0].mxu0
      %1108 = vdwg.mxu0
      %v1110 = vsel %vm386, %v1046, 0
      %v1113 = vsel %vm390, %v1044, 0
      %v1116 = vsel %vm390, %v1045, 0
      %1118 = vmatprep.subr.bf16.mxu0 %v1116
      %1119 = vmatpush1.bf16.msra.mxu0 %v1113
      %1120 = vmatprep.subr.bf16.mxu0 0
      %1121 = vmatpush1.bf16.msra.mxu0 0
      %1122 = vmatprep.subr.bf16.mxu0 0
      %1123 = vmatpush1.bf16.msra.mxu0 0
      %1124 = vmatprep.subr.bf16.mxu0 0
      %1125 = vmatpush1.bf16.msra.mxu0 0
      %1126 = vmatprep.subr.bf16.mxu0 0
      %1127 = vmatpush1.bf16.msra.mxu0 0
      %1128 = vmatprep.subr.bf16.mxu0 0
      %1129 = vmatpush1.bf16.msra.mxu0 0
      %1130 = vmatprep.subr.bf16.mxu0 0
      %1131 = vmatpush1.bf16.msra.mxu0 0
      %1132 = vmatprep.subr.bf16.mxu0 0
      %1133 = vmatpush1.bf16.msra.mxu0 0
      %1134 = vmatprep.subr.bf16.mxu0 0
      %1135 = vmatpush1.bf16.msra.mxu0 0
      %1136 = vmatprep.subr.bf16.mxu0 0
      %1137 = vmatpush1.bf16.msra.mxu0 0
      %1138 = vmatprep.subr.bf16.mxu0 0
      %1139 = vmatpush1.bf16.msra.mxu0 0
      %1140 = vmatprep.subr.bf16.mxu0 0
      %1141 = vmatpush1.bf16.msra.mxu0 0
      %1142 = vmatprep.subr.bf16.mxu0 0
      %1143 = vmatpush1.bf16.msra.mxu0 0
      %1144 = vmatprep.subr.bf16.mxu0 0
      %1145 = vmatpush1.bf16.msra.mxu0 0
      %1146 = vmatprep.subr.bf16.mxu0 0
      %1147 = vmatpush1.bf16.msra.mxu0 0
      %1148 = vmatprep.subr.bf16.mxu0 0
      %1149 = vmatpush1.bf16.msra.mxu0 0
      %1150 = vmatprep.mubr.bf16.mxu0 0
      %1151 = vmatmul.mubr.bf16.gmra.mrb[0].mxu0 %v1110
      %v1152 = vpop.f32.mrb[0].mxu0
      %v1153 = vadd.f32 %v1103, %v1152
      %v1154 = vpop.f32.mrb[0].mxu0
      %v1155 = vadd.f32 %v1105, %v1154
      %v1156 = vpop.f32.mrb[0].mxu0
      %v1157 = vpop.f32.mrb[0].mxu0
      %1158 = vdwg.mxu0
      %v1159 = vmul.bf16 %v1039, %v505
      %v1160 = vmul.bf16 %v1036, %v509
      %v1161 = vmul.bf16 %v1042, %v507
      %s1162 = scalar_lea.vmem %s3, 4
      %v1163 = vld [vmem:[%s1162] sm:$0x3]
      %1167 = vrot.lane.b32.xlu0 %v1159, 126
      %v1168 = vpop.permute.xlu0 %1167
      %1169 = vrot.lane.b32.xlu0 %v1160, 126
      %v1170 = vpop.permute.xlu0 %1169
      %1171 = vrot.lane.b32.xlu0 %v1161, 126
      %v1172 = vpop.permute.xlu0 %1171
      %v1173 = vsel %vm527, %v1168, %v1170
      %v1174 = vsel %vm527, %v1170, %v1172
      %v1176 = vsel %vm386, %v1163, 0
      %v1179 = vsel %vm390, %v1173, 0
      %v1182 = vsel %vm390, %v1174, 0
      %1184 = vmatprep.subr.bf16.mxu0 %v1182
      %1185 = vmatpush1.bf16.msra.mxu0 %v1179
      %1186 = vmatprep.subr.bf16.mxu0 0
      %1187 = vmatpush1.bf16.msra.mxu0 0
      %1188 = vmatprep.subr.bf16.mxu0 0
      %1189 = vmatpush1.bf16.msra.mxu0 0
      %1190 = vmatprep.subr.bf16.mxu0 0
      %1191 = vmatpush1.bf16.msra.mxu0 0
      %1192 = vmatprep.subr.bf16.mxu0 0
      %1193 = vmatpush1.bf16.msra.mxu0 0
      %1194 = vmatprep.subr.bf16.mxu0 0
      %1195 = vmatpush1.bf16.msra.mxu0 0
      %1196 = vmatprep.subr.bf16.mxu0 0
      %1197 = vmatpush1.bf16.msra.mxu0 0
      %1198 = vmatprep.subr.bf16.mxu0 0
      %1199 = vmatpush1.bf16.msra.mxu0 0
      %1200 = vmatprep.subr.bf16.mxu0 0
      %1201 = vmatpush1.bf16.msra.mxu0 0
      %1202 = vmatprep.subr.bf16.mxu0 0
      %1203 = vmatpush1.bf16.msra.mxu0 0
      %1204 = vmatprep.subr.bf16.mxu0 0
      %1205 = vmatpush1.bf16.msra.mxu0 0
      %1206 = vmatprep.subr.bf16.mxu0 0
      %1207 = vmatpush1.bf16.msra.mxu0 0
      %1208 = vmatprep.subr.bf16.mxu0 0
      %1209 = vmatpush1.bf16.msra.mxu0 0
      %1210 = vmatprep.subr.bf16.mxu0 0
      %1211 = vmatpush1.bf16.msra.mxu0 0
      %1212 = vmatprep.subr.bf16.mxu0 0
      %1213 = vmatpush1.bf16.msra.mxu0 0
      %1214 = vmatprep.subr.bf16.mxu0 0
      %1215 = vmatpush1.bf16.msra.mxu0 0
      %1216 = vmatprep.mubr.bf16.mxu0 0
      %1217 = vmatmul.mubr.bf16.gmra.mrb[0].mxu0 %v1176
      %v1218 = vpop.f32.mrb[0].mxu0
      %v1219 = vadd.f32 0.0, %v1218
      %v1220 = vpop.f32.mrb[0].mxu0
      %v1221 = vadd.f32 0.0, %v1220
      %v1222 = vpop.f32.mrb[0].mxu0
      %v1223 = vpop.f32.mrb[0].mxu0
      %1224 = vdwg.mxu0
      %v1225 = vadd.f32 %v1153, %v1219
      %v1226 = vadd.f32 %v1155, %v1221
      %v1227 = vmul.bf16 %v1039, %v585
      %v1228 = vmul.bf16 %v1036, %v589
      %v1229 = vmul.bf16 %v1042, %v587
      %s1230 = scalar_lea.vmem %s3, 6
      %v1231 = vld [vmem:[%s1230] sm:$0x3]
      %1235 = vrot.lane.b32.xlu0 %v1227, 112
      %v1236 = vpop.permute.xlu0 %1235
      %1237 = vrot.lane.b32.xlu0 %v1228, 112
      %v1238 = vpop.permute.xlu0 %1237
      %1239 = vrot.lane.b32.xlu0 %v1229, 112
      %v1240 = vpop.permute.xlu0 %1239
      %v1241 = vsel %vm607, %v1236, %v1238
      %v1242 = vsel %vm607, %v1238, %v1240
      %v1244 = vsel %vm386, %v1231, 0
      %v1247 = vsel %vm390, %v1241, 0
      %v1250 = vsel %vm390, %v1242, 0
      %1252 = vmatprep.subr.bf16.mxu0 %v1250
      %1253 = vmatpush1.bf16.msra.mxu0 %v1247
      %1254 = vmatprep.subr.bf16.mxu0 0
      %1255 = vmatpush1.bf16.msra.mxu0 0
      %1256 = vmatprep.subr.bf16.mxu0 0
      %1257 = vmatpush1.bf16.msra.mxu0 0
      %1258 = vmatprep.subr.bf16.mxu0 0
      %1259 = vmatpush1.bf16.msra.mxu0 0
      %1260 = vmatprep.subr.bf16.mxu0 0
      %1261 = vmatpush1.bf16.msra.mxu0 0
      %1262 = vmatprep.subr.bf16.mxu0 0
      %1263 = vmatpush1.bf16.msra.mxu0 0
      %1264 = vmatprep.subr.bf16.mxu0 0
      %1265 = vmatpush1.bf16.msra.mxu0 0
      %1266 = vmatprep.subr.bf16.mxu0 0
      %1267 = vmatpush1.bf16.msra.mxu0 0
      %1268 = vmatprep.subr.bf16.mxu0 0
      %1269 = vmatpush1.bf16.msra.mxu0 0
      %1270 = vmatprep.subr.bf16.mxu0 0
      %1271 = vmatpush1.bf16.msra.mxu0 0
      %1272 = vmatprep.subr.bf16.mxu0 0
      %1273 = vmatpush1.bf16.msra.mxu0 0
      %1274 = vmatprep.subr.bf16.mxu0 0
      %1275 = vmatpush1.bf16.msra.mxu0 0
      %1276 = vmatprep.subr.bf16.mxu0 0
      %1277 = vmatpush1.bf16.msra.mxu0 0
      %1278 = vmatprep.subr.bf16.mxu0 0
      %1279 = vmatpush1.bf16.msra.mxu0 0
      %1280 = vmatprep.subr.bf16.mxu0 0
      %1281 = vmatpush1.bf16.msra.mxu0 0
      %1282 = vmatprep.subr.bf16.mxu0 0
      %1283 = vmatpush1.bf16.msra.mxu0 0
      %1284 = vmatprep.mubr.bf16.mxu0 0
      %1285 = vmatmul.mubr.bf16.gmra.mrb[0].mxu0 %v1244
      %v1286 = vpop.f32.mrb[0].mxu0
      %v1287 = vadd.f32 0.0, %v1286
      %v1288 = vpop.f32.mrb[0].mxu0
      %v1289 = vadd.f32 0.0, %v1288
      %v1290 = vpop.f32.mrb[0].mxu0
      %v1291 = vpop.f32.mrb[0].mxu0
      %1292 = vdwg.mxu0
      %v1293 = vadd.f32 %v1225, %v1287
      %v1294 = vadd.f32 %v1226, %v1289
      %s1295 = scalar_lea.vmem %s3, 8
      %v1296 = vld [vmem:[%s1295] sm:$0x3]
      %1297 = vrot.lane.b32.xlu0 %v1039, 111
      %v1298 = vpop.permute.xlu0 %1297
      %1299 = vrot.lane.b32.xlu0 %v1036, 111
      %v1300 = vpop.permute.xlu0 %1299
      %1301 = vrot.lane.b32.xlu0 %v1042, 111
      %v1302 = vpop.permute.xlu0 %1301
      %v1303 = vsel %vm670, %v1298, %v1300
      %v1304 = vsel %vm670, %v1300, %v1302
      %v1306 = vsel %vm386, %v1296, 0
      %v1309 = vsel %vm390, %v1303, 0
      %v1312 = vsel %vm390, %v1304, 0
      %1314 = vmatprep.subr.bf16.mxu0 %v1312
      %1315 = vmatpush1.bf16.msra.mxu0 %v1309
      %1316 = vmatprep.subr.bf16.mxu0 0
      %1317 = vmatpush1.bf16.msra.mxu0 0
      %1318 = vmatprep.subr.bf16.mxu0 0
      %1319 = vmatpush1.bf16.msra.mxu0 0
      %1320 = vmatprep.subr.bf16.mxu0 0
      %1321 = vmatpush1.bf16.msra.mxu0 0
      %1322 = vmatprep.subr.bf16.mxu0 0
      %1323 = vmatpush1.bf16.msra.mxu0 0
      %1324 = vmatprep.subr.bf16.mxu0 0
      %1325 = vmatpush1.bf16.msra.mxu0 0
      %1326 = vmatprep.subr.bf16.mxu0 0
      %1327 = vmatpush1.bf16.msra.mxu0 0
      %1328 = vmatprep.subr.bf16.mxu0 0
      %1329 = vmatpush1.bf16.msra.mxu0 0
      %1330 = vmatprep.subr.bf16.mxu0 0
      %1331 = vmatpush1.bf16.msra.mxu0 0
      %1332 = vmatprep.subr.bf16.mxu0 0
      %1333 = vmatpush1.bf16.msra.mxu0 0
      %1334 = vmatprep.subr.bf16.mxu0 0
      %1335 = vmatpush1.bf16.msra.mxu0 0
      %1336 = vmatprep.subr.bf16.mxu0 0
      %1337 = vmatpush1.bf16.msra.mxu0 0
      %1338 = vmatprep.subr.bf16.mxu0 0
      %1339 = vmatpush1.bf16.msra.mxu0 0
      %1340 = vmatprep.subr.bf16.mxu0 0
      %1341 = vmatpush1.bf16.msra.mxu0 0
      %1342 = vmatprep.subr.bf16.mxu0 0
      %1343 = vmatpush1.bf16.msra.mxu0 0
      %1344 = vmatprep.subr.bf16.mxu0 0
      %1345 = vmatpush1.bf16.msra.mxu0 0
      %1346 = vmatprep.mubr.bf16.mxu0 0
      %1347 = vmatmul.mubr.bf16.gmra.mrb[0].mxu0 %v1306
      %v1348 = vpop.f32.mrb[0].mxu0
      %v1349 = vadd.f32 0.0, %v1348
      %v1350 = vpop.f32.mrb[0].mxu0
      %v1351 = vadd.f32 0.0, %v1350
      %v1352 = vpop.f32.mrb[0].mxu0
      %v1353 = vpop.f32.mrb[0].mxu0
      %1354 = vdwg.mxu0
      %v1355 = vadd.f32 %v1293, %v1349
      %v1356 = vadd.f32 %v1294, %v1351
      %v1357 = vmul.bf16 %v1039, %v726
      %v1358 = vmul.bf16 %v1036, %v730
      %v1359 = vmul.bf16 %v1042, %v728
      %s1360 = scalar_lea.vmem %s3, 10
      %v1361 = vld [vmem:[%s1360] sm:$0x3]
      %1365 = vrot.lane.b32.xlu0 %v1357, 110
      %v1366 = vpop.permute.xlu0 %1365
      %1367 = vrot.lane.b32.xlu0 %v1358, 110
      %v1368 = vpop.permute.xlu0 %1367
      %1369 = vrot.lane.b32.xlu0 %v1359, 110
      %v1370 = vpop.permute.xlu0 %1369
      %v1371 = vsel %vm748, %v1366, %v1368
      %v1372 = vsel %vm748, %v1368, %v1370
      %v1374 = vsel %vm386, %v1361, 0
      %v1377 = vsel %vm390, %v1371, 0
      %v1380 = vsel %vm390, %v1372, 0
      %1382 = vmatprep.subr.bf16.mxu0 %v1380
      %1383 = vmatpush1.bf16.msra.mxu0 %v1377
      %1384 = vmatprep.subr.bf16.mxu0 0
      %1385 = vmatpush1.bf16.msra.mxu0 0
      %1386 = vmatprep.subr.bf16.mxu0 0
      %1387 = vmatpush1.bf16.msra.mxu0 0
      %1388 = vmatprep.subr.bf16.mxu0 0
      %1389 = vmatpush1.bf16.msra.mxu0 0
      %1390 = vmatprep.subr.bf16.mxu0 0
      %1391 = vmatpush1.bf16.msra.mxu0 0
      %1392 = vmatprep.subr.bf16.mxu0 0
      %1393 = vmatpush1.bf16.msra.mxu0 0
      %1394 = vmatprep.subr.bf16.mxu0 0
      %1395 = vmatpush1.bf16.msra.mxu0 0
      %1396 = vmatprep.subr.bf16.mxu0 0
      %1397 = vmatpush1.bf16.msra.mxu0 0
      %1398 = vmatprep.subr.bf16.mxu0 0
      %1399 = vmatpush1.bf16.msra.mxu0 0
      %1400 = vmatprep.subr.bf16.mxu0 0
      %1401 = vmatpush1.bf16.msra.mxu0 0
      %1402 = vmatprep.subr.bf16.mxu0 0
      %1403 = vmatpush1.bf16.msra.mxu0 0
      %1404 = vmatprep.subr.bf16.mxu0 0
      %1405 = vmatpush1.bf16.msra.mxu0 0
      %1406 = vmatprep.subr.bf16.mxu0 0
      %1407 = vmatpush1.bf16.msra.mxu0 0
      %1408 = vmatprep.subr.bf16.mxu0 0
      %1409 = vmatpush1.bf16.msra.mxu0 0
      %1410 = vmatprep.subr.bf16.mxu0 0
      %1411 = vmatpush1.bf16.msra.mxu0 0
      %1412 = vmatprep.subr.bf16.mxu0 0
      %1413 = vmatpush1.bf16.msra.mxu0 0
      %1414 = vmatprep.mubr.bf16.mxu0 0
      %1415 = vmatmul.mubr.bf16.gmra.mrb[0].mxu0 %v1374
      %v1416 = vpop.f32.mrb[0].mxu0
      %v1417 = vadd.f32 0.0, %v1416
      %v1418 = vpop.f32.mrb[0].mxu0
      %v1419 = vadd.f32 0.0, %v1418
      %v1420 = vpop.f32.mrb[0].mxu0
      %v1421 = vpop.f32.mrb[0].mxu0
      %1422 = vdwg.mxu0
      %v1423 = vadd.f32 %v1355, %v1417
      %v1424 = vadd.f32 %v1356, %v1419
      %v1425 = vmul.bf16 %v1039, %v804
      %v1426 = vmul.bf16 %v1036, %v808
      %v1427 = vmul.bf16 %v1042, %v806
      %s1428 = scalar_lea.vmem %s3, 12
      %v1429 = vld [vmem:[%s1428] sm:$0x3]
      %1433 = vrot.lane.b32.xlu0 %v1425, 96
      %v1434 = vpop.permute.xlu0 %1433
      %1435 = vrot.lane.b32.xlu0 %v1426, 96
      %v1436 = vpop.permute.xlu0 %1435
      %1437 = vrot.lane.b32.xlu0 %v1427, 96
      %v1438 = vpop.permute.xlu0 %1437
      %v1439 = vsel %vm826, %v1434, %v1436
      %v1440 = vsel %vm826, %v1436, %v1438
      %v1442 = vsel %vm386, %v1429, 0
      %v1445 = vsel %vm390, %v1439, 0
      %v1448 = vsel %vm390, %v1440, 0
      %1450 = vmatprep.subr.bf16.mxu0 %v1448
      %1451 = vmatpush1.bf16.msra.mxu0 %v1445
      %1452 = vmatprep.subr.bf16.mxu0 0
      %1453 = vmatpush1.bf16.msra.mxu0 0
      %1454 = vmatprep.subr.bf16.mxu0 0
      %1455 = vmatpush1.bf16.msra.mxu0 0
      %1456 = vmatprep.subr.bf16.mxu0 0
      %1457 = vmatpush1.bf16.msra.mxu0 0
      %1458 = vmatprep.subr.bf16.mxu0 0
      %1459 = vmatpush1.bf16.msra.mxu0 0
      %1460 = vmatprep.subr.bf16.mxu0 0
      %1461 = vmatpush1.bf16.msra.mxu0 0
      %1462 = vmatprep.subr.bf16.mxu0 0
      %1463 = vmatpush1.bf16.msra.mxu0 0
      %1464 = vmatprep.subr.bf16.mxu0 0
      %1465 = vmatpush1.bf16.msra.mxu0 0
      %1466 = vmatprep.subr.bf16.mxu0 0
      %1467 = vmatpush1.bf16.msra.mxu0 0
      %1468 = vmatprep.subr.bf16.mxu0 0
      %1469 = vmatpush1.bf16.msra.mxu0 0
      %1470 = vmatprep.subr.bf16.mxu0 0
      %1471 = vmatpush1.bf16.msra.mxu0 0
      %1472 = vmatprep.subr.bf16.mxu0 0
      %1473 = vmatpush1.bf16.msra.mxu0 0
      %1474 = vmatprep.subr.bf16.mxu0 0
      %1475 = vmatpush1.bf16.msra.mxu0 0
      %1476 = vmatprep.subr.bf16.mxu0 0
      %1477 = vmatpush1.bf16.msra.mxu0 0
      %1478 = vmatprep.subr.bf16.mxu0 0
      %1479 = vmatpush1.bf16.msra.mxu0 0
      %1480 = vmatprep.subr.bf16.mxu0 0
      %1481 = vmatpush1.bf16.msra.mxu0 0
      %1482 = vmatprep.mubr.bf16.mxu0 0
      %1483 = vmatmul.mubr.bf16.gmra.mrb[0].mxu0 %v1442
      %v1484 = vpop.f32.mrb[0].mxu0
      %v1485 = vadd.f32 0.0, %v1484
      %v1486 = vpop.f32.mrb[0].mxu0
      %v1487 = vadd.f32 0.0, %v1486
      %v1488 = vpop.f32.mrb[0].mxu0
      %v1489 = vpop.f32.mrb[0].mxu0
      %1490 = vdwg.mxu0
      %v1491 = vadd.f32 %v1423, %v1485
      %v1492 = vadd.f32 %v1424, %v1487
      %s1493 = scalar_lea.vmem %s3, 14
      %v1494 = vld [vmem:[%s1493] sm:$0x3]
      %1495 = vrot.lane.b32.xlu0 %v1039, 95
      %v1496 = vpop.permute.xlu0 %1495
      %1497 = vrot.lane.b32.xlu0 %v1036, 95
      %v1498 = vpop.permute.xlu0 %1497
      %1499 = vrot.lane.b32.xlu0 %v1042, 95
      %v1500 = vpop.permute.xlu0 %1499
      %v1501 = vsel %vm889, %v1496, %v1498
      %v1502 = vsel %vm889, %v1498, %v1500
      %v1504 = vsel %vm386, %v1494, 0
      %v1507 = vsel %vm390, %v1501, 0
      %v1510 = vsel %vm390, %v1502, 0
      %1512 = vmatprep.subr.bf16.mxu0 %v1510
      %1513 = vmatpush1.bf16.msra.mxu0 %v1507
      %1514 = vmatprep.subr.bf16.mxu0 0
      %1515 = vmatpush1.bf16.msra.mxu0 0
      %1516 = vmatprep.subr.bf16.mxu0 0
      %1517 = vmatpush1.bf16.msra.mxu0 0
      %1518 = vmatprep.subr.bf16.mxu0 0
      %1519 = vmatpush1.bf16.msra.mxu0 0
      %1520 = vmatprep.subr.bf16.mxu0 0
      %1521 = vmatpush1.bf16.msra.mxu0 0
      %1522 = vmatprep.subr.bf16.mxu0 0
      %1523 = vmatpush1.bf16.msra.mxu0 0
      %1524 = vmatprep.subr.bf16.mxu0 0
      %1525 = vmatpush1.bf16.msra.mxu0 0
      %1526 = vmatprep.subr.bf16.mxu0 0
      %1527 = vmatpush1.bf16.msra.mxu0 0
      %1528 = vmatprep.subr.bf16.mxu0 0
      %1529 = vmatpush1.bf16.msra.mxu0 0
      %1530 = vmatprep.subr.bf16.mxu0 0
      %1531 = vmatpush1.bf16.msra.mxu0 0
      %1532 = vmatprep.subr.bf16.mxu0 0
      %1533 = vmatpush1.bf16.msra.mxu0 0
      %1534 = vmatprep.subr.bf16.mxu0 0
      %1535 = vmatpush1.bf16.msra.mxu0 0
      %1536 = vmatprep.subr.bf16.mxu0 0
      %1537 = vmatpush1.bf16.msra.mxu0 0
      %1538 = vmatprep.subr.bf16.mxu0 0
      %1539 = vmatpush1.bf16.msra.mxu0 0
      %1540 = vmatprep.subr.bf16.mxu0 0
      %1541 = vmatpush1.bf16.msra.mxu0 0
      %1542 = vmatprep.subr.bf16.mxu0 0
      %1543 = vmatpush1.bf16.msra.mxu0 0
      %1544 = vmatprep.mubr.bf16.mxu0 0
      %1545 = vmatmul.mubr.bf16.gmra.mrb[0].mxu0 %v1504
      %v1546 = vpop.f32.mrb[0].mxu0
      %v1547 = vadd.f32 0.0, %v1546
      %v1548 = vpop.f32.mrb[0].mxu0
      %v1549 = vadd.f32 0.0, %v1548
      %v1550 = vpop.f32.mrb[0].mxu0
      %v1551 = vpop.f32.mrb[0].mxu0
      %1552 = vdwg.mxu0
      %v1553 = vadd.f32 %v1491, %v1547
      %v1554 = vadd.f32 %v1492, %v1549
      %v1555 = vmul.bf16 %v1039, %v945
      %v1556 = vmul.bf16 %v1036, %v949
      %v1557 = vmul.bf16 %v1042, %v947
      %s1558 = scalar_lea.vmem %s3, 16
      %v1559 = vld [vmem:[%s1558] sm:$0x3]
      %1563 = vrot.lane.b32.xlu0 %v1555, 94
      %v1564 = vpop.permute.xlu0 %1563
      %1565 = vrot.lane.b32.xlu0 %v1556, 94
      %v1566 = vpop.permute.xlu0 %1565
      %1567 = vrot.lane.b32.xlu0 %v1557, 94
      %v1568 = vpop.permute.xlu0 %1567
      %v1569 = vsel %vm967, %v1564, %v1566
      %v1570 = vsel %vm967, %v1566, %v1568
      %v1572 = vsel %vm386, %v1559, 0
      %v1575 = vsel %vm390, %v1569, 0
      %v1578 = vsel %vm390, %v1570, 0
      %1580 = vmatprep.subr.bf16.mxu0 %v1578
      %1581 = vmatpush1.bf16.msra.mxu0 %v1575
      %1582 = vmatprep.subr.bf16.mxu0 0
      %1583 = vmatpush1.bf16.msra.mxu0 0
      %1584 = vmatprep.subr.bf16.mxu0 0
      %1585 = vmatpush1.bf16.msra.mxu0 0
      %1586 = vmatprep.subr.bf16.mxu0 0
      %1587 = vmatpush1.bf16.msra.mxu0 0
      %1588 = vmatprep.subr.bf16.mxu0 0
      %1589 = vmatpush1.bf16.msra.mxu0 0
      %1590 = vmatprep.subr.bf16.mxu0 0
      %1591 = vmatpush1.bf16.msra.mxu0 0
      %1592 = vmatprep.subr.bf16.mxu0 0
      %1593 = vmatpush1.bf16.msra.mxu0 0
      %1594 = vmatprep.subr.bf16.mxu0 0
      %1595 = vmatpush1.bf16.msra.mxu0 0
      %1596 = vmatprep.subr.bf16.mxu0 0
      %1597 = vmatpush1.bf16.msra.mxu0 0
      %1598 = vmatprep.subr.bf16.mxu0 0
      %1599 = vmatpush1.bf16.msra.mxu0 0
      %1600 = vmatprep.subr.bf16.mxu0 0
      %1601 = vmatpush1.bf16.msra.mxu0 0
      %1602 = vmatprep.subr.bf16.mxu0 0
      %1603 = vmatpush1.bf16.msra.mxu0 0
      %1604 = vmatprep.subr.bf16.mxu0 0
      %1605 = vmatpush1.bf16.msra.mxu0 0
      %1606 = vmatprep.subr.bf16.mxu0 0
      %1607 = vmatpush1.bf16.msra.mxu0 0
      %1608 = vmatprep.subr.bf16.mxu0 0
      %1609 = vmatpush1.bf16.msra.mxu0 0
      %1610 = vmatprep.subr.bf16.mxu0 0
      %1611 = vmatpush1.bf16.msra.mxu0 0
      %1612 = vmatprep.mubr.bf16.mxu0 0
      %1613 = vmatmul.mubr.bf16.gmra.mrb[0].mxu0 %v1572
      %v1614 = vpop.f32.mrb[0].mxu0
      %v1615 = vadd.f32 0.0, %v1614
      %v1616 = vpop.f32.mrb[0].mxu0
      %v1617 = vadd.f32 0.0, %v1616
      %v1618 = vpop.f32.mrb[0].mxu0
      %v1619 = vpop.f32.mrb[0].mxu0
      %1620 = vdwg.mxu0
      %v1621 = vadd.f32 %v1553, %v1615
      %v1622 = vadd.f32 %v1554, %v1617
      %v1623 = vld [vmem:[%s4] sm:$0xf]
      %1625 = vset.pattern.permute.xlu0 0
      %1626 = vperm.xlu0 %1625, %v1623
      %v1627 = vpop.permute.xlu0 %1626
      %v1629 = vmul.f32 %v1621, %v1627
      %v1630 = vmul.f32 %v1622, %v1627
      %vm1631 = vcmask 1043456
      %v1632 = vsel %vm1631, %v1629, 0.0
      %v1633 = vrot.slane %v1632, 4
      %v1634 = vadd.f32 %v1632, %v1633
      %v1635 = vrot.slane %v1634, 2
      %v1636 = vadd.f32 %v1634, %v1635
      %v1637 = vrot.slane %v1636, 1
      %v1638 = vadd.f32 %v1636, %v1637
      %v1639 = vsel %vm1631, %v1630, 0.0
      %v1640 = vrot.slane %v1639, 4
      %v1641 = vadd.f32 %v1639, %v1640
      %v1642 = vrot.slane %v1641, 2
      %v1643 = vadd.f32 %v1641, %v1642
      %v1644 = vrot.slane %v1643, 1
      %v1645 = vadd.f32 %v1643, %v1644
      %v1646 = vmax.f32 %v1638, %v1645
      %1647 = vmax.xlane.f32.xlu0 %v1646
      %v1648 = vpop.xlane.xlu0 %1647
      %v1649 = vsub.f32 %v1638, %v1648
      %v1650 = vsub.f32 %v1645, %v1648
      %v1651 = vmul.f32 %v1649, 1.442695
      %v1652 = vpow.pop %v1651
      %v1653 = vmul.f32 %v1650, 1.442695
      %v1654 = vpow.pop %v1653
      %v1655 = vadd.f32 %v1652, %v1654
      %1656 = vadd.xlane.f32.xlu0 %v1655
      %v1657 = vpop.xlane.xlu0 %1656
      %v1658 = vrcp.pop %v1657
      %v1659 = vmul.f32 %v1652, %v1658
      %v1660 = vmul.f32 %v1654, %v1658
      %v1661 = vmul.f32 %v1621, %v1659
      %v1662 = vmul.f32 %v1622, %v1660
      %v1663 = vsel %vm1631, %v1661, 0.0
      %v1664 = vsel %vm1631, %v1662, 0.0
      %v1665 = vadd.f32 %v1663, %v1664
      %1666 = vadd.xlane.f32.xlu0 %v1665
      %v1667 = vpop.xlane.xlu0 %1666
      %v1668 = vld [vmem:[%s5] sm:$0xf]
      %v1669 = vmul.f32 %v1667, %v1668
      %vm1670 = vcmask 27648
      %v1671 = vsel %vm1670, %v1669, 0.0
      %v1672 = vrot.slane %v1671, 4
      %v1673 = vadd.f32 %v1671, %v1672
      %v1674 = vrot.slane %v1673, 2
      %v1675 = vadd.f32 %v1673, %v1674
      %v1676 = vrot.slane %v1675, 1
      %v1677 = vadd.f32 %v1675, %v1676
      %vm1678 = vcmp.gt.f32.partialorder %v1677, 0.0
      %v1679 = vmul.f32 %v1677, 0.2
      %v1680 = vsel %vm1678, %v1677, %v1679
      %v1681 = vld [vmem:[%s6] sm:$0xf]
      %v1682 = vmul.f32 %v1681, %v1680
      %v1683 = vsel %vm1670, %v1682, 0.0
      %1684 = vadd.xlane.f32.xlu0 %v1683
      %v1685 = vpop.xlane.xlu0 %1684
      %v1686 = vadd.f32 %v1621, %v1685
      %v1687 = vadd.f32 %v1622, %v1685
      %v1688 = vld [vmem:[%s7] sm:$0x3]
      %v1689 = vpack.c.bf16 %v1686, %v1686
      %v1690 = vpack.c.bf16 %v1687, %v1687
      %v1691 = vunpack.c.l.bf16 %v307
      %v1693 = vcombine.high %v1691, %v1691
      %v1696 = vsel %vm386, %v1688, 0
      %v1699 = vsel %vm390, %v1689, 0
      %v1702 = vsel %vm390, %v1690, 0
      %1704 = vmatprep.subr.bf16.mxu0 %v1702
      %1705 = vmatpush1.bf16.msra.mxu0 %v1699
      %1706 = vmatprep.subr.bf16.mxu0 0
      %1707 = vmatpush1.bf16.msra.mxu0 0
      %1708 = vmatprep.subr.bf16.mxu0 0
      %1709 = vmatpush1.bf16.msra.mxu0 0
      %1710 = vmatprep.subr.bf16.mxu0 0
      %1711 = vmatpush1.bf16.msra.mxu0 0
      %1712 = vmatprep.subr.bf16.mxu0 0
      %1713 = vmatpush1.bf16.msra.mxu0 0
      %1714 = vmatprep.subr.bf16.mxu0 0
      %1715 = vmatpush1.bf16.msra.mxu0 0
      %1716 = vmatprep.subr.bf16.mxu0 0
      %1717 = vmatpush1.bf16.msra.mxu0 0
      %1718 = vmatprep.subr.bf16.mxu0 0
      %1719 = vmatpush1.bf16.msra.mxu0 0
      %1720 = vmatprep.subr.bf16.mxu0 0
      %1721 = vmatpush1.bf16.msra.mxu0 0
      %1722 = vmatprep.subr.bf16.mxu0 0
      %1723 = vmatpush1.bf16.msra.mxu0 0
      %1724 = vmatprep.subr.bf16.mxu0 0
      %1725 = vmatpush1.bf16.msra.mxu0 0
      %1726 = vmatprep.subr.bf16.mxu0 0
      %1727 = vmatpush1.bf16.msra.mxu0 0
      %1728 = vmatprep.subr.bf16.mxu0 0
      %1729 = vmatpush1.bf16.msra.mxu0 0
      %1730 = vmatprep.subr.bf16.mxu0 0
      %1731 = vmatpush1.bf16.msra.mxu0 0
      %1732 = vmatprep.subr.bf16.mxu0 0
      %1733 = vmatpush1.bf16.msra.mxu0 0
      %1734 = vmatprep.subr.bf16.mxu0 0
      %1735 = vmatpush1.bf16.msra.mxu0 0
      %1736 = vmatprep.mubr.bf16.mxu0 0
      %1737 = vmatmul.mubr.bf16.gmra.mrb[0].mxu0 %v1696
      %v1738 = vpop.f32.mrb[0].mxu0
      %v1739 = vadd.f32 %v1691, %v1738
      %v1740 = vpop.f32.mrb[0].mxu0
      %v1741 = vadd.f32 %v1693, %v1740
      %v1742 = vpop.f32.mrb[0].mxu0
      %v1743 = vpop.f32.mrb[0].mxu0
      %1744 = vdwg.mxu0
      %v1745 = vpack.c.bf16 %v1739, %v1739
      %v1746 = vpack.c.bf16 %v1741, %v1741
      %v1749 = vcombine.low %v1745, %v1746
      %v1751 = vunpack.c.l.s4 1983009808
      %v1752 = vunpack.c.0.s8 %v1751
      %v1753 = vlaneseq
      %v1754 = vshrl.u32 %v1753, 7
      %v1755 = vsub.s32 %v1752, %v1754
      %v1756 = vrot.slane %v1749, %v1755
      %1758 = vst [vmem:[%s305] sm:$0xf] %v1756
      %p1759 = scmp.lt.s32.totalorder %s19, 1
      %s1760 = scalar_select %p1759, %s19, 1
      %s1761 = smul.addr %s1760, 2
      %s1762 = smul.addr %s1761, 2
      %s1763 = scalar_lea.vmem %s8, %s1762
      // Predicated region
      $region53: #{rgcab_forward.3} parent=51 // pred_check
        %p1764 = pneg %p210
      $region54: #{rgcab_forward.3} parent=51 // pred_check_branch
        %1766 = sbr.rel (%p1764) target = $region56
      $region55: #{rgcab_forward.3} parent=51 // pred_region
        _
      $region56: #{rgcab_forward.3} parent=51 // pred_fallthru
        _
    $region52: #{rgcab_forward.3} parent=5 // pred_fallthru
      _
    %p1767 = scmp.le.s32.totalorder 2, %s14
    // Predicated region
    $region57: #{rgcab_forward.3} parent=5 // pred_check
      %p1768 = pneg %p1767
    $region58: #{rgcab_forward.3} parent=5 // pred_check_branch
      %1770 = sbr.rel (%p1768) target = $region60
    $region59: #{rgcab_forward.3} parent=5 // pred_region
      %s1771 = ssub.s32 %s14, 2
      // Predicated region
      $region61: #{rgcab_forward.3} parent=59 // pred_check
        %p1772 = pneg %p216
      $region62: #{rgcab_forward.3} parent=59 // pred_check_branch
        %1774 = sbr.rel (%p1772) target = $region64
      $region63: #{rgcab_forward.3} parent=59 // pred_region
        %p1775 = scmp.lt.s32.totalorder %s20, 1
        %s1776 = scalar_select %p1775, %s20, 1
        %s1777 = smul.addr %s1776, 2
        %s1778 = smul.addr %s1777, 2
        %s1779 = scalar_lea.vmem %s8, %s1778
      $region64: #{rgcab_forward.3} parent=59 // pred_fallthru
        _
    $region60: #{rgcab_forward.3} parent=5 // pred_fallthru
      _
  $region6: #{rgcab_forward.3} parent=0 // loop_footer
    %s18 = sadd.s32 1, %s14
  $region7: #{rgcab_forward.3} parent=0 // loop_footer_branch
    %13 = sbr.rel target = $region3
  $region8: #{rgcab_forward.3} parent=0 // loop_exit
    _

</llo_original>
